<compile_context>
chip_gen: v6e
topology: v6e:2x2x1
jax: 0.10.0
libtpu: 0.0.40
codegen_flags: <defaults>
</compile_context>

<pallas_src>
import functools

import jax
import jax.numpy as jnp
from jax import lax
from jax.experimental import pallas as pl
from jax.experimental.pallas import tpu as pltpu


# ----------------------------------------------------------------------------
# helpers
# ----------------------------------------------------------------------------

def _tile(dim, target, quantum):
    """Largest multiple of `quantum` that divides `dim` and is <= target,
    falling back to the full dim (always a legal block size)."""
    if dim <= target:
        return dim
    t = (target // quantum) * quantum
    while t >= quantum:
        if dim % t == 0:
            return t
        t -= quantum
    return dim


def _gelu(y):
    # tanh-approximation GELU (EUP-friendly); exact-erf differs by <1e-3.
    return 0.5 * y * (1.0 + jnp.tanh(0.7978845608028654 * (y + 0.044715 * y * y * y)))


# ----------------------------------------------------------------------------
# fused (LN) -> matmul -> (bias, GELU, residual) kernel
# ----------------------------------------------------------------------------

def _fused_mm_kernel(*refs, act, has_ln, has_res, eps):
    it = iter(refs)
    x_ref = next(it)
    w_ref = next(it)
    b_ref = next(it)
    ln_g_ref = next(it) if has_ln else None
    ln_b_ref = next(it) if has_ln else None
    res_ref = next(it) if has_res else None
    o_ref = next(it)
    acc_ref = next(it)

    @pl.when(pl.program_id(2) == 0)
    def _():
        acc_ref[...] = jnp.zeros_like(acc_ref)

    x = x_ref[...]
    if has_ln:
        xf = x.astype(jnp.float32)
        mu = jnp.mean(xf, axis=-1, keepdims=True)
        var = jnp.mean((xf - mu) * (xf - mu), axis=-1, keepdims=True)
        xf = (xf - mu) * lax.rsqrt(var + eps)
        x = xf * ln_g_ref[...] + ln_b_ref[...]
    x = x.astype(jnp.bfloat16)
    w = w_ref[...].astype(jnp.bfloat16)
    acc_ref[...] += jnp.dot(x, w, preferred_element_type=jnp.float32)

    @pl.when(pl.program_id(2) == pl.num_programs(2) - 1)
    def _():
        y = acc_ref[...] + b_ref[...].astype(jnp.float32)
        if act == "gelu":
            y = _gelu(y)
        if has_res:
            y = y + res_ref[...].astype(jnp.float32)
        o_ref[...] = y.astype(o_ref.dtype)


def fused_matmul(x, w, b, act="none", ln=None, residual=None,
                 out_dtype=jnp.bfloat16, tm=256, tn=512, tk=512):
    """y = act(LN?(x) @ w + b) + residual?   x:[M,K] w:[K,N] b:[N] -> [M,N]."""
    M, K = x.shape
    K2, N = w.shape
    assert K == K2
    has_ln = ln is not None
    has_res = residual is not None

    tm = _tile(M, tm, 8)
    tn = _tile(N, tn, 128)
    tk = K if has_ln else _tile(K, tk, 128)   # LN needs the full feature dim

    in_specs = [
        pl.BlockSpec((tm, tk), lambda i, j, k: (i, k)),
        pl.BlockSpec((tk, tn), lambda i, j, k: (k, j)),
        pl.BlockSpec((1, tn), lambda i, j, k: (0, j)),
    ]
    inputs = [x, w, b.reshape(1, N)]
    if has_ln:
        g, bb = ln
        in_specs += [pl.BlockSpec((1, K), lambda i, j, k: (0, 0)),
                     pl.BlockSpec((1, K), lambda i, j, k: (0, 0))]
        inputs += [g.reshape(1, K), bb.reshape(1, K)]
    if has_res:
        in_specs.append(pl.BlockSpec((tm, tn), lambda i, j, k: (i, j)))
        inputs.append(residual)

    return pl.pallas_call(
        functools.partial(_fused_mm_kernel, act=act, has_ln=has_ln,
                          has_res=has_res, eps=1e-5),
        out_shape=jax.ShapeDtypeStruct((M, N), out_dtype),
        grid=(M // tm, N // tn, K // tk),
        in_specs=in_specs,
        out_specs=pl.BlockSpec((tm, tn), lambda i, j, k: (i, j)),
        scratch_shapes=[pltpu.VMEM((tm, tn), jnp.float32)],
        compiler_params=pltpu.CompilerParams(
            dimension_semantics=("parallel", "parallel", "arbitrary")),
    )(*inputs)


# ----------------------------------------------------------------------------
# flash attention (online softmax, KV axis pipelined)
# ----------------------------------------------------------------------------

def _flash_kernel(q_ref, k_ref, v_ref, o_ref, m_sc, l_sc, acc_sc, *, scale):
    kv = pl.program_id(2)

    @pl.when(kv == 0)
    def _():
        m_sc[...] = jnp.full_like(m_sc, -jnp.inf)
        l_sc[...] = jnp.zeros_like(l_sc)
        acc_sc[...] = jnp.zeros_like(acc_sc)

    # fold softmax scale into q (tq*dh mults instead of tq*tkv)
    q = (q_ref[0].astype(jnp.float32) * scale).astype(jnp.bfloat16)
    k = k_ref[0].astype(jnp.bfloat16)
    # contract on head-dim; no explicit transpose of k
    s = lax.dot_general(q, k, (((1,), (1,)), ((), ())),
                        preferred_element_type=jnp.float32)     # (tq, tkv)

    m_prev = m_sc[...]
    m_new = jnp.maximum(m_prev, jnp.max(s, axis=-1, keepdims=True))
    alpha = jnp.exp(m_prev - m_new)
    p = jnp.exp(s - m_new)
    l_sc[...] = alpha * l_sc[...] + jnp.sum(p, axis=-1, keepdims=True)
    acc_sc[...] = alpha * acc_sc[...] + jnp.dot(
        p.astype(jnp.bfloat16), v_ref[0].astype(jnp.bfloat16),
        preferred_element_type=jnp.float32)
    m_sc[...] = m_new

    @pl.when(kv == pl.num_programs(2) - 1)
    def _():
        o_ref[0] = (acc_sc[...] * pl.reciprocal(l_sc[...], approx=True)
                    ).astype(o_ref.dtype)


def flash_attention(q, k, v, scale, tq=256, tkv=256):
    """Softmax attention per (batch*head).  q/k/v: [BH, T, dh] -> [BH, T, dh]."""
    BH, T, dh = q.shape
    tq = _tile(T, tq, 8)
    tkv = _tile(T, tkv, 8)
    q_spec = pl.BlockSpec((1, tq, dh), lambda b, i, j: (b, i, 0))
    kv_spec = pl.BlockSpec((1, tkv, dh), lambda b, i, j: (b, j, 0))
    return pl.pallas_call(
        functools.partial(_flash_kernel, scale=scale),
        out_shape=jax.ShapeDtypeStruct((BH, T, dh), jnp.bfloat16),
        grid=(BH, T // tq, T // tkv),
        in_specs=[q_spec, kv_spec, kv_spec],
        out_specs=pl.BlockSpec((1, tq, dh), lambda b, i, j: (b, i, 0)),
        scratch_shapes=[pltpu.VMEM((tq, 1), jnp.float32),
                        pltpu.VMEM((tq, 1), jnp.float32),
                        pltpu.VMEM((tq, dh), jnp.float32)],
        compiler_params=pltpu.CompilerParams(
            dimension_semantics=("parallel", "parallel", "arbitrary")),
    )(q, k, v)


# ----------------------------------------------------------------------------
# standalone LayerNorm (final ln_f only), tiled over rows
# ----------------------------------------------------------------------------

def _ln_kernel(x_ref, g_ref, b_ref, o_ref, *, eps):
    x = x_ref[...].astype(jnp.float32)
    mu = jnp.mean(x, axis=-1, keepdims=True)
    var = jnp.mean((x - mu) * (x - mu), axis=-1, keepdims=True)
    y = (x - mu) * lax.rsqrt(var + eps)
    o_ref[...] = (y * g_ref[...] + b_ref[...]).astype(o_ref.dtype)


def layernorm(x, g, b, eps=1e-5, tm=256, out_dtype=jnp.float32):
    M, D = x.shape
    tm = _tile(M, tm, 8)
    return pl.pallas_call(
        functools.partial(_ln_kernel, eps=eps),
        out_shape=jax.ShapeDtypeStruct((M, D), out_dtype),
        grid=(M // tm,),
        in_specs=[pl.BlockSpec((tm, D), lambda i: (i, 0)),
                  pl.BlockSpec((1, D), lambda i: (0, 0)),
                  pl.BlockSpec((1, D), lambda i: (0, 0))],
        out_specs=pl.BlockSpec((tm, D), lambda i: (i, 0)),
        compiler_params=pltpu.CompilerParams(dimension_semantics=("parallel",)),
    )(x, g.reshape(1, D), b.reshape(1, D))


# ----------------------------------------------------------------------------
# Whisper-encoder forward (thin plain-JAX glue around the Pallas kernels)
# ----------------------------------------------------------------------------

def conv1d_cl(x_btc, w, b, stride, act):
    """Conv1d (padding=1) via im2col + fused Pallas matmul; channels-last.

    x_btc: [B, T, Cin], w: [Cout, Cin, K], b: [Cout] -> [B, T_out, Cout] (bf16).
    """
    B, T, Cin = x_btc.shape
    Cout, _, K = w.shape
    pad = (K - 1) // 2
    xp = jnp.pad(x_btc, ((0, 0), (pad, pad), (0, 0)))
    T_out = (T + 2 * pad - K) // stride + 1
    idx = jnp.arange(T_out) * stride
    # patches: [B, T_out, K, Cin] -> [B*T_out, K*Cin]
    patches = jnp.stack([xp[:, idx + k, :] for k in range(K)], axis=2)
    patches = patches.reshape(B * T_out, K * Cin)
    wmat = jnp.transpose(w, (2, 1, 0)).reshape(K * Cin, Cout)
    y = fused_matmul(patches, wmat, b, act=act)
    return y.reshape(B, T_out, Cout)


def sinusoids(length, channels, max_timescale=10000.0):
    inc = jnp.log(max_timescale) / (channels // 2 - 1)
    inv = jnp.exp(-inc * jnp.arange(channels // 2, dtype=jnp.float32))
    t = jnp.arange(length, dtype=jnp.float32)[:, None] * inv[None, :]
    return jnp.concatenate([jnp.sin(t), jnp.cos(t)], axis=1)


def encoder_layer(x, p, n_heads):
    """Pre-LN transformer encoder layer.  x: [B, T, D] (bf16)."""
    B, T, D = x.shape
    dh = D // n_heads
    scale = dh ** -0.5
    x2 = x.reshape(B * T, D)

    # --- attention block: LN fused into fused-QKV projection ---
    qkv = fused_matmul(x2, p["wqkv"], p["bqkv"], ln=(p["ln1_g"], p["ln1_b"]))

    def split(which):
        t = qkv[:, which * D:(which + 1) * D]
        return (t.reshape(B, T, n_heads, dh)
                 .transpose(0, 2, 1, 3)
                 .reshape(B * n_heads, T, dh))

    o = flash_attention(split(0), split(1), split(2), scale)
    o = (o.reshape(B, n_heads, T, dh)
          .transpose(0, 2, 1, 3)
          .reshape(B * T, D))
    # output projection with fused residual add
    x2 = fused_matmul(o, p["wo"], p["bo"], residual=x2)

    # --- MLP block: LN fused into up-proj, residual fused into down-proj ---
    h = fused_matmul(x2, p["w1"], p["b1"], act="gelu",
                     ln=(p["ln2_g"], p["ln2_b"]))
    x2 = fused_matmul(h, p["w2"], p["b2"], residual=x2)
    return x2.reshape(B, T, D)


def whisper_full_feats(x_mel, params, n_heads):
    """x_mel: [B, n_mels, T] (PyTorch NCW) -> features [B, T//2, d_model] f32."""
    h = conv1d_cl(jnp.transpose(x_mel, (0, 2, 1)),
                  params["conv1_w"], params["conv1_b"], stride=1, act="gelu")
    h = conv1d_cl(h, params["conv2_w"], params["conv2_b"], stride=2, act="gelu")
    B, T, D = h.shape
    pos = params["pos_emb"]
    assert T <= pos.shape[0], "positional embedding shorter than conv output"
    h = (h.astype(jnp.float32) + pos[:T][None, :, :]).astype(jnp.bfloat16)
    for lp in params["layers"]:
        h = encoder_layer(h, lp, n_heads)
    out = layernorm(h.reshape(B * T, D), params["ln_f_g"], params["ln_f_b"],
                    out_dtype=jnp.float32)
    return out.reshape(B, T, D)


# ----------------------------------------------------------------------------
# Deterministic parameter construction (weights bf16, bias/LN f32)
# ----------------------------------------------------------------------------

def make_params(key, n_mels, d_model, n_heads, n_layers, mlp_dim, max_frames):
    keys = iter(jax.random.split(key, 8 + 12 * n_layers))

    def nrm(shape):
        return (0.02 * jax.random.normal(next(keys), shape,
                                         dtype=jnp.float32)).astype(jnp.bfloat16)

    params = {
        "conv1_w": nrm((d_model, n_mels, 3)),
        "conv1_b": jnp.zeros((d_model,), jnp.float32),
        "conv2_w": nrm((d_model, d_model, 3)),
        "conv2_b": jnp.zeros((d_model,), jnp.float32),
        "pos_emb": sinusoids(max_frames, d_model),
        "ln_f_g": jnp.ones((d_model,), jnp.float32),
        "ln_f_b": jnp.zeros((d_model,), jnp.float32),
        "layers": [],
    }
    for _ in range(n_layers):
        wq, wk, wv = nrm((d_model, d_model)), nrm((d_model, d_model)), nrm((d_model, d_model))
        bq = jnp.zeros((d_model,), jnp.float32)
        bk = jnp.zeros((d_model,), jnp.float32)   # Whisper k-proj has no bias
        bv = jnp.zeros((d_model,), jnp.float32)
        params["layers"].append({
            "ln1_g": jnp.ones((d_model,), jnp.float32),
            "ln1_b": jnp.zeros((d_model,), jnp.float32),
            "wqkv": jnp.concatenate([wq, wk, wv], axis=1),        # [D, 3D] bf16
            "bqkv": jnp.concatenate([bq, bk, bv], axis=0),        # [3D] f32
            "wo": nrm((d_model, d_model)),
            "bo": jnp.zeros((d_model,), jnp.float32),
            "ln2_g": jnp.ones((d_model,), jnp.float32),
            "ln2_b": jnp.zeros((d_model,), jnp.float32),
            "w1": nrm((d_model, mlp_dim)),
            "b1": jnp.zeros((mlp_dim,), jnp.float32),
            "w2": nrm((mlp_dim, d_model)),
            "b2": jnp.zeros((d_model,), jnp.float32),
        })
    return params


# ----------------------------------------------------------------------------
# Main
# ----------------------------------------------------------------------------

if __name__ == "__main__":
    # Small, Whisper-shaped configuration (lane-friendly d_model)
    B, n_mels, T_frames = 2, 16, 16
    d_model, n_heads, n_layers, mlp_dim = 128, 4, 2, 256

    key = jax.random.PRNGKey(0)
    k_x, k_p = jax.random.split(key)
    x = jax.random.normal(k_x, (B, n_mels, T_frames), dtype=jnp.float32)
    params = make_params(k_p, n_mels, d_model, n_heads, n_layers, mlp_dim,
                         max_frames=T_frames // 2)

    fwd = jax.jit(lambda xm, ps: whisper_full_feats(xm, ps, n_heads))
    feats = jax.block_until_ready(fwd(x, params))

    assert feats.shape == (B, T_frames // 2, d_model)
    assert bool(jnp.all(jnp.isfinite(feats)))
    print("KERNEL_OK")
</pallas_src>

<mosaic_0001>
module attributes {stable_mosaic.version = 11 : i64} {
  func.func @_fused_mm_kernel(%arg0: i32, %arg1: i32, %arg2: i32, %arg3: memref<32x48xf32, #tpu.memory_space<vmem>>, %arg4: memref<48x128xbf16, #tpu.memory_space<vmem>>, %arg5: memref<1x128xf32, #tpu.memory_space<vmem>>, %arg6: memref<32x128xbf16, #tpu.memory_space<vmem>>, %arg7: memref<32x128xf32, #tpu.memory_space<vmem>>) attributes {dimension_semantics = [#tpu.dimension_semantics<parallel>, #tpu.dimension_semantics<parallel>, #tpu.dimension_semantics<arbitrary>], iteration_bounds = array<i64: 1, 1, 1>, scalar_prefetch = 0 : i64, scratch_operands = 1 : i64, tpu.core_type = #tpu.core_type<tc>, window_params = [{transform_indices = @transform_0, window_bounds = array<i64: 32, 48>}, {transform_indices = @transform_1, window_bounds = array<i64: 48, 128>}, {transform_indices = @transform_2, window_bounds = array<i64: 1, 128>}, {transform_indices = @transform_3, window_bounds = array<i64: 32, 128>}]} {
    %c0_i32 = arith.constant 0 : i32
    %0 = arith.cmpi eq, %arg2, %c0_i32 : i32
    %1 = arith.extui %0 : i1 to i32
    %c0_i32_0 = arith.constant 0 : i32
    %2 = arith.cmpi ne, %1, %c0_i32_0 : i32
    scf.if %2 {
      %cst_10 = arith.constant 0.000000e+00 : f32
      %13 = vector.broadcast %cst_10 : f32 to vector<32x128xf32>
      %c0_11 = arith.constant 0 : index
      %c0_12 = arith.constant 0 : index
      %14 = vector.load %arg7[%c0_11, %c0_12] : memref<32x128xf32, #tpu.memory_space<vmem>>, vector<32x128xf32>
      tpu.vector_store %arg7[%c0_11, %c0_12], %13 {strides = array<i32>} : memref<32x128xf32, #tpu.memory_space<vmem>>, vector<32x128xf32>,
    } else {
    }
    %c0 = arith.constant 0 : index
    %c0_1 = arith.constant 0 : index
    %3 = vector.load %arg3[%c0, %c0_1] : memref<32x48xf32, #tpu.memory_space<vmem>>, vector<32x48xf32>
    %4 = arith.truncf %3 : vector<32x48xf32> to vector<32x48xbf16>
    %c0_2 = arith.constant 0 : index
    %c0_3 = arith.constant 0 : index
    %5 = vector.load %arg4[%c0_2, %c0_3] : memref<48x128xbf16, #tpu.memory_space<vmem>>, vector<48x128xbf16>
    %c0_4 = arith.constant 0 : index
    %c0_5 = arith.constant 0 : index
    %6 = vector.load %arg7[%c0_4, %c0_5] : memref<32x128xf32, #tpu.memory_space<vmem>>, vector<32x128xf32>
    %cst = arith.constant dense<0.000000e+00> : vector<32x128xf32>
    %7 = tpu.matmul %4, %5, %cst {dimension_numbers = #tpu.dot_dimension_numbers<[1], [0], [0], [1], [0, 0, 1, 1], [], []>} : vector<32x48xbf16>, vector<48x128xbf16>, vector<32x128xf32> -> vector<32x128xf32>
    %8 = arith.addf %6, %7 : vector<32x128xf32>
    %c0_6 = arith.constant 0 : index
    %c0_7 = arith.constant 0 : index
    %9 = vector.load %arg7[%c0_6, %c0_7] : memref<32x128xf32, #tpu.memory_space<vmem>>, vector<32x128xf32>
    tpu.vector_store %arg7[%c0_6, %c0_7], %8 {strides = array<i32>} : memref<32x128xf32, #tpu.memory_space<vmem>>, vector<32x128xf32>,
    %c0_i32_8 = arith.constant 0 : i32
    %10 = arith.cmpi eq, %arg2, %c0_i32_8 : i32
    %11 = arith.extui %10 : i1 to i32
    %c0_i32_9 = arith.constant 0 : i32
    %12 = arith.cmpi ne, %11, %c0_i32_9 : i32
    scf.if %12 {
      %c0_10 = arith.constant 0 : index
      %c0_11 = arith.constant 0 : index
      %13 = vector.load %arg7[%c0_10, %c0_11] : memref<32x128xf32, #tpu.memory_space<vmem>>, vector<32x128xf32>
      %c0_12 = arith.constant 0 : index
      %c0_13 = arith.constant 0 : index
      %14 = vector.load %arg5[%c0_12, %c0_13] : memref<1x128xf32, #tpu.memory_space<vmem>>, vector<1x128xf32>
      %15 = vector.broadcast %14 : vector<1x128xf32> to vector<32x128xf32>
      %16 = arith.addf %13, %15 : vector<32x128xf32>
      %cst_14 = arith.constant 5.000000e-01 : f32
      %17 = vector.broadcast %cst_14 : f32 to vector<32x128xf32>
      %18 = arith.mulf %17, %16 : vector<32x128xf32>
      %cst_15 = arith.constant 4.471500e-02 : f32
      %19 = vector.broadcast %cst_15 : f32 to vector<32x128xf32>
      %20 = arith.mulf %19, %16 : vector<32x128xf32>
      %21 = arith.mulf %20, %16 : vector<32x128xf32>
      %22 = arith.mulf %21, %16 : vector<32x128xf32>
      %23 = arith.addf %16, %22 : vector<32x128xf32>
      %cst_16 = arith.constant 0.797884583 : f32
      %24 = vector.broadcast %cst_16 : f32 to vector<32x128xf32>
      %25 = arith.mulf %24, %23 : vector<32x128xf32>
      %26 = math.tanh %25 : vector<32x128xf32>
      %cst_17 = arith.constant 1.000000e+00 : f32
      %27 = vector.broadcast %cst_17 : f32 to vector<32x128xf32>
      %28 = arith.addf %27, %26 : vector<32x128xf32>
      %29 = arith.mulf %18, %28 : vector<32x128xf32>
      %30 = arith.truncf %29 : vector<32x128xf32> to vector<32x128xbf16>
      %c0_18 = arith.constant 0 : index
      %c0_19 = arith.constant 0 : index
      %31 = vector.load %arg6[%c0_18, %c0_19] : memref<32x128xbf16, #tpu.memory_space<vmem>>, vector<32x128xbf16>
      tpu.vector_store %arg6[%c0_18, %c0_19], %30 {strides = array<i32>} : memref<32x128xbf16, #tpu.memory_space<vmem>>, vector<32x128xbf16>,
    } else {
    }
    return
  }
  func.func @transform_0(%arg0: i32, %arg1: i32, %arg2: i32) -> (i32, i32) {
    %c0_i32 = arith.constant 0 : i32
    return %arg0, %arg2 : i32, i32
  }
  func.func @transform_1(%arg0: i32, %arg1: i32, %arg2: i32) -> (i32, i32) {
    %c0_i32 = arith.constant 0 : i32
    return %arg2, %arg1 : i32, i32
  }
  func.func @transform_2(%arg0: i32, %arg1: i32, %arg2: i32) -> (i32, i32) {
    %c0_i32 = arith.constant 0 : i32
    %c0_i32_0 = arith.constant 0 : i32
    return %c0_i32, %arg1 : i32, i32
  }
  func.func @transform_3(%arg0: i32, %arg1: i32, %arg2: i32) -> (i32, i32) {
    %c0_i32 = arith.constant 0 : i32
    return %arg0, %arg1 : i32, i32
  }
}

module attributes {stable_mosaic.version = 11 : i64} {
  func.func @_fused_mm_kernel(%arg0: i32, %arg1: i32, %arg2: i32, %arg3: memref<16x384xbf16, #tpu.memory_space<vmem>>, %arg4: memref<384x128xbf16, #tpu.memory_space<vmem>>, %arg5: memref<1x128xf32, #tpu.memory_space<vmem>>, %arg6: memref<16x128xbf16, #tpu.memory_space<vmem>>, %arg7: memref<16x128xf32, #tpu.memory_space<vmem>>) attributes {dimension_semantics = [#tpu.dimension_semantics<parallel>, #tpu.dimension_semantics<parallel>, #tpu.dimension_semantics<arbitrary>], iteration_bounds = array<i64: 1, 1, 1>, scalar_prefetch = 0 : i64, scratch_operands = 1 : i64, tpu.core_type = #tpu.core_type<tc>, window_params = [{transform_indices = @transform_0, window_bounds = array<i64: 16, 384>}, {transform_indices = @transform_1, window_bounds = array<i64: 384, 128>}, {transform_indices = @transform_2, window_bounds = array<i64: 1, 128>}, {transform_indices = @transform_3, window_bounds = array<i64: 16, 128>}]} {
    %c0_i32 = arith.constant 0 : i32
    %0 = arith.cmpi eq, %arg2, %c0_i32 : i32
    %1 = arith.extui %0 : i1 to i32
    %c0_i32_0 = arith.constant 0 : i32
    %2 = arith.cmpi ne, %1, %c0_i32_0 : i32
    scf.if %2 {
      %cst_10 = arith.constant 0.000000e+00 : f32
      %12 = vector.broadcast %cst_10 : f32 to vector<16x128xf32>
      %c0_11 = arith.constant 0 : index
      %c0_12 = arith.constant 0 : index
      %13 = vector.load %arg7[%c0_11, %c0_12] : memref<16x128xf32, #tpu.memory_space<vmem>>, vector<16x128xf32>
      tpu.vector_store %arg7[%c0_11, %c0_12], %12 {strides = array<i32>} : memref<16x128xf32, #tpu.memory_space<vmem>>, vector<16x128xf32>,
    } else {
    }
    %c0 = arith.constant 0 : index
    %c0_1 = arith.constant 0 : index
    %3 = vector.load %arg3[%c0, %c0_1] : memref<16x384xbf16, #tpu.memory_space<vmem>>, vector<16x384xbf16>
    %c0_2 = arith.constant 0 : index
    %c0_3 = arith.constant 0 : index
    %4 = vector.load %arg4[%c0_2, %c0_3] : memref<384x128xbf16, #tpu.memory_space<vmem>>, vector<384x128xbf16>
    %c0_4 = arith.constant 0 : index
    %c0_5 = arith.constant 0 : index
    %5 = vector.load %arg7[%c0_4, %c0_5] : memref<16x128xf32, #tpu.memory_space<vmem>>, vector<16x128xf32>
    %cst = arith.constant dense<0.000000e+00> : vector<16x128xf32>
    %6 = tpu.matmul %3, %4, %cst {dimension_numbers = #tpu.dot_dimension_numbers<[1], [0], [0], [1], [0, 0, 1, 1], [], []>} : vector<16x384xbf16>, vector<384x128xbf16>, vector<16x128xf32> -> vector<16x128xf32>
    %7 = arith.addf %5, %6 : vector<16x128xf32>
    %c0_6 = arith.constant 0 : index
    %c0_7 = arith.constant 0 : index
    %8 = vector.load %arg7[%c0_6, %c0_7] : memref<16x128xf32, #tpu.memory_space<vmem>>, vector<16x128xf32>
    tpu.vector_store %arg7[%c0_6, %c0_7], %7 {strides = array<i32>} : memref<16x128xf32, #tpu.memory_space<vmem>>, vector<16x128xf32>,
    %c0_i32_8 = arith.constant 0 : i32
    %9 = arith.cmpi eq, %arg2, %c0_i32_8 : i32
    %10 = arith.extui %9 : i1 to i32
    %c0_i32_9 = arith.constant 0 : i32
    %11 = arith.cmpi ne, %10, %c0_i32_9 : i32
    scf.if %11 {
      %c0_10 = arith.constant 0 : index
      %c0_11 = arith.constant 0 : index
      %12 = vector.load %arg7[%c0_10, %c0_11] : memref<16x128xf32, #tpu.memory_space<vmem>>, vector<16x128xf32>
      %c0_12 = arith.constant 0 : index
      %c0_13 = arith.constant 0 : index
      %13 = vector.load %arg5[%c0_12, %c0_13] : memref<1x128xf32, #tpu.memory_space<vmem>>, vector<1x128xf32>
      %14 = vector.broadcast %13 : vector<1x128xf32> to vector<16x128xf32>
      %15 = arith.addf %12, %14 : vector<16x128xf32>
      %cst_14 = arith.constant 5.000000e-01 : f32
      %16 = vector.broadcast %cst_14 : f32 to vector<16x128xf32>
      %17 = arith.mulf %16, %15 : vector<16x128xf32>
      %cst_15 = arith.constant 4.471500e-02 : f32
      %18 = vector.broadcast %cst_15 : f32 to vector<16x128xf32>
      %19 = arith.mulf %18, %15 : vector<16x128xf32>
      %20 = arith.mulf %19, %15 : vector<16x128xf32>
      %21 = arith.mulf %20, %15 : vector<16x128xf32>
      %22 = arith.addf %15, %21 : vector<16x128xf32>
      %cst_16 = arith.constant 0.797884583 : f32
      %23 = vector.broadcast %cst_16 : f32 to vector<16x128xf32>
      %24 = arith.mulf %23, %22 : vector<16x128xf32>
      %25 = math.tanh %24 : vector<16x128xf32>
      %cst_17 = arith.constant 1.000000e+00 : f32
      %26 = vector.broadcast %cst_17 : f32 to vector<16x128xf32>
      %27 = arith.addf %26, %25 : vector<16x128xf32>
      %28 = arith.mulf %17, %27 : vector<16x128xf32>
      %29 = arith.truncf %28 : vector<16x128xf32> to vector<16x128xbf16>
      %c0_18 = arith.constant 0 : index
      %c0_19 = arith.constant 0 : index
      %30 = vector.load %arg6[%c0_18, %c0_19] : memref<16x128xbf16, #tpu.memory_space<vmem>>, vector<16x128xbf16>
      tpu.vector_store %arg6[%c0_18, %c0_19], %29 {strides = array<i32>} : memref<16x128xbf16, #tpu.memory_space<vmem>>, vector<16x128xbf16>,
    } else {
    }
    return
  }
  func.func @transform_0(%arg0: i32, %arg1: i32, %arg2: i32) -> (i32, i32) {
    %c0_i32 = arith.constant 0 : i32
    return %arg0, %arg2 : i32, i32
  }
  func.func @transform_1(%arg0: i32, %arg1: i32, %arg2: i32) -> (i32, i32) {
    %c0_i32 = arith.constant 0 : i32
    return %arg2, %arg1 : i32, i32
  }
  func.func @transform_2(%arg0: i32, %arg1: i32, %arg2: i32) -> (i32, i32) {
    %c0_i32 = arith.constant 0 : i32
    %c0_i32_0 = arith.constant 0 : i32
    return %c0_i32, %arg1 : i32, i32
  }
  func.func @transform_3(%arg0: i32, %arg1: i32, %arg2: i32) -> (i32, i32) {
    %c0_i32 = arith.constant 0 : i32
    return %arg0, %arg1 : i32, i32
  }
}

module attributes {stable_mosaic.version = 11 : i64} {
  func.func @_fused_mm_kernel(%arg0: i32, %arg1: i32, %arg2: i32, %arg3: memref<16x128xbf16, #tpu.memory_space<vmem>>, %arg4: memref<128x384xbf16, #tpu.memory_space<vmem>>, %arg5: memref<1x384xf32, #tpu.memory_space<vmem>>, %arg6: memref<1x128xf32, #tpu.memory_space<vmem>>, %arg7: memref<1x128xf32, #tpu.memory_space<vmem>>, %arg8: memref<16x384xbf16, #tpu.memory_space<vmem>>, %arg9: memref<16x384xf32, #tpu.memory_space<vmem>>) attributes {dimension_semantics = [#tpu.dimension_semantics<parallel>, #tpu.dimension_semantics<parallel>, #tpu.dimension_semantics<arbitrary>], iteration_bounds = array<i64: 1, 1, 1>, scalar_prefetch = 0 : i64, scratch_operands = 1 : i64, tpu.core_type = #tpu.core_type<tc>, window_params = [{transform_indices = @transform_0, window_bounds = array<i64: 16, 128>}, {transform_indices = @transform_1, window_bounds = array<i64: 128, 384>}, {transform_indices = @transform_2, window_bounds = array<i64: 1, 384>}, {pipeline_mode = #tpu.pipeline_mode<synchronous>, transform_indices = @transform_3, window_bounds = array<i64: 1, 128>}, {pipeline_mode = #tpu.pipeline_mode<synchronous>, transform_indices = @transform_4, window_bounds = array<i64: 1, 128>}, {transform_indices = @transform_5, window_bounds = array<i64: 16, 384>}]} {
    %c0_i32 = arith.constant 0 : i32
    %0 = arith.cmpi eq, %arg2, %c0_i32 : i32
    %1 = arith.extui %0 : i1 to i32
    %c0_i32_0 = arith.constant 0 : i32
    %2 = arith.cmpi ne, %1, %c0_i32_0 : i32
    scf.if %2 {
      %cst_19 = arith.constant 0.000000e+00 : f32
      %40 = vector.broadcast %cst_19 : f32 to vector<16x384xf32>
      %c0_20 = arith.constant 0 : index
      %c0_21 = arith.constant 0 : index
      %41 = vector.load %arg9[%c0_20, %c0_21] : memref<16x384xf32, #tpu.memory_space<vmem>>, vector<16x384xf32>
      tpu.vector_store %arg9[%c0_20, %c0_21], %40 {strides = array<i32>} : memref<16x384xf32, #tpu.memory_space<vmem>>, vector<16x384xf32>,
    } else {
    }
    %c0 = arith.constant 0 : index
    %c0_1 = arith.constant 0 : index
    %3 = vector.load %arg3[%c0, %c0_1] : memref<16x128xbf16, #tpu.memory_space<vmem>>, vector<16x128xbf16>
    %4 = arith.extf %3 : vector<16x128xbf16> to vector<16x128xf32>
    %cst = arith.constant dense<0.000000e+00> : vector<16xf32>
    %5 = vector.multi_reduction <add>, %4, %cst [1] : vector<16x128xf32> to vector<16xf32>
    %6 = vector.shape_cast %5 : vector<16xf32> to vector<16x1xf32>
    %cst_2 = arith.constant 1.280000e+02 : f32
    %7 = vector.broadcast %cst_2 : f32 to vector<16x1xf32>
    %8 = arith.divf %6, %7 : vector<16x1xf32>
    %9 = vector.broadcast %8 : vector<16x1xf32> to vector<16x128xf32>
    %10 = arith.subf %4, %9 : vector<16x128xf32>
    %11 = vector.broadcast %8 : vector<16x1xf32> to vector<16x128xf32>
    %12 = arith.subf %4, %11 : vector<16x128xf32>
    %13 = arith.mulf %10, %12 : vector<16x128xf32>
    %cst_3 = arith.constant dense<0.000000e+00> : vector<16xf32>
    %14 = vector.multi_reduction <add>, %13, %cst_3 [1] : vector<16x128xf32> to vector<16xf32>
    %15 = vector.shape_cast %14 : vector<16xf32> to vector<16x1xf32>
    %cst_4 = arith.constant 1.280000e+02 : f32
    %16 = vector.broadcast %cst_4 : f32 to vector<16x1xf32>
    %17 = arith.divf %15, %16 : vector<16x1xf32>
    %18 = vector.broadcast %8 : vector<16x1xf32> to vector<16x128xf32>
    %19 = arith.subf %4, %18 : vector<16x128xf32>
    %cst_5 = arith.constant 9.99999974E-6 : f32
    %20 = vector.broadcast %cst_5 : f32 to vector<16x1xf32>
    %21 = arith.addf %17, %20 : vector<16x1xf32>
    %22 = math.rsqrt %21 : vector<16x1xf32>
    %23 = vector.broadcast %22 : vector<16x1xf32> to vector<16x128xf32>
    %24 = arith.mulf %19, %23 : vector<16x128xf32>
    %c0_6 = arith.constant 0 : index
    %c0_7 = arith.constant 0 : index
    %25 = vector.load %arg6[%c0_6, %c0_7] : memref<1x128xf32, #tpu.memory_space<vmem>>, vector<1x128xf32>
    %26 = vector.broadcast %25 : vector<1x128xf32> to vector<16x128xf32>
    %27 = arith.mulf %24, %26 : vector<16x128xf32>
    %c0_8 = arith.constant 0 : index
    %c0_9 = arith.constant 0 : index
    %28 = vector.load %arg7[%c0_8, %c0_9] : memref<1x128xf32, #tpu.memory_space<vmem>>, vector<1x128xf32>
    %29 = vector.broadcast %28 : vector<1x128xf32> to vector<16x128xf32>
    %30 = arith.addf %27, %29 : vector<16x128xf32>
    %31 = arith.truncf %30 : vector<16x128xf32> to vector<16x128xbf16>
    %c0_10 = arith.constant 0 : index
    %c0_11 = arith.constant 0 : index
    %32 = vector.load %arg4[%c0_10, %c0_11] : memref<128x384xbf16, #tpu.memory_space<vmem>>, vector<128x384xbf16>
    %c0_12 = arith.constant 0 : index
    %c0_13 = arith.constant 0 : index
    %33 = vector.load %arg9[%c0_12, %c0_13] : memref<16x384xf32, #tpu.memory_space<vmem>>, vector<16x384xf32>
    %cst_14 = arith.constant dense<0.000000e+00> : vector<16x384xf32>
    %34 = tpu.matmul %31, %32, %cst_14 {dimension_numbers = #tpu.dot_dimension_numbers<[1], [0], [0], [1], [0, 0, 1, 1], [], []>} : vector<16x128xbf16>, vector<128x384xbf16>, vector<16x384xf32> -> vector<16x384xf32>
    %35 = arith.addf %33, %34 : vector<16x384xf32>
    %c0_15 = arith.constant 0 : index
    %c0_16 = arith.constant 0 : index
    %36 = vector.load %arg9[%c0_15, %c0_16] : memref<16x384xf32, #tpu.memory_space<vmem>>, vector<16x384xf32>
    tpu.vector_store %arg9[%c0_15, %c0_16], %35 {strides = array<i32>} : memref<16x384xf32, #tpu.memory_space<vmem>>, vector<16x384xf32>,
    %c0_i32_17 = arith.constant 0 : i32
    %37 = arith.cmpi eq, %arg2, %c0_i32_17 : i32
    %38 = arith.extui %37 : i1 to i32
    %c0_i32_18 = arith.constant 0 : i32
    %39 = arith.cmpi ne, %38, %c0_i32_18 : i32
    scf.if %39 {
      %c0_19 = arith.constant 0 : index
      %c0_20 = arith.constant 0 : index
      %40 = vector.load %arg9[%c0_19, %c0_20] : memref<16x384xf32, #tpu.memory_space<vmem>>, vector<16x384xf32>
      %c0_21 = arith.constant 0 : index
      %c0_22 = arith.constant 0 : index
      %41 = vector.load %arg5[%c0_21, %c0_22] : memref<1x384xf32, #tpu.memory_space<vmem>>, vector<1x384xf32>
      %42 = vector.broadcast %41 : vector<1x384xf32> to vector<16x384xf32>
      %43 = arith.addf %40, %42 : vector<16x384xf32>
      %44 = arith.truncf %43 : vector<16x384xf32> to vector<16x384xbf16>
      %c0_23 = arith.constant 0 : index
      %c0_24 = arith.constant 0 : index
      %45 = vector.load %arg8[%c0_23, %c0_24] : memref<16x384xbf16, #tpu.memory_space<vmem>>, vector<16x384xbf16>
      tpu.vector_store %arg8[%c0_23, %c0_24], %44 {strides = array<i32>} : memref<16x384xbf16, #tpu.memory_space<vmem>>, vector<16x384xbf16>,
    } else {
    }
    return
  }
  func.func @transform_0(%arg0: i32, %arg1: i32, %arg2: i32) -> (i32, i32) {
    %c0_i32 = arith.constant 0 : i32
    return %arg0, %arg2 : i32, i32
  }
  func.func @transform_1(%arg0: i32, %arg1: i32, %arg2: i32) -> (i32, i32) {
    %c0_i32 = arith.constant 0 : i32
    return %arg2, %arg1 : i32, i32
  }
  func.func @transform_2(%arg0: i32, %arg1: i32, %arg2: i32) -> (i32, i32) {
    %c0_i32 = arith.constant 0 : i32
    %c0_i32_0 = arith.constant 0 : i32
    return %c0_i32, %arg1 : i32, i32
  }
  func.func @transform_3(%arg0: i32, %arg1: i32, %arg2: i32) -> (i32, i32) {
    %c0_i32 = arith.constant 0 : i32
    %c0_i32_0 = arith.constant 0 : i32
    %c0_i32_1 = arith.constant 0 : i32
    return %c0_i32, %c0_i32_0 : i32, i32
  }
  func.func @transform_4(%arg0: i32, %arg1: i32, %arg2: i32) -> (i32, i32) {
    %c0_i32 = arith.constant 0 : i32
    %c0_i32_0 = arith.constant 0 : i32
    %c0_i32_1 = arith.constant 0 : i32
    return %c0_i32, %c0_i32_0 : i32, i32
  }
  func.func @transform_5(%arg0: i32, %arg1: i32, %arg2: i32) -> (i32, i32) {
    %c0_i32 = arith.constant 0 : i32
    return %arg0, %arg1 : i32, i32
  }
}

module attributes {stable_mosaic.version = 11 : i64} {
  func.func @_flash_kernel(%arg0: i32, %arg1: i32, %arg2: i32, %arg3: memref<1x8x32xbf16, #tpu.memory_space<vmem>>, %arg4: memref<1x8x32xbf16, #tpu.memory_space<vmem>>, %arg5: memref<1x8x32xbf16, #tpu.memory_space<vmem>>, %arg6: memref<1x8x32xbf16, #tpu.memory_space<vmem>>, %arg7: memref<8x1xf32, #tpu.memory_space<vmem>>, %arg8: memref<8x1xf32, #tpu.memory_space<vmem>>, %arg9: memref<8x32xf32, #tpu.memory_space<vmem>>) attributes {dimension_semantics = [#tpu.dimension_semantics<parallel>, #tpu.dimension_semantics<parallel>, #tpu.dimension_semantics<arbitrary>], iteration_bounds = array<i64: 8, 1, 1>, scalar_prefetch = 0 : i64, scratch_operands = 3 : i64, tpu.core_type = #tpu.core_type<tc>, window_params = [{transform_indices = @transform_0, window_bounds = array<i64: 1, 8, 32>}, {transform_indices = @transform_1, window_bounds = array<i64: 1, 8, 32>}, {transform_indices = @transform_2, window_bounds = array<i64: 1, 8, 32>}, {transform_indices = @transform_3, window_bounds = array<i64: 1, 8, 32>}]} {
    %c0_i32 = arith.constant 0 : i32
    %0 = arith.cmpi eq, %arg2, %c0_i32 : i32
    %1 = arith.extui %0 : i1 to i32
    %c0_i32_0 = arith.constant 0 : i32
    %2 = arith.cmpi ne, %1, %c0_i32_0 : i32
    scf.if %2 {
      %cst_27 = arith.constant 0xFF800000 : f32
      %40 = vector.broadcast %cst_27 : f32 to vector<8x1xf32>
      %c0_28 = arith.constant 0 : index
      %c0_29 = arith.constant 0 : index
      %41 = vector.load %arg7[%c0_28, %c0_29] : memref<8x1xf32, #tpu.memory_space<vmem>>, vector<8x1xf32>
      tpu.vector_store %arg7[%c0_28, %c0_29], %40 {strides = array<i32>} : memref<8x1xf32, #tpu.memory_space<vmem>>, vector<8x1xf32>,
      %cst_30 = arith.constant 0.000000e+00 : f32
      %42 = vector.broadcast %cst_30 : f32 to vector<8x1xf32>
      %c0_31 = arith.constant 0 : index
      %c0_32 = arith.constant 0 : index
      %43 = vector.load %arg8[%c0_31, %c0_32] : memref<8x1xf32, #tpu.memory_space<vmem>>, vector<8x1xf32>
      tpu.vector_store %arg8[%c0_31, %c0_32], %42 {strides = array<i32>} : memref<8x1xf32, #tpu.memory_space<vmem>>, vector<8x1xf32>,
      %cst_33 = arith.constant 0.000000e+00 : f32
      %44 = vector.broadcast %cst_33 : f32 to vector<8x32xf32>
      %c0_34 = arith.constant 0 : index
      %c0_35 = arith.constant 0 : index
      %45 = vector.load %arg9[%c0_34, %c0_35] : memref<8x32xf32, #tpu.memory_space<vmem>>, vector<8x32xf32>
      tpu.vector_store %arg9[%c0_34, %c0_35], %44 {strides = array<i32>} : memref<8x32xf32, #tpu.memory_space<vmem>>, vector<8x32xf32>,
    } else {
    }
    %c0 = arith.constant 0 : index
    %c0_1 = arith.constant 0 : index
    %c0_2 = arith.constant 0 : index
    %3 = vector.load %arg3[%c0, %c0_1, %c0_2] : memref<1x8x32xbf16, #tpu.memory_space<vmem>>, vector<1x8x32xbf16>
    %4 = vector.shape_cast %3 : vector<1x8x32xbf16> to vector<8x32xbf16>
    %5 = arith.extf %4 : vector<8x32xbf16> to vector<8x32xf32>
    %cst = arith.constant 0.176776692 : f32
    %6 = vector.broadcast %cst : f32 to vector<8x32xf32>
    %7 = arith.mulf %5, %6 : vector<8x32xf32>
    %8 = arith.truncf %7 : vector<8x32xf32> to vector<8x32xbf16>
    %c0_3 = arith.constant 0 : index
    %c0_4 = arith.constant 0 : index
    %c0_5 = arith.constant 0 : index
    %9 = vector.load %arg4[%c0_3, %c0_4, %c0_5] : memref<1x8x32xbf16, #tpu.memory_space<vmem>>, vector<1x8x32xbf16>
    %10 = vector.shape_cast %9 : vector<1x8x32xbf16> to vector<8x32xbf16>
    %cst_6 = arith.constant dense<0.000000e+00> : vector<8x8xf32>
    %11 = tpu.matmul %8, %10, %cst_6 {dimension_numbers = #tpu.dot_dimension_numbers<[1], [1], [0], [0], [0, 0, 1, 0], [], []>} : vector<8x32xbf16>, vector<8x32xbf16>, vector<8x8xf32> -> vector<8x8xf32>
    %c0_7 = arith.constant 0 : index
    %c0_8 = arith.constant 0 : index
    %12 = vector.load %arg7[%c0_7, %c0_8] : memref<8x1xf32, #tpu.memory_space<vmem>>, vector<8x1xf32>
    %cst_9 = arith.constant dense<0xFF800000> : vector<8xf32>
    %13 = vector.multi_reduction <maximumf>, %11, %cst_9 [1] : vector<8x8xf32> to vector<8xf32>
    %14 = vector.shape_cast %13 : vector<8xf32> to vector<8x1xf32>
    %15 = arith.maximumf %12, %14 : vector<8x1xf32>
    %16 = arith.subf %12, %15 : vector<8x1xf32>
    %17 = math.exp %16 : vector<8x1xf32>
    %18 = vector.broadcast %15 : vector<8x1xf32> to vector<8x8xf32>
    %19 = arith.subf %11, %18 : vector<8x8xf32>
    %20 = math.exp %19 : vector<8x8xf32>
    %c0_10 = arith.constant 0 : index
    %c0_11 = arith.constant 0 : index
    %21 = vector.load %arg8[%c0_10, %c0_11] : memref<8x1xf32, #tpu.memory_space<vmem>>, vector<8x1xf32>
    %22 = arith.mulf %17, %21 : vector<8x1xf32>
    %cst_12 = arith.constant dense<0.000000e+00> : vector<8xf32>
    %23 = vector.multi_reduction <add>, %20, %cst_12 [1] : vector<8x8xf32> to vector<8xf32>
    %24 = vector.shape_cast %23 : vector<8xf32> to vector<8x1xf32>
    %25 = arith.addf %22, %24 : vector<8x1xf32>
    %c0_13 = arith.constant 0 : index
    %c0_14 = arith.constant 0 : index
    %26 = vector.load %arg8[%c0_13, %c0_14] : memref<8x1xf32, #tpu.memory_space<vmem>>, vector<8x1xf32>
    tpu.vector_store %arg8[%c0_13, %c0_14], %25 {strides = array<i32>} : memref<8x1xf32, #tpu.memory_space<vmem>>, vector<8x1xf32>,
    %c0_15 = arith.constant 0 : index
    %c0_16 = arith.constant 0 : index
    %27 = vector.load %arg9[%c0_15, %c0_16] : memref<8x32xf32, #tpu.memory_space<vmem>>, vector<8x32xf32>
    %28 = vector.broadcast %17 : vector<8x1xf32> to vector<8x32xf32>
    %29 = arith.mulf %28, %27 : vector<8x32xf32>
    %30 = arith.truncf %20 : vector<8x8xf32> to vector<8x8xbf16>
    %c0_17 = arith.constant 0 : index
    %c0_18 = arith.constant 0 : index
    %c0_19 = arith.constant 0 : index
    %31 = vector.load %arg5[%c0_17, %c0_18, %c0_19] : memref<1x8x32xbf16, #tpu.memory_space<vmem>>, vector<1x8x32xbf16>
    %32 = vector.shape_cast %31 : vector<1x8x32xbf16> to vector<8x32xbf16>
    %cst_20 = arith.constant dense<0.000000e+00> : vector<8x32xf32>
    %33 = tpu.matmul %30, %32, %cst_20 {dimension_numbers = #tpu.dot_dimension_numbers<[1], [0], [0], [1], [0, 0, 1, 1], [], []>} : vector<8x8xbf16>, vector<8x32xbf16>, vector<8x32xf32> -> vector<8x32xf32>
    %34 = arith.addf %29, %33 : vector<8x32xf32>
    %c0_21 = arith.constant 0 : index
    %c0_22 = arith.constant 0 : index
    %35 = vector.load %arg9[%c0_21, %c0_22] : memref<8x32xf32, #tpu.memory_space<vmem>>, vector<8x32xf32>
    tpu.vector_store %arg9[%c0_21, %c0_22], %34 {strides = array<i32>} : memref<8x32xf32, #tpu.memory_space<vmem>>, vector<8x32xf32>,
    %c0_23 = arith.constant 0 : index
    %c0_24 = arith.constant 0 : index
    %36 = vector.load %arg7[%c0_23, %c0_24] : memref<8x1xf32, #tpu.memory_space<vmem>>, vector<8x1xf32>
    tpu.vector_store %arg7[%c0_23, %c0_24], %15 {strides = array<i32>} : memref<8x1xf32, #tpu.memory_space<vmem>>, vector<8x1xf32>,
    %c0_i32_25 = arith.constant 0 : i32
    %37 = arith.cmpi eq, %arg2, %c0_i32_25 : i32
    %38 = arith.extui %37 : i1 to i32
    %c0_i32_26 = arith.constant 0 : i32
    %39 = arith.cmpi ne, %38, %c0_i32_26 : i32
    scf.if %39 {
      %c0_27 = arith.constant 0 : index
      %c0_28 = arith.constant 0 : index
      %40 = vector.load %arg9[%c0_27, %c0_28] : memref<8x32xf32, #tpu.memory_space<vmem>>, vector<8x32xf32>
      %c0_29 = arith.constant 0 : index
      %c0_30 = arith.constant 0 : index
      %41 = vector.load %arg8[%c0_29, %c0_30] : memref<8x1xf32, #tpu.memory_space<vmem>>, vector<8x1xf32>
      %42 = tpu.reciprocal %41 {approx = true} : vector<8x1xf32> -> vector<8x1xf32>
      %43 = vector.broadcast %42 : vector<8x1xf32> to vector<8x32xf32>
      %44 = arith.mulf %40, %43 : vector<8x32xf32>
      %45 = arith.truncf %44 : vector<8x32xf32> to vector<8x32xbf16>
      %c0_31 = arith.constant 0 : index
      %c0_32 = arith.constant 0 : index
      %c0_33 = arith.constant 0 : index
      %46 = vector.load %arg6[%c0_31, %c0_32, %c0_33] : memref<1x8x32xbf16, #tpu.memory_space<vmem>>, vector<1x8x32xbf16>
      %47 = vector.shape_cast %46 : vector<1x8x32xbf16> to vector<8x32xbf16>
      %48 = vector.shape_cast %45 : vector<8x32xbf16> to vector<1x8x32xbf16>
      tpu.vector_store %arg6[%c0_31, %c0_32, %c0_33], %48 {strides = array<i32>} : memref<1x8x32xbf16, #tpu.memory_space<vmem>>, vector<1x8x32xbf16>,
    } else {
    }
    return
  }
  func.func @transform_0(%arg0: i32, %arg1: i32, %arg2: i32) -> (i32, i32, i32) {
    %c0_i32 = arith.constant 0 : i32
    %c0_i32_0 = arith.constant 0 : i32
    return %arg0, %arg1, %c0_i32 : i32, i32, i32
  }
  func.func @transform_1(%arg0: i32, %arg1: i32, %arg2: i32) -> (i32, i32, i32) {
    %c0_i32 = arith.constant 0 : i32
    %c0_i32_0 = arith.constant 0 : i32
    return %arg0, %arg2, %c0_i32 : i32, i32, i32
  }
  func.func @transform_2(%arg0: i32, %arg1: i32, %arg2: i32) -> (i32, i32, i32) {
    %c0_i32 = arith.constant 0 : i32
    %c0_i32_0 = arith.constant 0 : i32
    return %arg0, %arg2, %c0_i32 : i32, i32, i32
  }
  func.func @transform_3(%arg0: i32, %arg1: i32, %arg2: i32) -> (i32, i32, i32) {
    %c0_i32 = arith.constant 0 : i32
    %c0_i32_0 = arith.constant 0 : i32
    return %arg0, %arg1, %c0_i32 : i32, i32, i32
  }
}

module attributes {stable_mosaic.version = 11 : i64} {
  func.func @_fused_mm_kernel(%arg0: i32, %arg1: i32, %arg2: i32, %arg3: memref<16x128xbf16, #tpu.memory_space<vmem>>, %arg4: memref<128x256xbf16, #tpu.memory_space<vmem>>, %arg5: memref<1x256xf32, #tpu.memory_space<vmem>>, %arg6: memref<1x128xf32, #tpu.memory_space<vmem>>, %arg7: memref<1x128xf32, #tpu.memory_space<vmem>>, %arg8: memref<16x256xbf16, #tpu.memory_space<vmem>>, %arg9: memref<16x256xf32, #tpu.memory_space<vmem>>) attributes {dimension_semantics = [#tpu.dimension_semantics<parallel>, #tpu.dimension_semantics<parallel>, #tpu.dimension_semantics<arbitrary>], iteration_bounds = array<i64: 1, 1, 1>, scalar_prefetch = 0 : i64, scratch_operands = 1 : i64, tpu.core_type = #tpu.core_type<tc>, window_params = [{transform_indices = @transform_0, window_bounds = array<i64: 16, 128>}, {transform_indices = @transform_1, window_bounds = array<i64: 128, 256>}, {transform_indices = @transform_2, window_bounds = array<i64: 1, 256>}, {pipeline_mode = #tpu.pipeline_mode<synchronous>, transform_indices = @transform_3, window_bounds = array<i64: 1, 128>}, {pipeline_mode = #tpu.pipeline_mode<synchronous>, transform_indices = @transform_4, window_bounds = array<i64: 1, 128>}, {transform_indices = @transform_5, window_bounds = array<i64: 16, 256>}]} {
    %c0_i32 = arith.constant 0 : i32
    %0 = arith.cmpi eq, %arg2, %c0_i32 : i32
    %1 = arith.extui %0 : i1 to i32
    %c0_i32_0 = arith.constant 0 : i32
    %2 = arith.cmpi ne, %1, %c0_i32_0 : i32
    scf.if %2 {
      %cst_19 = arith.constant 0.000000e+00 : f32
      %40 = vector.broadcast %cst_19 : f32 to vector<16x256xf32>
      %c0_20 = arith.constant 0 : index
      %c0_21 = arith.constant 0 : index
      %41 = vector.load %arg9[%c0_20, %c0_21] : memref<16x256xf32, #tpu.memory_space<vmem>>, vector<16x256xf32>
      tpu.vector_store %arg9[%c0_20, %c0_21], %40 {strides = array<i32>} : memref<16x256xf32, #tpu.memory_space<vmem>>, vector<16x256xf32>,
    } else {
    }
    %c0 = arith.constant 0 : index
    %c0_1 = arith.constant 0 : index
    %3 = vector.load %arg3[%c0, %c0_1] : memref<16x128xbf16, #tpu.memory_space<vmem>>, vector<16x128xbf16>
    %4 = arith.extf %3 : vector<16x128xbf16> to vector<16x128xf32>
    %cst = arith.constant dense<0.000000e+00> : vector<16xf32>
    %5 = vector.multi_reduction <add>, %4, %cst [1] : vector<16x128xf32> to vector<16xf32>
    %6 = vector.shape_cast %5 : vector<16xf32> to vector<16x1xf32>
    %cst_2 = arith.constant 1.280000e+02 : f32
    %7 = vector.broadcast %cst_2 : f32 to vector<16x1xf32>
    %8 = arith.divf %6, %7 : vector<16x1xf32>
    %9 = vector.broadcast %8 : vector<16x1xf32> to vector<16x128xf32>
    %10 = arith.subf %4, %9 : vector<16x128xf32>
    %11 = vector.broadcast %8 : vector<16x1xf32> to vector<16x128xf32>
    %12 = arith.subf %4, %11 : vector<16x128xf32>
    %13 = arith.mulf %10, %12 : vector<16x128xf32>
    %cst_3 = arith.constant dense<0.000000e+00> : vector<16xf32>
    %14 = vector.multi_reduction <add>, %13, %cst_3 [1] : vector<16x128xf32> to vector<16xf32>
    %15 = vector.shape_cast %14 : vector<16xf32> to vector<16x1xf32>
    %cst_4 = arith.constant 1.280000e+02 : f32
    %16 = vector.broadcast %cst_4 : f32 to vector<16x1xf32>
    %17 = arith.divf %15, %16 : vector<16x1xf32>
    %18 = vector.broadcast %8 : vector<16x1xf32> to vector<16x128xf32>
    %19 = arith.subf %4, %18 : vector<16x128xf32>
    %cst_5 = arith.constant 9.99999974E-6 : f32
    %20 = vector.broadcast %cst_5 : f32 to vector<16x1xf32>
    %21 = arith.addf %17, %20 : vector<16x1xf32>
    %22 = math.rsqrt %21 : vector<16x1xf32>
    %23 = vector.broadcast %22 : vector<16x1xf32> to vector<16x128xf32>
    %24 = arith.mulf %19, %23 : vector<16x128xf32>
    %c0_6 = arith.constant 0 : index
    %c0_7 = arith.constant 0 : index
    %25 = vector.load %arg6[%c0_6, %c0_7] : memref<1x128xf32, #tpu.memory_space<vmem>>, vector<1x128xf32>
    %26 = vector.broadcast %25 : vector<1x128xf32> to vector<16x128xf32>
    %27 = arith.mulf %24, %26 : vector<16x128xf32>
    %c0_8 = arith.constant 0 : index
    %c0_9 = arith.constant 0 : index
    %28 = vector.load %arg7[%c0_8, %c0_9] : memref<1x128xf32, #tpu.memory_space<vmem>>, vector<1x128xf32>
    %29 = vector.broadcast %28 : vector<1x128xf32> to vector<16x128xf32>
    %30 = arith.addf %27, %29 : vector<16x128xf32>
    %31 = arith.truncf %30 : vector<16x128xf32> to vector<16x128xbf16>
    %c0_10 = arith.constant 0 : index
    %c0_11 = arith.constant 0 : index
    %32 = vector.load %arg4[%c0_10, %c0_11] : memref<128x256xbf16, #tpu.memory_space<vmem>>, vector<128x256xbf16>
    %c0_12 = arith.constant 0 : index
    %c0_13 = arith.constant 0 : index
    %33 = vector.load %arg9[%c0_12, %c0_13] : memref<16x256xf32, #tpu.memory_space<vmem>>, vector<16x256xf32>
    %cst_14 = arith.constant dense<0.000000e+00> : vector<16x256xf32>
    %34 = tpu.matmul %31, %32, %cst_14 {dimension_numbers = #tpu.dot_dimension_numbers<[1], [0], [0], [1], [0, 0, 1, 1], [], []>} : vector<16x128xbf16>, vector<128x256xbf16>, vector<16x256xf32> -> vector<16x256xf32>
    %35 = arith.addf %33, %34 : vector<16x256xf32>
    %c0_15 = arith.constant 0 : index
    %c0_16 = arith.constant 0 : index
    %36 = vector.load %arg9[%c0_15, %c0_16] : memref<16x256xf32, #tpu.memory_space<vmem>>, vector<16x256xf32>
    tpu.vector_store %arg9[%c0_15, %c0_16], %35 {strides = array<i32>} : memref<16x256xf32, #tpu.memory_space<vmem>>, vector<16x256xf32>,
    %c0_i32_17 = arith.constant 0 : i32
    %37 = arith.cmpi eq, %arg2, %c0_i32_17 : i32
    %38 = arith.extui %37 : i1 to i32
    %c0_i32_18 = arith.constant 0 : i32
    %39 = arith.cmpi ne, %38, %c0_i32_18 : i32
    scf.if %39 {
      %c0_19 = arith.constant 0 : index
      %c0_20 = arith.constant 0 : index
      %40 = vector.load %arg9[%c0_19, %c0_20] : memref<16x256xf32, #tpu.memory_space<vmem>>, vector<16x256xf32>
      %c0_21 = arith.constant 0 : index
      %c0_22 = arith.constant 0 : index
      %41 = vector.load %arg5[%c0_21, %c0_22] : memref<1x256xf32, #tpu.memory_space<vmem>>, vector<1x256xf32>
      %42 = vector.broadcast %41 : vector<1x256xf32> to vector<16x256xf32>
      %43 = arith.addf %40, %42 : vector<16x256xf32>
      %cst_23 = arith.constant 5.000000e-01 : f32
      %44 = vector.broadcast %cst_23 : f32 to vector<16x256xf32>
      %45 = arith.mulf %44, %43 : vector<16x256xf32>
      %cst_24 = arith.constant 4.471500e-02 : f32
      %46 = vector.broadcast %cst_24 : f32 to vector<16x256xf32>
      %47 = arith.mulf %46, %43 : vector<16x256xf32>
      %48 = arith.mulf %47, %43 : vector<16x256xf32>
      %49 = arith.mulf %48, %43 : vector<16x256xf32>
      %50 = arith.addf %43, %49 : vector<16x256xf32>
      %cst_25 = arith.constant 0.797884583 : f32
      %51 = vector.broadcast %cst_25 : f32 to vector<16x256xf32>
      %52 = arith.mulf %51, %50 : vector<16x256xf32>
      %53 = math.tanh %52 : vector<16x256xf32>
      %cst_26 = arith.constant 1.000000e+00 : f32
      %54 = vector.broadcast %cst_26 : f32 to vector<16x256xf32>
      %55 = arith.addf %54, %53 : vector<16x256xf32>
      %56 = arith.mulf %45, %55 : vector<16x256xf32>
      %57 = arith.truncf %56 : vector<16x256xf32> to vector<16x256xbf16>
      %c0_27 = arith.constant 0 : index
      %c0_28 = arith.constant 0 : index
      %58 = vector.load %arg8[%c0_27, %c0_28] : memref<16x256xbf16, #tpu.memory_space<vmem>>, vector<16x256xbf16>
      tpu.vector_store %arg8[%c0_27, %c0_28], %57 {strides = array<i32>} : memref<16x256xbf16, #tpu.memory_space<vmem>>, vector<16x256xbf16>,
    } else {
    }
    return
  }
  func.func @transform_0(%arg0: i32, %arg1: i32, %arg2: i32) -> (i32, i32) {
    %c0_i32 = arith.constant 0 : i32
    return %arg0, %arg2 : i32, i32
  }
  func.func @transform_1(%arg0: i32, %arg1: i32, %arg2: i32) -> (i32, i32) {
    %c0_i32 = arith.constant 0 : i32
    return %arg2, %arg1 : i32, i32
  }
  func.func @transform_2(%arg0: i32, %arg1: i32, %arg2: i32) -> (i32, i32) {
    %c0_i32 = arith.constant 0 : i32
    %c0_i32_0 = arith.constant 0 : i32
    return %c0_i32, %arg1 : i32, i32
  }
  func.func @transform_3(%arg0: i32, %arg1: i32, %arg2: i32) -> (i32, i32) {
    %c0_i32 = arith.constant 0 : i32
    %c0_i32_0 = arith.constant 0 : i32
    %c0_i32_1 = arith.constant 0 : i32
    return %c0_i32, %c0_i32_0 : i32, i32
  }
  func.func @transform_4(%arg0: i32, %arg1: i32, %arg2: i32) -> (i32, i32) {
    %c0_i32 = arith.constant 0 : i32
    %c0_i32_0 = arith.constant 0 : i32
    %c0_i32_1 = arith.constant 0 : i32
    return %c0_i32, %c0_i32_0 : i32, i32
  }
  func.func @transform_5(%arg0: i32, %arg1: i32, %arg2: i32) -> (i32, i32) {
    %c0_i32 = arith.constant 0 : i32
    return %arg0, %arg1 : i32, i32
  }
}

module attributes {stable_mosaic.version = 11 : i64} {
  func.func @_fused_mm_kernel(%arg0: i32, %arg1: i32, %arg2: i32, %arg3: memref<16x128xbf16, #tpu.memory_space<vmem>>, %arg4: memref<128x128xbf16, #tpu.memory_space<vmem>>, %arg5: memref<1x128xf32, #tpu.memory_space<vmem>>, %arg6: memref<16x128xbf16, #tpu.memory_space<vmem>>, %arg7: memref<16x128xbf16, #tpu.memory_space<vmem>>, %arg8: memref<16x128xf32, #tpu.memory_space<vmem>>) attributes {dimension_semantics = [#tpu.dimension_semantics<parallel>, #tpu.dimension_semantics<parallel>, #tpu.dimension_semantics<arbitrary>], iteration_bounds = array<i64: 1, 1, 1>, scalar_prefetch = 0 : i64, scratch_operands = 1 : i64, tpu.core_type = #tpu.core_type<tc>, window_params = [{transform_indices = @transform_0, window_bounds = array<i64: 16, 128>}, {transform_indices = @transform_1, window_bounds = array<i64: 128, 128>}, {transform_indices = @transform_2, window_bounds = array<i64: 1, 128>}, {transform_indices = @transform_3, window_bounds = array<i64: 16, 128>}, {transform_indices = @transform_4, window_bounds = array<i64: 16, 128>}]} {
    %c0_i32 = arith.constant 0 : i32
    %0 = arith.cmpi eq, %arg2, %c0_i32 : i32
    %1 = arith.extui %0 : i1 to i32
    %c0_i32_0 = arith.constant 0 : i32
    %2 = arith.cmpi ne, %1, %c0_i32_0 : i32
    scf.if %2 {
      %cst_10 = arith.constant 0.000000e+00 : f32
      %12 = vector.broadcast %cst_10 : f32 to vector<16x128xf32>
      %c0_11 = arith.constant 0 : index
      %c0_12 = arith.constant 0 : index
      %13 = vector.load %arg8[%c0_11, %c0_12] : memref<16x128xf32, #tpu.memory_space<vmem>>, vector<16x128xf32>
      tpu.vector_store %arg8[%c0_11, %c0_12], %12 {strides = array<i32>} : memref<16x128xf32, #tpu.memory_space<vmem>>, vector<16x128xf32>,
    } else {
    }
    %c0 = arith.constant 0 : index
    %c0_1 = arith.constant 0 : index
    %3 = vector.load %arg3[%c0, %c0_1] : memref<16x128xbf16, #tpu.memory_space<vmem>>, vector<16x128xbf16>
    %c0_2 = arith.constant 0 : index
    %c0_3 = arith.constant 0 : index
    %4 = vector.load %arg4[%c0_2, %c0_3] : memref<128x128xbf16, #tpu.memory_space<vmem>>, vector<128x128xbf16>
    %c0_4 = arith.constant 0 : index
    %c0_5 = arith.constant 0 : index
    %5 = vector.load %arg8[%c0_4, %c0_5] : memref<16x128xf32, #tpu.memory_space<vmem>>, vector<16x128xf32>
    %cst = arith.constant dense<0.000000e+00> : vector<16x128xf32>
    %6 = tpu.matmul %3, %4, %cst {dimension_numbers = #tpu.dot_dimension_numbers<[1], [0], [0], [1], [0, 0, 1, 1], [], []>} : vector<16x128xbf16>, vector<128x128xbf16>, vector<16x128xf32> -> vector<16x128xf32>
    %7 = arith.addf %5, %6 : vector<16x128xf32>
    %c0_6 = arith.constant 0 : index
    %c0_7 = arith.constant 0 : index
    %8 = vector.load %arg8[%c0_6, %c0_7] : memref<16x128xf32, #tpu.memory_space<vmem>>, vector<16x128xf32>
    tpu.vector_store %arg8[%c0_6, %c0_7], %7 {strides = array<i32>} : memref<16x128xf32, #tpu.memory_space<vmem>>, vector<16x128xf32>,
    %c0_i32_8 = arith.constant 0 : i32
    %9 = arith.cmpi eq, %arg2, %c0_i32_8 : i32
    %10 = arith.extui %9 : i1 to i32
    %c0_i32_9 = arith.constant 0 : i32
    %11 = arith.cmpi ne, %10, %c0_i32_9 : i32
    scf.if %11 {
      %c0_10 = arith.constant 0 : index
      %c0_11 = arith.constant 0 : index
      %12 = vector.load %arg8[%c0_10, %c0_11] : memref<16x128xf32, #tpu.memory_space<vmem>>, vector<16x128xf32>
      %c0_12 = arith.constant 0 : index
      %c0_13 = arith.constant 0 : index
      %13 = vector.load %arg5[%c0_12, %c0_13] : memref<1x128xf32, #tpu.memory_space<vmem>>, vector<1x128xf32>
      %14 = vector.broadcast %13 : vector<1x128xf32> to vector<16x128xf32>
      %15 = arith.addf %12, %14 : vector<16x128xf32>
      %c0_14 = arith.constant 0 : index
      %c0_15 = arith.constant 0 : index
      %16 = vector.load %arg6[%c0_14, %c0_15] : memref<16x128xbf16, #tpu.memory_space<vmem>>, vector<16x128xbf16>
      %17 = arith.extf %16 : vector<16x128xbf16> to vector<16x128xf32>
      %18 = arith.addf %15, %17 : vector<16x128xf32>
      %19 = arith.truncf %18 : vector<16x128xf32> to vector<16x128xbf16>
      %c0_16 = arith.constant 0 : index
      %c0_17 = arith.constant 0 : index
      %20 = vector.load %arg7[%c0_16, %c0_17] : memref<16x128xbf16, #tpu.memory_space<vmem>>, vector<16x128xbf16>
      tpu.vector_store %arg7[%c0_16, %c0_17], %19 {strides = array<i32>} : memref<16x128xbf16, #tpu.memory_space<vmem>>, vector<16x128xbf16>,
    } else {
    }
    return
  }
  func.func @transform_0(%arg0: i32, %arg1: i32, %arg2: i32) -> (i32, i32) {
    %c0_i32 = arith.constant 0 : i32
    return %arg0, %arg2 : i32, i32
  }
  func.func @transform_1(%arg0: i32, %arg1: i32, %arg2: i32) -> (i32, i32) {
    %c0_i32 = arith.constant 0 : i32
    return %arg2, %arg1 : i32, i32
  }
  func.func @transform_2(%arg0: i32, %arg1: i32, %arg2: i32) -> (i32, i32) {
    %c0_i32 = arith.constant 0 : i32
    %c0_i32_0 = arith.constant 0 : i32
    return %c0_i32, %arg1 : i32, i32
  }
  func.func @transform_3(%arg0: i32, %arg1: i32, %arg2: i32) -> (i32, i32) {
    %c0_i32 = arith.constant 0 : i32
    return %arg0, %arg1 : i32, i32
  }
  func.func @transform_4(%arg0: i32, %arg1: i32, %arg2: i32) -> (i32, i32) {
    %c0_i32 = arith.constant 0 : i32
    return %arg0, %arg1 : i32, i32
  }
}

module attributes {stable_mosaic.version = 11 : i64} {
  func.func @_fused_mm_kernel(%arg0: i32, %arg1: i32, %arg2: i32, %arg3: memref<16x256xbf16, #tpu.memory_space<vmem>>, %arg4: memref<256x128xbf16, #tpu.memory_space<vmem>>, %arg5: memref<1x128xf32, #tpu.memory_space<vmem>>, %arg6: memref<16x128xbf16, #tpu.memory_space<vmem>>, %arg7: memref<16x128xbf16, #tpu.memory_space<vmem>>, %arg8: memref<16x128xf32, #tpu.memory_space<vmem>>) attributes {dimension_semantics = [#tpu.dimension_semantics<parallel>, #tpu.dimension_semantics<parallel>, #tpu.dimension_semantics<arbitrary>], iteration_bounds = array<i64: 1, 1, 1>, scalar_prefetch = 0 : i64, scratch_operands = 1 : i64, tpu.core_type = #tpu.core_type<tc>, window_params = [{transform_indices = @transform_0, window_bounds = array<i64: 16, 256>}, {transform_indices = @transform_1, window_bounds = array<i64: 256, 128>}, {transform_indices = @transform_2, window_bounds = array<i64: 1, 128>}, {transform_indices = @transform_3, window_bounds = array<i64: 16, 128>}, {transform_indices = @transform_4, window_bounds = array<i64: 16, 128>}]} {
    %c0_i32 = arith.constant 0 : i32
    %0 = arith.cmpi eq, %arg2, %c0_i32 : i32
    %1 = arith.extui %0 : i1 to i32
    %c0_i32_0 = arith.constant 0 : i32
    %2 = arith.cmpi ne, %1, %c0_i32_0 : i32
    scf.if %2 {
      %cst_10 = arith.constant 0.000000e+00 : f32
      %12 = vector.broadcast %cst_10 : f32 to vector<16x128xf32>
      %c0_11 = arith.constant 0 : index
      %c0_12 = arith.constant 0 : index
      %13 = vector.load %arg8[%c0_11, %c0_12] : memref<16x128xf32, #tpu.memory_space<vmem>>, vector<16x128xf32>
      tpu.vector_store %arg8[%c0_11, %c0_12], %12 {strides = array<i32>} : memref<16x128xf32, #tpu.memory_space<vmem>>, vector<16x128xf32>,
    } else {
    }
    %c0 = arith.constant 0 : index
    %c0_1 = arith.constant 0 : index
    %3 = vector.load %arg3[%c0, %c0_1] : memref<16x256xbf16, #tpu.memory_space<vmem>>, vector<16x256xbf16>
    %c0_2 = arith.constant 0 : index
    %c0_3 = arith.constant 0 : index
    %4 = vector.load %arg4[%c0_2, %c0_3] : memref<256x128xbf16, #tpu.memory_space<vmem>>, vector<256x128xbf16>
    %c0_4 = arith.constant 0 : index
    %c0_5 = arith.constant 0 : index
    %5 = vector.load %arg8[%c0_4, %c0_5] : memref<16x128xf32, #tpu.memory_space<vmem>>, vector<16x128xf32>
    %cst = arith.constant dense<0.000000e+00> : vector<16x128xf32>
    %6 = tpu.matmul %3, %4, %cst {dimension_numbers = #tpu.dot_dimension_numbers<[1], [0], [0], [1], [0, 0, 1, 1], [], []>} : vector<16x256xbf16>, vector<256x128xbf16>, vector<16x128xf32> -> vector<16x128xf32>
    %7 = arith.addf %5, %6 : vector<16x128xf32>
    %c0_6 = arith.constant 0 : index
    %c0_7 = arith.constant 0 : index
    %8 = vector.load %arg8[%c0_6, %c0_7] : memref<16x128xf32, #tpu.memory_space<vmem>>, vector<16x128xf32>
    tpu.vector_store %arg8[%c0_6, %c0_7], %7 {strides = array<i32>} : memref<16x128xf32, #tpu.memory_space<vmem>>, vector<16x128xf32>,
    %c0_i32_8 = arith.constant 0 : i32
    %9 = arith.cmpi eq, %arg2, %c0_i32_8 : i32
    %10 = arith.extui %9 : i1 to i32
    %c0_i32_9 = arith.constant 0 : i32
    %11 = arith.cmpi ne, %10, %c0_i32_9 : i32
    scf.if %11 {
      %c0_10 = arith.constant 0 : index
      %c0_11 = arith.constant 0 : index
      %12 = vector.load %arg8[%c0_10, %c0_11] : memref<16x128xf32, #tpu.memory_space<vmem>>, vector<16x128xf32>
      %c0_12 = arith.constant 0 : index
      %c0_13 = arith.constant 0 : index
      %13 = vector.load %arg5[%c0_12, %c0_13] : memref<1x128xf32, #tpu.memory_space<vmem>>, vector<1x128xf32>
      %14 = vector.broadcast %13 : vector<1x128xf32> to vector<16x128xf32>
      %15 = arith.addf %12, %14 : vector<16x128xf32>
      %c0_14 = arith.constant 0 : index
      %c0_15 = arith.constant 0 : index
      %16 = vector.load %arg6[%c0_14, %c0_15] : memref<16x128xbf16, #tpu.memory_space<vmem>>, vector<16x128xbf16>
      %17 = arith.extf %16 : vector<16x128xbf16> to vector<16x128xf32>
      %18 = arith.addf %15, %17 : vector<16x128xf32>
      %19 = arith.truncf %18 : vector<16x128xf32> to vector<16x128xbf16>
      %c0_16 = arith.constant 0 : index
      %c0_17 = arith.constant 0 : index
      %20 = vector.load %arg7[%c0_16, %c0_17] : memref<16x128xbf16, #tpu.memory_space<vmem>>, vector<16x128xbf16>
      tpu.vector_store %arg7[%c0_16, %c0_17], %19 {strides = array<i32>} : memref<16x128xbf16, #tpu.memory_space<vmem>>, vector<16x128xbf16>,
    } else {
    }
    return
  }
  func.func @transform_0(%arg0: i32, %arg1: i32, %arg2: i32) -> (i32, i32) {
    %c0_i32 = arith.constant 0 : i32
    return %arg0, %arg2 : i32, i32
  }
  func.func @transform_1(%arg0: i32, %arg1: i32, %arg2: i32) -> (i32, i32) {
    %c0_i32 = arith.constant 0 : i32
    return %arg2, %arg1 : i32, i32
  }
  func.func @transform_2(%arg0: i32, %arg1: i32, %arg2: i32) -> (i32, i32) {
    %c0_i32 = arith.constant 0 : i32
    %c0_i32_0 = arith.constant 0 : i32
    return %c0_i32, %arg1 : i32, i32
  }
  func.func @transform_3(%arg0: i32, %arg1: i32, %arg2: i32) -> (i32, i32) {
    %c0_i32 = arith.constant 0 : i32
    return %arg0, %arg1 : i32, i32
  }
  func.func @transform_4(%arg0: i32, %arg1: i32, %arg2: i32) -> (i32, i32) {
    %c0_i32 = arith.constant 0 : i32
    return %arg0, %arg1 : i32, i32
  }
}

module attributes {stable_mosaic.version = 11 : i64} {
  func.func @_ln_kernel(%arg0: i32, %arg1: memref<16x128xbf16, #tpu.memory_space<vmem>>, %arg2: memref<1x128xf32, #tpu.memory_space<vmem>>, %arg3: memref<1x128xf32, #tpu.memory_space<vmem>>, %arg4: memref<16x128xf32, #tpu.memory_space<vmem>>) attributes {dimension_semantics = [#tpu.dimension_semantics<parallel>], iteration_bounds = array<i64: 1>, scalar_prefetch = 0 : i64, scratch_operands = 0 : i64, tpu.core_type = #tpu.core_type<tc>, window_params = [{transform_indices = @transform_0, window_bounds = array<i64: 16, 128>}, {pipeline_mode = #tpu.pipeline_mode<synchronous>, transform_indices = @transform_1, window_bounds = array<i64: 1, 128>}, {pipeline_mode = #tpu.pipeline_mode<synchronous>, transform_indices = @transform_2, window_bounds = array<i64: 1, 128>}, {transform_indices = @transform_3, window_bounds = array<i64: 16, 128>}]} {
    %c0 = arith.constant 0 : index
    %c0_0 = arith.constant 0 : index
    %0 = vector.load %arg1[%c0, %c0_0] : memref<16x128xbf16, #tpu.memory_space<vmem>>, vector<16x128xbf16>
    %1 = arith.extf %0 : vector<16x128xbf16> to vector<16x128xf32>
    %cst = arith.constant dense<0.000000e+00> : vector<16xf32>
    %2 = vector.multi_reduction <add>, %1, %cst [1] : vector<16x128xf32> to vector<16xf32>
    %3 = vector.shape_cast %2 : vector<16xf32> to vector<16x1xf32>
    %cst_1 = arith.constant 1.280000e+02 : f32
    %4 = vector.broadcast %cst_1 : f32 to vector<16x1xf32>
    %5 = arith.divf %3, %4 : vector<16x1xf32>
    %6 = vector.broadcast %5 : vector<16x1xf32> to vector<16x128xf32>
    %7 = arith.subf %1, %6 : vector<16x128xf32>
    %8 = vector.broadcast %5 : vector<16x1xf32> to vector<16x128xf32>
    %9 = arith.subf %1, %8 : vector<16x128xf32>
    %10 = arith.mulf %7, %9 : vector<16x128xf32>
    %cst_2 = arith.constant dense<0.000000e+00> : vector<16xf32>
    %11 = vector.multi_reduction <add>, %10, %cst_2 [1] : vector<16x128xf32> to vector<16xf32>
    %12 = vector.shape_cast %11 : vector<16xf32> to vector<16x1xf32>
    %cst_3 = arith.constant 1.280000e+02 : f32
    %13 = vector.broadcast %cst_3 : f32 to vector<16x1xf32>
    %14 = arith.divf %12, %13 : vector<16x1xf32>
    %15 = vector.broadcast %5 : vector<16x1xf32> to vector<16x128xf32>
    %16 = arith.subf %1, %15 : vector<16x128xf32>
    %cst_4 = arith.constant 9.99999974E-6 : f32
    %17 = vector.broadcast %cst_4 : f32 to vector<16x1xf32>
    %18 = arith.addf %14, %17 : vector<16x1xf32>
    %19 = math.rsqrt %18 : vector<16x1xf32>
    %20 = vector.broadcast %19 : vector<16x1xf32> to vector<16x128xf32>
    %21 = arith.mulf %16, %20 : vector<16x128xf32>
    %c0_5 = arith.constant 0 : index
    %c0_6 = arith.constant 0 : index
    %22 = vector.load %arg2[%c0_5, %c0_6] : memref<1x128xf32, #tpu.memory_space<vmem>>, vector<1x128xf32>
    %23 = vector.broadcast %22 : vector<1x128xf32> to vector<16x128xf32>
    %24 = arith.mulf %21, %23 : vector<16x128xf32>
    %c0_7 = arith.constant 0 : index
    %c0_8 = arith.constant 0 : index
    %25 = vector.load %arg3[%c0_7, %c0_8] : memref<1x128xf32, #tpu.memory_space<vmem>>, vector<1x128xf32>
    %26 = vector.broadcast %25 : vector<1x128xf32> to vector<16x128xf32>
    %27 = arith.addf %24, %26 : vector<16x128xf32>
    %c0_9 = arith.constant 0 : index
    %c0_10 = arith.constant 0 : index
    %28 = vector.load %arg4[%c0_9, %c0_10] : memref<16x128xf32, #tpu.memory_space<vmem>>, vector<16x128xf32>
    tpu.vector_store %arg4[%c0_9, %c0_10], %27 {strides = array<i32>} : memref<16x128xf32, #tpu.memory_space<vmem>>, vector<16x128xf32>,
    return
  }
  func.func @transform_0(%arg0: i32) -> (i32, i32) {
    %c0_i32 = arith.constant 0 : i32
    %c0_i32_0 = arith.constant 0 : i32
    return %arg0, %c0_i32 : i32, i32
  }
  func.func @transform_1(%arg0: i32) -> (i32, i32) {
    %c0_i32 = arith.constant 0 : i32
    %c0_i32_0 = arith.constant 0 : i32
    %c0_i32_1 = arith.constant 0 : i32
    return %c0_i32, %c0_i32_0 : i32, i32
  }
  func.func @transform_2(%arg0: i32) -> (i32, i32) {
    %c0_i32 = arith.constant 0 : i32
    %c0_i32_0 = arith.constant 0 : i32
    %c0_i32_1 = arith.constant 0 : i32
    return %c0_i32, %c0_i32_0 : i32, i32
  }
  func.func @transform_3(%arg0: i32) -> (i32, i32) {
    %c0_i32 = arith.constant 0 : i32
    %c0_i32_0 = arith.constant 0 : i32
    return %arg0, %c0_i32 : i32, i32
  }
}

</mosaic_0001>

<llo_original>
// kernel: _lambda_.13
$region0: #{_lambda_.13}
  #allocation0 [shape = 'u32[]', space=smem, size = 0x4, offset = 0x4, fixed_abs, tag = 'smem constant byte address 0x4 - core index']
  #allocation1 [shape = 'u32[144,128]{1,0:T(1,128)}', space=vmem, size = 0x12000, scoped, tag = 'internal scratch']
  #allocation2 [shape = 'f32[32,128]{1,0:T(8,128)}', space=vmem, size = 0x4000, scoped, tag = 'scratch operand']
  %s0 = inlined_call_operand.vmem [shape: f32[32,48], index: 0, kind: input, shape index: {}]
  %s1 = inlined_call_operand.vmem [shape: bf16[48,128], index: 1, kind: input, shape index: {}]
  %s2 = inlined_call_operand.vmem [shape: f32[1,128], index: 2, kind: input, shape index: {}]
  %s3 = inlined_call_operand.vmem [shape: bf16[32,128], index: 3, kind: output, shape index: {}]
  %s4 = sld [smem:[#allocation0]]
  $region30: #{_lambda_.13} parent=0
    _
  %s6 = ssub.s32 1, %s4
  %s7 = scalar_select 0, %s6, %s4
  // Predicated region
  $region2: #{_lambda_.13} parent=0 // pred_check
    _
  $region3: #{_lambda_.13} parent=0 // pred_check_branch
    %9 = sbr.rel (0) target = $region5
  $region4: #{_lambda_.13} parent=0 // pred_region
    _
  $region5: #{_lambda_.13} parent=0 // pred_fallthru
    _
  // Predicated region
  $region6: #{_lambda_.13} parent=0 // pred_check
    _
  $region7: #{_lambda_.13} parent=0 // pred_check_branch
    %11 = sbr.rel (0) target = $region9
  $region8: #{_lambda_.13} parent=0 // pred_region
    _
  $region9: #{_lambda_.13} parent=0 // pred_fallthru
    _
  // Predicated region
  $region10: #{_lambda_.13} parent=0 // pred_check
    _
  $region11: #{_lambda_.13} parent=0 // pred_check_branch
    %13 = sbr.rel (0) target = $region13
  $region12: #{_lambda_.13} parent=0 // pred_region
    _
  $region13: #{_lambda_.13} parent=0 // pred_fallthru
    _
  %p15 = scmp.eq.s32.totalorder 0, 0
  // Predicated region
  $region14: #{_lambda_.13} parent=0 // pred_check
    %p16 = pneg %p15
  $region15: #{_lambda_.13} parent=0 // pred_check_branch
    %18 = sbr.rel (%p16) target = $region17
  $region16: #{_lambda_.13} parent=0 // pred_region
    %19 = vst [vmem:[#allocation2] sm:$0xff] 0.0
    %20 = vst [vmem:[#allocation2 + $0x8] sm:$0xff] 0.0
    %21 = vst [vmem:[#allocation2 + $0x10] sm:$0xff] 0.0
    %22 = vst [vmem:[#allocation2 + $0x18] sm:$0xff] 0.0
  $region17: #{_lambda_.13} parent=0 // pred_fallthru
    _
  %v23 = vld [vmem:[%s0] sm:$0xff]
  %v24 = vld [vmem:[%s0 + $0x8] sm:$0xff]
  %v25 = vld [vmem:[%s0 + $0x10] sm:$0xff]
  %v26 = vld [vmem:[%s0 + $0x18] sm:$0xff]
  %v27 = vpack.c.bf16 %v24, %v23
  %v28 = vpack.c.bf16 %v26, %v25
  %v29 = vld [vmem:[%s1] sm:$0xf]
  %v30 = vld [vmem:[%s1 + $0x4] sm:$0xf]
  %v31 = vld [vmem:[%s1 + $0x8] sm:$0xf]
  %v32 = vld [vmem:[%s1 + $0xc] sm:$0xf]
  %v33 = vld [vmem:[%s1 + $0x10] sm:$0xf]
  %v34 = vld [vmem:[%s1 + $0x14] sm:$0xf]
  %v35 = vld [vmem:[#allocation2] sm:$0xff]
  %v36 = vld [vmem:[#allocation2 + $0x8] sm:$0xff]
  %v37 = vld [vmem:[#allocation2 + $0x10] sm:$0xff]
  %v38 = vld [vmem:[#allocation2 + $0x18] sm:$0xff]
  %v45 = vunpack.c.l.b16 %v29
  %v46 = vunpack.c.l.b16 %v30
  %v47 = vunpack.c.l.b16 %v31
  %v48 = vunpack.c.l.b16 %v32
  %v49 = vunpack.c.l.b16 %v33
  %v50 = vunpack.c.l.b16 %v34
  %v51 = vpack.c.b16 %v46, %v45
  %v52 = vpack.c.b16 %v48, %v47
  %v53 = vpack.c.b16 %v50, %v49
  %vm57 = vcmask 392192
  %v59 = vsel %vm57, %v27, 0
  %v62 = vsel %vm57, %v28, 0
  %64 = vmatprep.subr.bf16.mxu0 0
  %65 = vmatpush1.bf16.msra.mxu0 0
  %66 = vmatprep.subr.bf16.mxu0 0
  %67 = vmatpush1.bf16.msra.mxu0 0
  %68 = vmatprep.subr.bf16.mxu0 0
  %69 = vmatpush1.bf16.msra.mxu0 0
  %70 = vmatprep.subr.bf16.mxu0 0
  %71 = vmatpush1.bf16.msra.mxu0 0
  %72 = vmatprep.subr.bf16.mxu0 0
  %73 = vmatpush1.bf16.msra.mxu0 0
  %74 = vmatprep.subr.bf16.mxu0 0
  %75 = vmatpush1.bf16.msra.mxu0 %v53
  %76 = vmatprep.subr.bf16.mxu0 0
  %77 = vmatpush1.bf16.msra.mxu0 %v52
  %78 = vmatprep.subr.bf16.mxu0 0
  %79 = vmatpush1.bf16.msra.mxu0 %v51
  %80 = vmatprep.subr.bf16.mxu0 0
  %81 = vmatpush2.bf16.msra.mxu0 0
  %82 = vmatprep.subr.bf16.mxu0 0
  %83 = vmatpush2.bf16.msra.mxu0 0
  %84 = vmatprep.subr.bf16.mxu0 0
  %85 = vmatpush2.bf16.msra.mxu0 0
  %86 = vmatprep.subr.bf16.mxu0 0
  %87 = vmatpush2.bf16.msra.mxu0 0
  %88 = vmatprep.subr.bf16.mxu0 0
  %89 = vmatpush2.bf16.msra.mxu0 0
  %90 = vmatprep.subr.bf16.mxu0 0
  %91 = vmatpush2.bf16.msra.mxu0 0
  %92 = vmatprep.subr.bf16.mxu0 0
  %93 = vmatpush2.bf16.msra.mxu0 0
  %94 = vmatprep.subr.bf16.mxu0 0
  %95 = vmatpush2.bf16.msra.mxu0 0
  %96 = vmatprep.mubr.bf16.mxu0 0
  %97 = vmatmul.mubr.bf16.gmra.mxu0 %v59
  %v98 = vpop.f32.mrf.mxu0
  %v99 = vadd.f32 0.0, %v98
  %v100 = vpop.f32.mrf.mxu0
  %v101 = vpop.f32.mrf.mxu0
  %v102 = vadd.f32 0.0, %v101
  %v103 = vpop.f32.mrf.mxu0
  %104 = vmatprep.mubr.bf16.mxu0 0
  %105 = vmatmul.mubr.bf16.gmra.mxu0 %v62
  %v106 = vpop.f32.mrf.mxu0
  %v107 = vadd.f32 0.0, %v106
  %v108 = vpop.f32.mrf.mxu0
  %v109 = vpop.f32.mrf.mxu0
  %v110 = vadd.f32 0.0, %v109
  %v111 = vpop.f32.mrf.mxu0
  %112 = vdwg.mxu0
  %v113 = vadd.f32 %v35, %v99
  %v114 = vadd.f32 %v36, %v102
  %v115 = vadd.f32 %v37, %v107
  %v116 = vadd.f32 %v38, %v110
  %117 = vst [vmem:[#allocation2] sm:$0xff] %v113
  %118 = vst [vmem:[#allocation2 + $0x8] sm:$0xff] %v114
  %119 = vst [vmem:[#allocation2 + $0x10] sm:$0xff] %v115
  %120 = vst [vmem:[#allocation2 + $0x18] sm:$0xff] %v116
  // Predicated region
  $region18: #{_lambda_.13} parent=0 // pred_check
    %p121 = pneg %p15
  $region19: #{_lambda_.13} parent=0 // pred_check_branch
    %123 = sbr.rel (%p121) target = $region21
  $region20: #{_lambda_.13} parent=0 // pred_region
    %v124 = vld [vmem:[#allocation2] sm:$0xff]
    %v125 = vld [vmem:[#allocation2 + $0x8] sm:$0xff]
    %v126 = vld [vmem:[#allocation2 + $0x10] sm:$0xff]
    %v127 = vld [vmem:[#allocation2 + $0x18] sm:$0xff]
    %v128 = vld [vmem:[%s2] sm:$0x1]
    %v130 = vlaneseq
    %v131 = vshrl.u32 %v130, 7
    %v132 = vsub.s32 0, %v131
    %v133 = vrot.slane %v128, %v132
    %v135 = vadd.f32 %v124, %v133
    %v136 = vadd.f32 %v125, %v133
    %v137 = vadd.f32 %v126, %v133
    %v138 = vadd.f32 %v127, %v133
    %v139 = vmul.f32 %v135, 0.5
    %v140 = vmul.f32 %v136, 0.5
    %v141 = vmul.f32 %v137, 0.5
    %v142 = vmul.f32 %v138, 0.5
    %v143 = vmul.f32 %v135, 0.044715
    %v144 = vmul.f32 %v136, 0.044715
    %v145 = vmul.f32 %v137, 0.044715
    %v146 = vmul.f32 %v138, 0.044715
    %v147 = vmul.f32 %v143, %v135
    %v148 = vmul.f32 %v144, %v136
    %v149 = vmul.f32 %v145, %v137
    %v150 = vmul.f32 %v146, %v138
    %v151 = vmul.f32 %v147, %v135
    %v152 = vmul.f32 %v148, %v136
    %v153 = vmul.f32 %v149, %v137
    %v154 = vmul.f32 %v150, %v138
    %v155 = vadd.f32 %v135, %v151
    %v156 = vadd.f32 %v136, %v152
    %v157 = vadd.f32 %v137, %v153
    %v158 = vadd.f32 %v138, %v154
    %v159 = vmul.f32 %v155, 0.7978846
    %v160 = vmul.f32 %v156, 0.7978846
    %v161 = vmul.f32 %v157, 0.7978846
    %v162 = vmul.f32 %v158, 0.7978846
    %v163 = vtanh.pop %v159
    %v164 = vtanh.pop %v160
    %v165 = vtanh.pop %v161
    %v166 = vtanh.pop %v162
    %v167 = vadd.f32 %v163, 1.0
    %v168 = vadd.f32 %v164, 1.0
    %v169 = vadd.f32 %v165, 1.0
    %v170 = vadd.f32 %v166, 1.0
    %v171 = vmul.f32 %v139, %v167
    %v172 = vmul.f32 %v140, %v168
    %v173 = vmul.f32 %v141, %v169
    %v174 = vmul.f32 %v142, %v170
    %v175 = vpack.c.bf16 %v172, %v171
    %v176 = vpack.c.bf16 %v174, %v173
    %v179 = vunpack.c.l.b16 %v175
    %v180 = vunpack.c.h.b16 %v175
    %v181 = vunpack.c.l.b16 %v176
    %v182 = vunpack.c.h.b16 %v176
    %v183 = vpack.c.b16 %v179, %v179
    %v184 = vpack.c.b16 %v180, %v180
    %v185 = vpack.c.b16 %v181, %v181
    %v186 = vpack.c.b16 %v182, %v182
    %191 = vst [vmem:[%s3] sm:$0xf] %v183
    %192 = vst [vmem:[%s3 + $0x4] sm:$0xf] %v184
    %193 = vst [vmem:[%s3 + $0x8] sm:$0xf] %v185
    %194 = vst [vmem:[%s3 + $0xc] sm:$0xf] %v186
  $region21: #{_lambda_.13} parent=0 // pred_fallthru
    _
  // Predicated region
  $region22: #{_lambda_.13} parent=0 // pred_check
    _
  $region23: #{_lambda_.13} parent=0 // pred_check_branch
    %196 = sbr.rel (0) target = $region25
  $region24: #{_lambda_.13} parent=0 // pred_region
    _
  $region25: #{_lambda_.13} parent=0 // pred_fallthru
    _
  // Predicated region
  $region26: #{_lambda_.13} parent=0 // pred_check
    _
  $region27: #{_lambda_.13} parent=0 // pred_check_branch
    %198 = sbr.rel (0) target = $region29
  $region28: #{_lambda_.13} parent=0 // pred_region
    _
  $region29: #{_lambda_.13} parent=0 // pred_fallthru
    _

// kernel: _lambda_.14
$region0: #{_lambda_.14}
  #allocation0 [shape = 'u32[]', space=smem, size = 0x4, offset = 0x4, fixed_abs, tag = 'smem constant byte address 0x4 - core index']
  #allocation1 [shape = 'u32[144,128]{1,0:T(1,128)}', space=vmem, size = 0x12000, scoped, tag = 'internal scratch']
  #allocation2 [shape = 'f32[16,128]{1,0:T(8,128)}', space=vmem, size = 0x2000, scoped, tag = 'scratch operand']
  %s0 = inlined_call_operand.vmem [shape: bf16[16,384], index: 0, kind: input, shape index: {}]
  %s1 = inlined_call_operand.vmem [shape: bf16[384,128], index: 1, kind: input, shape index: {}]
  %s2 = inlined_call_operand.vmem [shape: f32[1,128], index: 2, kind: input, shape index: {}]
  %s3 = inlined_call_operand.vmem [shape: bf16[16,128], index: 3, kind: output, shape index: {}]
  %s4 = sld [smem:[#allocation0]]
  $region30: #{_lambda_.14} parent=0
    _
  %s6 = ssub.s32 1, %s4
  %s7 = scalar_select 0, %s6, %s4
  // Predicated region
  $region2: #{_lambda_.14} parent=0 // pred_check
    _
  $region3: #{_lambda_.14} parent=0 // pred_check_branch
    %9 = sbr.rel (0) target = $region5
  $region4: #{_lambda_.14} parent=0 // pred_region
    _
  $region5: #{_lambda_.14} parent=0 // pred_fallthru
    _
  // Predicated region
  $region6: #{_lambda_.14} parent=0 // pred_check
    _
  $region7: #{_lambda_.14} parent=0 // pred_check_branch
    %11 = sbr.rel (0) target = $region9
  $region8: #{_lambda_.14} parent=0 // pred_region
    _
  $region9: #{_lambda_.14} parent=0 // pred_fallthru
    _
  // Predicated region
  $region10: #{_lambda_.14} parent=0 // pred_check
    _
  $region11: #{_lambda_.14} parent=0 // pred_check_branch
    %13 = sbr.rel (0) target = $region13
  $region12: #{_lambda_.14} parent=0 // pred_region
    _
  $region13: #{_lambda_.14} parent=0 // pred_fallthru
    _
  %p15 = scmp.eq.s32.totalorder 0, 0
  // Predicated region
  $region14: #{_lambda_.14} parent=0 // pred_check
    %p16 = pneg %p15
  $region15: #{_lambda_.14} parent=0 // pred_check_branch
    %18 = sbr.rel (%p16) target = $region17
  $region16: #{_lambda_.14} parent=0 // pred_region
    %19 = vst [vmem:[#allocation2] sm:$0xff] 0.0
    %20 = vst [vmem:[#allocation2 + $0x8] sm:$0xff] 0.0
  $region17: #{_lambda_.14} parent=0 // pred_fallthru
    _
  %v21 = vld [vmem:[%s0] sm:$0xff]
  %v22 = vld [vmem:[%s0 + $0x8] sm:$0xf]
  %v23 = vld [vmem:[%s0 + $0xc] sm:$0xff]
  %v24 = vld [vmem:[%s0 + $0x14] sm:$0xf]
  %v25 = vld [vmem:[%s1] sm:$0xf]
  %v26 = vld [vmem:[%s1 + $0x4] sm:$0xf]
  %v27 = vld [vmem:[%s1 + $0x8] sm:$0xf]
  %v28 = vld [vmem:[%s1 + $0xc] sm:$0xf]
  %v29 = vld [vmem:[%s1 + $0x10] sm:$0xf]
  %v30 = vld [vmem:[%s1 + $0x14] sm:$0xf]
  %v31 = vld [vmem:[%s1 + $0x18] sm:$0xf]
  %v32 = vld [vmem:[%s1 + $0x1c] sm:$0xf]
  %v33 = vld [vmem:[%s1 + $0x20] sm:$0xf]
  %v34 = vld [vmem:[%s1 + $0x24] sm:$0xf]
  %v35 = vld [vmem:[%s1 + $0x28] sm:$0xf]
  %v36 = vld [vmem:[%s1 + $0x2c] sm:$0xf]
  %v37 = vld [vmem:[%s1 + $0x30] sm:$0xf]
  %v38 = vld [vmem:[%s1 + $0x34] sm:$0xf]
  %v39 = vld [vmem:[%s1 + $0x38] sm:$0xf]
  %v40 = vld [vmem:[%s1 + $0x3c] sm:$0xf]
  %v41 = vld [vmem:[%s1 + $0x40] sm:$0xf]
  %v42 = vld [vmem:[%s1 + $0x44] sm:$0xf]
  %v43 = vld [vmem:[%s1 + $0x48] sm:$0xf]
  %v44 = vld [vmem:[%s1 + $0x4c] sm:$0xf]
  %v45 = vld [vmem:[%s1 + $0x50] sm:$0xf]
  %v46 = vld [vmem:[%s1 + $0x54] sm:$0xf]
  %v47 = vld [vmem:[%s1 + $0x58] sm:$0xf]
  %v48 = vld [vmem:[%s1 + $0x5c] sm:$0xf]
  %v49 = vld [vmem:[%s1 + $0x60] sm:$0xf]
  %v50 = vld [vmem:[%s1 + $0x64] sm:$0xf]
  %v51 = vld [vmem:[%s1 + $0x68] sm:$0xf]
  %v52 = vld [vmem:[%s1 + $0x6c] sm:$0xf]
  %v53 = vld [vmem:[%s1 + $0x70] sm:$0xf]
  %v54 = vld [vmem:[%s1 + $0x74] sm:$0xf]
  %v55 = vld [vmem:[%s1 + $0x78] sm:$0xf]
  %v56 = vld [vmem:[%s1 + $0x7c] sm:$0xf]
  %v57 = vld [vmem:[%s1 + $0x80] sm:$0xf]
  %v58 = vld [vmem:[%s1 + $0x84] sm:$0xf]
  %v59 = vld [vmem:[%s1 + $0x88] sm:$0xf]
  %v60 = vld [vmem:[%s1 + $0x8c] sm:$0xf]
  %v61 = vld [vmem:[%s1 + $0x90] sm:$0xf]
  %v62 = vld [vmem:[%s1 + $0x94] sm:$0xf]
  %v63 = vld [vmem:[%s1 + $0x98] sm:$0xf]
  %v64 = vld [vmem:[%s1 + $0x9c] sm:$0xf]
  %v65 = vld [vmem:[%s1 + $0xa0] sm:$0xf]
  %v66 = vld [vmem:[%s1 + $0xa4] sm:$0xf]
  %v67 = vld [vmem:[%s1 + $0xa8] sm:$0xf]
  %v68 = vld [vmem:[%s1 + $0xac] sm:$0xf]
  %v69 = vld [vmem:[%s1 + $0xb0] sm:$0xf]
  %v70 = vld [vmem:[%s1 + $0xb4] sm:$0xf]
  %v71 = vld [vmem:[%s1 + $0xb8] sm:$0xf]
  %v72 = vld [vmem:[%s1 + $0xbc] sm:$0xf]
  %v73 = vld [vmem:[#allocation2] sm:$0xff]
  %v74 = vld [vmem:[#allocation2 + $0x8] sm:$0xff]
  %v79 = vunpack.c.l.b16 %v21
  %v80 = vunpack.c.h.b16 %v21
  %v81 = vunpack.c.l.b16 %v22
  %v82 = vunpack.c.l.b16 %v23
  %v83 = vunpack.c.h.b16 %v23
  %v84 = vunpack.c.l.b16 %v24
  %v85 = vpack.c.b16 %v82, %v79
  %v86 = vpack.c.b16 %v83, %v80
  %v87 = vpack.c.b16 %v84, %v81
  %v139 = vunpack.c.l.b16 %v25
  %v140 = vunpack.c.l.b16 %v26
  %v141 = vunpack.c.l.b16 %v27
  %v142 = vunpack.c.l.b16 %v28
  %v143 = vunpack.c.l.b16 %v29
  %v144 = vunpack.c.l.b16 %v30
  %v145 = vunpack.c.l.b16 %v31
  %v146 = vunpack.c.l.b16 %v32
  %v147 = vunpack.c.l.b16 %v33
  %v148 = vunpack.c.l.b16 %v34
  %v149 = vunpack.c.l.b16 %v35
  %v150 = vunpack.c.l.b16 %v36
  %v151 = vunpack.c.l.b16 %v37
  %v152 = vunpack.c.l.b16 %v38
  %v153 = vunpack.c.l.b16 %v39
  %v154 = vunpack.c.l.b16 %v40
  %v155 = vunpack.c.l.b16 %v41
  %v156 = vunpack.c.l.b16 %v42
  %v157 = vunpack.c.l.b16 %v43
  %v158 = vunpack.c.l.b16 %v44
  %v159 = vunpack.c.l.b16 %v45
  %v160 = vunpack.c.l.b16 %v46
  %v161 = vunpack.c.l.b16 %v47
  %v162 = vunpack.c.l.b16 %v48
  %v163 = vunpack.c.l.b16 %v49
  %v164 = vunpack.c.l.b16 %v50
  %v165 = vunpack.c.l.b16 %v51
  %v166 = vunpack.c.l.b16 %v52
  %v167 = vunpack.c.l.b16 %v53
  %v168 = vunpack.c.l.b16 %v54
  %v169 = vunpack.c.l.b16 %v55
  %v170 = vunpack.c.l.b16 %v56
  %v171 = vunpack.c.l.b16 %v57
  %v172 = vunpack.c.l.b16 %v58
  %v173 = vunpack.c.l.b16 %v59
  %v174 = vunpack.c.l.b16 %v60
  %v175 = vunpack.c.l.b16 %v61
  %v176 = vunpack.c.l.b16 %v62
  %v177 = vunpack.c.l.b16 %v63
  %v178 = vunpack.c.l.b16 %v64
  %v179 = vunpack.c.l.b16 %v65
  %v180 = vunpack.c.l.b16 %v66
  %v181 = vunpack.c.l.b16 %v67
  %v182 = vunpack.c.l.b16 %v68
  %v183 = vunpack.c.l.b16 %v69
  %v184 = vunpack.c.l.b16 %v70
  %v185 = vunpack.c.l.b16 %v71
  %v186 = vunpack.c.l.b16 %v72
  %v187 = vpack.c.b16 %v140, %v139
  %v188 = vpack.c.b16 %v142, %v141
  %v189 = vpack.c.b16 %v144, %v143
  %v190 = vpack.c.b16 %v146, %v145
  %v191 = vpack.c.b16 %v148, %v147
  %v192 = vpack.c.b16 %v150, %v149
  %v193 = vpack.c.b16 %v152, %v151
  %v194 = vpack.c.b16 %v154, %v153
  %v195 = vpack.c.b16 %v156, %v155
  %v196 = vpack.c.b16 %v158, %v157
  %v197 = vpack.c.b16 %v160, %v159
  %v198 = vpack.c.b16 %v162, %v161
  %v199 = vpack.c.b16 %v164, %v163
  %v200 = vpack.c.b16 %v166, %v165
  %v201 = vpack.c.b16 %v168, %v167
  %v202 = vpack.c.b16 %v170, %v169
  %v203 = vpack.c.b16 %v172, %v171
  %v204 = vpack.c.b16 %v174, %v173
  %v205 = vpack.c.b16 %v176, %v175
  %v206 = vpack.c.b16 %v178, %v177
  %v207 = vpack.c.b16 %v180, %v179
  %v208 = vpack.c.b16 %v182, %v181
  %v209 = vpack.c.b16 %v184, %v183
  %v210 = vpack.c.b16 %v186, %v185
  %235 = vmatprep.subr.bf16.mxu0 0
  %236 = vmatpush1.bf16.msra.mxu0 %v194
  %237 = vmatprep.subr.bf16.mxu0 0
  %238 = vmatpush1.bf16.msra.mxu0 %v193
  %239 = vmatprep.subr.bf16.mxu0 0
  %240 = vmatpush1.bf16.msra.mxu0 %v192
  %241 = vmatprep.subr.bf16.mxu0 0
  %242 = vmatpush1.bf16.msra.mxu0 %v191
  %243 = vmatprep.subr.bf16.mxu0 0
  %244 = vmatpush1.bf16.msra.mxu0 %v190
  %245 = vmatprep.subr.bf16.mxu0 0
  %246 = vmatpush1.bf16.msra.mxu0 %v189
  %247 = vmatprep.subr.bf16.mxu0 0
  %248 = vmatpush1.bf16.msra.mxu0 %v188
  %249 = vmatprep.subr.bf16.mxu0 0
  %250 = vmatpush1.bf16.msra.mxu0 %v187
  %251 = vmatprep.subr.bf16.mxu0 0
  %252 = vmatpush2.bf16.msra.mxu0 %v202
  %253 = vmatprep.subr.bf16.mxu0 0
  %254 = vmatpush2.bf16.msra.mxu0 %v201
  %255 = vmatprep.subr.bf16.mxu0 0
  %256 = vmatpush2.bf16.msra.mxu0 %v200
  %257 = vmatprep.subr.bf16.mxu0 0
  %258 = vmatpush2.bf16.msra.mxu0 %v199
  %259 = vmatprep.subr.bf16.mxu0 0
  %260 = vmatpush2.bf16.msra.mxu0 %v198
  %261 = vmatprep.subr.bf16.mxu0 0
  %262 = vmatpush2.bf16.msra.mxu0 %v197
  %263 = vmatprep.subr.bf16.mxu0 0
  %264 = vmatpush2.bf16.msra.mxu0 %v196
  %265 = vmatprep.subr.bf16.mxu0 0
  %266 = vmatpush2.bf16.msra.mxu0 %v195
  %267 = vmatprep.mubr.bf16.mxu0 %v86
  %268 = vmatmul.mubr.bf16.gmra.mxu0 %v85
  %v269 = vpop.f32.mrf.mxu0
  %v270 = vadd.f32 0.0, %v269
  %v271 = vpop.f32.mrf.mxu0
  %v272 = vpop.f32.mrf.mxu0
  %v273 = vadd.f32 0.0, %v272
  %v274 = vpop.f32.mrf.mxu0
  %275 = vdwg.mxu0
  %276 = vmatprep.subr.bf16.mxu0 0
  %277 = vmatpush1.bf16.msra.mxu0 %v210
  %278 = vmatprep.subr.bf16.mxu0 0
  %279 = vmatpush1.bf16.msra.mxu0 %v209
  %280 = vmatprep.subr.bf16.mxu0 0
  %281 = vmatpush1.bf16.msra.mxu0 %v208
  %282 = vmatprep.subr.bf16.mxu0 0
  %283 = vmatpush1.bf16.msra.mxu0 %v207
  %284 = vmatprep.subr.bf16.mxu0 0
  %285 = vmatpush1.bf16.msra.mxu0 %v206
  %286 = vmatprep.subr.bf16.mxu0 0
  %287 = vmatpush1.bf16.msra.mxu0 %v205
  %288 = vmatprep.subr.bf16.mxu0 0
  %289 = vmatpush1.bf16.msra.mxu0 %v204
  %290 = vmatprep.subr.bf16.mxu0 0
  %291 = vmatpush1.bf16.msra.mxu0 %v203
  %292 = vmatprep.subr.bf16.mxu0 0
  %293 = vmatpush2.bf16.msra.mxu0 0
  %294 = vmatprep.subr.bf16.mxu0 0
  %295 = vmatpush2.bf16.msra.mxu0 0
  %296 = vmatprep.subr.bf16.mxu0 0
  %297 = vmatpush2.bf16.msra.mxu0 0
  %298 = vmatprep.subr.bf16.mxu0 0
  %299 = vmatpush2.bf16.msra.mxu0 0
  %300 = vmatprep.subr.bf16.mxu0 0
  %301 = vmatpush2.bf16.msra.mxu0 0
  %302 = vmatprep.subr.bf16.mxu0 0
  %303 = vmatpush2.bf16.msra.mxu0 0
  %304 = vmatprep.subr.bf16.mxu0 0
  %305 = vmatpush2.bf16.msra.mxu0 0
  %306 = vmatprep.subr.bf16.mxu0 0
  %307 = vmatpush2.bf16.msra.mxu0 0
  %308 = vmatprep.mubr.bf16.mxu0 0
  %309 = vmatmul.mubr.bf16.gmra.mxu0 %v87
  %v310 = vpop.f32.mrf.mxu0
  %v311 = vadd.f32 %v270, %v310
  %v312 = vpop.f32.mrf.mxu0
  %v313 = vpop.f32.mrf.mxu0
  %v314 = vadd.f32 %v273, %v313
  %v315 = vpop.f32.mrf.mxu0
  %316 = vdwg.mxu0
  %v317 = vadd.f32 %v73, %v311
  %v318 = vadd.f32 %v74, %v314
  %319 = vst [vmem:[#allocation2] sm:$0xff] %v317
  %320 = vst [vmem:[#allocation2 + $0x8] sm:$0xff] %v318
  // Predicated region
  $region18: #{_lambda_.14} parent=0 // pred_check
    %p321 = pneg %p15
  $region19: #{_lambda_.14} parent=0 // pred_check_branch
    %323 = sbr.rel (%p321) target = $region21
  $region20: #{_lambda_.14} parent=0 // pred_region
    %v324 = vld [vmem:[#allocation2] sm:$0xff]
    %v325 = vld [vmem:[#allocation2 + $0x8] sm:$0xff]
    %v326 = vld [vmem:[%s2] sm:$0x1]
    %v328 = vlaneseq
    %v329 = vshrl.u32 %v328, 7
    %v330 = vsub.s32 0, %v329
    %v331 = vrot.slane %v326, %v330
    %v333 = vadd.f32 %v324, %v331
    %v334 = vadd.f32 %v325, %v331
    %v335 = vmul.f32 %v333, 0.5
    %v336 = vmul.f32 %v334, 0.5
    %v337 = vmul.f32 %v333, 0.044715
    %v338 = vmul.f32 %v334, 0.044715
    %v339 = vmul.f32 %v337, %v333
    %v340 = vmul.f32 %v338, %v334
    %v341 = vmul.f32 %v339, %v333
    %v342 = vmul.f32 %v340, %v334
    %v343 = vadd.f32 %v333, %v341
    %v344 = vadd.f32 %v334, %v342
    %v345 = vmul.f32 %v343, 0.7978846
    %v346 = vmul.f32 %v344, 0.7978846
    %v347 = vtanh.pop %v345
    %v348 = vtanh.pop %v346
    %v349 = vadd.f32 %v347, 1.0
    %v350 = vadd.f32 %v348, 1.0
    %v351 = vmul.f32 %v335, %v349
    %v352 = vmul.f32 %v336, %v350
    %v353 = vpack.c.bf16 %v352, %v351
    %v355 = vunpack.c.l.b16 %v353
    %v356 = vunpack.c.h.b16 %v353
    %v357 = vpack.c.b16 %v355, %v355
    %v358 = vpack.c.b16 %v356, %v356
    %361 = vst [vmem:[%s3] sm:$0xf] %v357
    %362 = vst [vmem:[%s3 + $0x4] sm:$0xf] %v358
  $region21: #{_lambda_.14} parent=0 // pred_fallthru
    _
  // Predicated region
  $region22: #{_lambda_.14} parent=0 // pred_check
    _
  $region23: #{_lambda_.14} parent=0 // pred_check_branch
    %364 = sbr.rel (0) target = $region25
  $region24: #{_lambda_.14} parent=0 // pred_region
    _
  $region25: #{_lambda_.14} parent=0 // pred_fallthru
    _
  // Predicated region
  $region26: #{_lambda_.14} parent=0 // pred_check
    _
  $region27: #{_lambda_.14} parent=0 // pred_check_branch
    %366 = sbr.rel (0) target = $region29
  $region28: #{_lambda_.14} parent=0 // pred_region
    _
  $region29: #{_lambda_.14} parent=0 // pred_fallthru
    _

// kernel: _lambda_.16
$region0: #{_lambda_.16}
  #allocation0 [shape = 'u32[]', space=smem, size = 0x4, offset = 0x4, fixed_abs, tag = 'smem constant byte address 0x4 - core index']
  #allocation1 [shape = 'u32[144,128]{1,0:T(1,128)}', space=vmem, size = 0x12000, scoped, tag = 'internal scratch']
  #allocation2 [shape = 'f32[8,1]{1,0:T(8,128)}', space=vmem, size = 0x1000, scoped, tag = 'scratch operand']
  #allocation3 [shape = 'f32[8,1]{1,0:T(8,128)}', space=vmem, size = 0x1000, scoped, tag = 'scratch operand']
  #allocation4 [shape = 'f32[8,32]{1,0:T(8,128)}', space=vmem, size = 0x1000, scoped, tag = 'scratch operand']
  %s0 = inlined_call_operand.vmem [shape: bf16[8,8,32], index: 0, kind: input, shape index: {}]
  %s1 = inlined_call_operand.vmem [shape: bf16[8,8,32], index: 1, kind: input, shape index: {}]
  %s2 = inlined_call_operand.vmem [shape: bf16[8,8,32], index: 2, kind: input, shape index: {}]
  %s3 = inlined_call_operand.vmem [shape: bf16[8,8,32], index: 3, kind: output, shape index: {}]
  %s4 = sld [smem:[#allocation0]]
  $region53: #{_lambda_.16} parent=0
    _
  %s6 = ssub.s32 1, %s4
  %s7 = scalar_select 0, %s6, %s4
  loop: start=0, step=1, limit=10
  $region2: #{_lambda_.16} parent=0 // loop_pre_header
    _
  $region3: #{_lambda_.16} parent=0 // loop_header
    %s9 = sphi 0, %s13
    %p10 = scmp.ge.s32.totalorder %s9, 10
    %s16 = sphi 0, %s35
    %s17 = sphi 0, %s31
    %s18 = sphi 0, %s27
    %s19 = sphi 0, %s16
    %s20 = sphi 0, %s17
    %s21 = sphi 0, %s18
    %s22 = sphi 0, %s19
    %s23 = sphi 0, %s20
    %s24 = sphi 0, %s21
    %s40 = sphi 0, %s42
    %s43 = sphi 0, %s40
    %s44 = sphi 0, %s43
    %s60 = sphi 0, %s44
    %s68 = sphi 0, %s70
    %s71 = sphi 0, %s68
    %s72 = sphi 0, %s71
    %s88 = sphi 0, %s72
    %s96 = sphi 0, %s98
    %s99 = sphi 0, %s96
    %s100 = sphi 0, %s99
    %s116 = sphi 0, %s100
    %s124 = sphi 0, %s126
    %s127 = sphi 0, %s124
    %s128 = sphi 0, %s127
    %s144 = sphi 0, %s128
  $region4: #{_lambda_.16} parent=0 // loop_header_branch
    %12 = sbr.rel (%p10) target = $region8
  $region5: #{_lambda_.16} parent=0 // loop_body
    %s14 = ssub.s32 %s9, 1
    %s15 = ssub.s32 %s9, 2
    %s25 = sadd.s32 1, %s18
    %p26 = scmp.ge.s32.totalorder %s25, 1
    %s27 = scalar_select %p26, 0, %s25
    %s28 = sadd.s32 1, %s17
    %s29 = scalar_select %p26, %s28, %s17
    %p30 = scmp.ge.s32.totalorder %s29, 1
    %s31 = scalar_select %p30, 0, %s29
    %s32 = sadd.s32 1, %s16
    %s33 = scalar_select %p30, %s32, %s16
    %p34 = scmp.ge.s32.totalorder %s33, 8
    %s35 = scalar_select %p34, 0, %s33
    %s36 = ssub.s32 %s16, %s35
    %s37 = ssub.s32 %s17, %s31
    %s38 = sor.u32 %s36, %s37
    %p39 = scmp.eq.s32.totalorder %s38, 0
    %s41 = sadd.s32 %s40, 1
    %s42 = scalar_select %p39, %s40, %s41
    %p45 = pneg %p39
    %p46 = scmp.eq.s32.totalorder %s9, 7
    %p47 = por %p45, %p46
    %p48 = scmp.ne.s32.totalorder %s40, %s43
    %p49 = scmp.eq.s32.totalorder %s9, 0
    %p50 = por %p48, %p49
    %p51 = scmp.ne.s32.totalorder %s40, %s43
    %p52 = scmp.eq.s32.totalorder %s14, 7
    %p53 = por %p51, %p52
    %p54 = scmp.ne.s32.totalorder %s43, %s44
    %p55 = scmp.eq.s32.totalorder %s14, 0
    %p56 = por %p54, %p55
    %p57 = scmp.ne.s32.totalorder %s43, %s44
    %p58 = scmp.eq.s32.totalorder %s15, 7
    %p59 = por %p57, %p58
    %p61 = scmp.ne.s32.totalorder %s44, %s60
    %p62 = scmp.eq.s32.totalorder %s15, 0
    %p63 = por %p61, %p62
    %s64 = ssub.s32 %s16, %s35
    %s65 = ssub.s32 %s18, %s27
    %s66 = sor.u32 %s64, %s65
    %p67 = scmp.eq.s32.totalorder %s66, 0
    %s69 = sadd.s32 %s68, 1
    %s70 = scalar_select %p67, %s68, %s69
    %p73 = pneg %p67
    %p74 = scmp.eq.s32.totalorder %s9, 7
    %p75 = por %p73, %p74
    %p76 = scmp.ne.s32.totalorder %s68, %s71
    %p77 = scmp.eq.s32.totalorder %s9, 0
    %p78 = por %p76, %p77
    %p79 = scmp.ne.s32.totalorder %s68, %s71
    %p80 = scmp.eq.s32.totalorder %s14, 7
    %p81 = por %p79, %p80
    %p82 = scmp.ne.s32.totalorder %s71, %s72
    %p83 = scmp.eq.s32.totalorder %s14, 0
    %p84 = por %p82, %p83
    %p85 = scmp.ne.s32.totalorder %s71, %s72
    %p86 = scmp.eq.s32.totalorder %s15, 7
    %p87 = por %p85, %p86
    %p89 = scmp.ne.s32.totalorder %s72, %s88
    %p90 = scmp.eq.s32.totalorder %s15, 0
    %p91 = por %p89, %p90
    %s92 = ssub.s32 %s16, %s35
    %s93 = ssub.s32 %s18, %s27
    %s94 = sor.u32 %s92, %s93
    %p95 = scmp.eq.s32.totalorder %s94, 0
    %s97 = sadd.s32 %s96, 1
    %s98 = scalar_select %p95, %s96, %s97
    %p101 = pneg %p95
    %p102 = scmp.eq.s32.totalorder %s9, 7
    %p103 = por %p101, %p102
    %p104 = scmp.ne.s32.totalorder %s96, %s99
    %p105 = scmp.eq.s32.totalorder %s9, 0
    %p106 = por %p104, %p105
    %p107 = scmp.ne.s32.totalorder %s96, %s99
    %p108 = scmp.eq.s32.totalorder %s14, 7
    %p109 = por %p107, %p108
    %p110 = scmp.ne.s32.totalorder %s99, %s100
    %p111 = scmp.eq.s32.totalorder %s14, 0
    %p112 = por %p110, %p111
    %p113 = scmp.ne.s32.totalorder %s99, %s100
    %p114 = scmp.eq.s32.totalorder %s15, 7
    %p115 = por %p113, %p114
    %p117 = scmp.ne.s32.totalorder %s100, %s116
    %p118 = scmp.eq.s32.totalorder %s15, 0
    %p119 = por %p117, %p118
    %s120 = ssub.s32 %s16, %s35
    %s121 = ssub.s32 %s17, %s31
    %s122 = sor.u32 %s120, %s121
    %p123 = scmp.eq.s32.totalorder %s122, 0
    %s125 = sadd.s32 %s124, 1
    %s126 = scalar_select %p123, %s124, %s125
    %p129 = pneg %p123
    %p130 = scmp.eq.s32.totalorder %s9, 7
    %p131 = por %p129, %p130
    %p132 = scmp.ne.s32.totalorder %s124, %s127
    %p133 = scmp.eq.s32.totalorder %s9, 0
    %p134 = por %p132, %p133
    %p135 = scmp.ne.s32.totalorder %s124, %s127
    %p136 = scmp.eq.s32.totalorder %s14, 7
    %p137 = por %p135, %p136
    %p138 = scmp.ne.s32.totalorder %s127, %s128
    %p139 = scmp.eq.s32.totalorder %s14, 0
    %p140 = por %p138, %p139
    %p141 = scmp.ne.s32.totalorder %s127, %s128
    %p142 = scmp.eq.s32.totalorder %s15, 7
    %p143 = por %p141, %p142
    %p145 = scmp.ne.s32.totalorder %s128, %s144
    %p146 = scmp.eq.s32.totalorder %s15, 0
    %p147 = por %p145, %p146
    %p148 = scmp.le.s32.totalorder 1, %s9
    %p149 = scmp.lt.s32.totalorder %s9, 9
    %p150 = pnand %p148, %p149
    %p151 = pneg %p150
    // Predicated region
    $region9: #{_lambda_.16} parent=5 // pred_check
      _
    $region10: #{_lambda_.16} parent=5 // pred_check_branch
      %153 = sbr.rel (%p150) target = $region12
    $region11: #{_lambda_.16} parent=5 // pred_region
      %s154 = ssub.s32 %s9, 1
    $region12: #{_lambda_.16} parent=5 // pred_fallthru
      _
    %p155 = scmp.lt.s32.totalorder %s9, 8
    // Predicated region
    $region13: #{_lambda_.16} parent=5 // pred_check
      %p156 = pneg %p155
    $region14: #{_lambda_.16} parent=5 // pred_check_branch
      %158 = sbr.rel (%p156) target = $region16
    $region15: #{_lambda_.16} parent=5 // pred_region
      // Predicated region
      $region17: #{_lambda_.16} parent=15 // pred_check
        %p159 = pneg %p50
      $region18: #{_lambda_.16} parent=15 // pred_check_branch
        %161 = sbr.rel (%p159) target = $region20
      $region19: #{_lambda_.16} parent=15 // pred_region
        %p162 = scmp.lt.s32.totalorder %s16, 7
        %s163 = scalar_select %p162, %s16, 7
        %p164 = scmp.lt.s32.totalorder %s17, 0
        %s165 = scalar_select %p164, %s17, 0
        %s166 = sadd.s32 %s165, %s163
        %s167 = smul.addr %s166, 4
        %s168 = scalar_lea.vmem %s0, %s167
      $region20: #{_lambda_.16} parent=15 // pred_fallthru
        _
      // Predicated region
      $region21: #{_lambda_.16} parent=15 // pred_check
        %p169 = pneg %p78
      $region22: #{_lambda_.16} parent=15 // pred_check_branch
        %171 = sbr.rel (%p169) target = $region24
      $region23: #{_lambda_.16} parent=15 // pred_region
        %p172 = scmp.lt.s32.totalorder %s16, 7
        %s173 = scalar_select %p172, %s16, 7
        %p174 = scmp.lt.s32.totalorder %s18, 0
        %s175 = scalar_select %p174, %s18, 0
        %s176 = sadd.s32 %s175, %s173
        %s177 = smul.addr %s176, 4
        %s178 = scalar_lea.vmem %s1, %s177
      $region24: #{_lambda_.16} parent=15 // pred_fallthru
        _
      // Predicated region
      $region25: #{_lambda_.16} parent=15 // pred_check
        %p179 = pneg %p106
      $region26: #{_lambda_.16} parent=15 // pred_check_branch
        %181 = sbr.rel (%p179) target = $region28
      $region27: #{_lambda_.16} parent=15 // pred_region
        %p182 = scmp.lt.s32.totalorder %s16, 7
        %s183 = scalar_select %p182, %s16, 7
        %p184 = scmp.lt.s32.totalorder %s18, 0
        %s185 = scalar_select %p184, %s18, 0
        %s186 = sadd.s32 %s185, %s183
        %s187 = smul.addr %s186, 4
        %s188 = scalar_lea.vmem %s2, %s187
      $region28: #{_lambda_.16} parent=15 // pred_fallthru
        _
    $region16: #{_lambda_.16} parent=5 // pred_fallthru
      _
    %p189 = scmp.le.s32.totalorder 1, %s9
    %p190 = scmp.lt.s32.totalorder %s9, 9
    %p191 = pnand %p189, %p190
    %p192 = pneg %p191
    // Predicated region
    $region29: #{_lambda_.16} parent=5 // pred_check
      _
    $region30: #{_lambda_.16} parent=5 // pred_check_branch
      %194 = sbr.rel (%p191) target = $region32
    $region31: #{_lambda_.16} parent=5 // pred_region
      %s195 = ssub.s32 %s9, 1
      %p196 = scmp.lt.s32.totalorder %s19, 7
      %s197 = scalar_select %p196, %s19, 7
      %p198 = scmp.lt.s32.totalorder %s20, 0
      %s199 = scalar_select %p198, %s20, 0
      %s200 = sadd.s32 %s199, %s197
      %s201 = smul.addr %s200, 4
      %s202 = scalar_lea.vmem %s0, %s201
      %p203 = pneg %p56
      %p204 = pneg %p53
      %p205 = scmp.lt.s32.totalorder %s19, 7
      %s206 = scalar_select %p205, %s19, 7
      %p207 = scmp.lt.s32.totalorder %s21, 0
      %s208 = scalar_select %p207, %s21, 0
      %s209 = sadd.s32 %s208, %s206
      %s210 = smul.addr %s209, 4
      %s211 = scalar_lea.vmem %s1, %s210
      %p212 = pneg %p84
      %p213 = pneg %p81
      %p214 = scmp.lt.s32.totalorder %s19, 7
      %s215 = scalar_select %p214, %s19, 7
      %p216 = scmp.lt.s32.totalorder %s21, 0
      %s217 = scalar_select %p216, %s21, 0
      %s218 = sadd.s32 %s217, %s215
      %s219 = smul.addr %s218, 4
      %s220 = scalar_lea.vmem %s2, %s219
      %p221 = pneg %p112
      %p222 = pneg %p109
      %p223 = pneg %p140
      %p224 = pneg %p137
      %p225 = scmp.lt.s32.totalorder %s19, 7
      %s226 = scalar_select %p225, %s19, 7
      %p227 = scmp.lt.s32.totalorder %s20, 0
      %s228 = scalar_select %p227, %s20, 0
      %s229 = sadd.s32 %s228, %s226
      %s230 = smul.addr %s229, 4
      %s231 = scalar_lea.vmem %s3, %s230
      %p232 = scmp.lt.s32.totalorder %s19, 7
      %s233 = scalar_select %p232, %s19, 7
      %p234 = scmp.lt.s32.totalorder %s20, 0
      %s235 = scalar_select %p234, %s20, 0
      %s236 = sadd.s32 %s235, %s233
      %s237 = smul.addr %s236, 4
      %s238 = scalar_lea.vmem %s0, %s237
      %p239 = scmp.lt.s32.totalorder %s19, 7
      %s240 = scalar_select %p239, %s19, 7
      %p241 = scmp.lt.s32.totalorder %s21, 0
      %s242 = scalar_select %p241, %s21, 0
      %s243 = sadd.s32 %s242, %s240
      %s244 = smul.addr %s243, 4
      %s245 = scalar_lea.vmem %s1, %s244
      %p246 = scmp.lt.s32.totalorder %s19, 7
      %s247 = scalar_select %p246, %s19, 7
      %p248 = scmp.lt.s32.totalorder %s21, 0
      %s249 = scalar_select %p248, %s21, 0
      %s250 = sadd.s32 %s249, %s247
      %s251 = smul.addr %s250, 4
      %s252 = scalar_lea.vmem %s2, %s251
      %p253 = scmp.lt.s32.totalorder %s19, 7
      %s254 = scalar_select %p253, %s19, 7
      %p255 = scmp.lt.s32.totalorder %s20, 0
      %s256 = scalar_select %p255, %s20, 0
      %s257 = sadd.s32 %s256, %s254
      %s258 = smul.addr %s257, 4
      %s259 = scalar_lea.vmem %s3, %s258
      %p261 = scmp.eq.s32.totalorder %s21, 0
      // Predicated region
      $region33: #{_lambda_.16} parent=31 // pred_check
        %p262 = pneg %p261
      $region34: #{_lambda_.16} parent=31 // pred_check_branch
        %264 = sbr.rel (%p262) target = $region36
      $region35: #{_lambda_.16} parent=31 // pred_region
        %vm265 = vcmask 7168
        %266 = vst.msk [vmem:[#allocation2] sm:$0xff] %vm265, -inf
        %267 = vst.msk [vmem:[#allocation3] sm:$0xff] %vm265, 0.0
        %vm268 = vcmask 261120
        %269 = vst.msk [vmem:[#allocation4] sm:$0xff] %vm268, 0.0
      $region36: #{_lambda_.16} parent=31 // pred_fallthru
        _
      %v270 = vld [vmem:[%s238] sm:$0xf]
      %v271 = vunpack.c.l.bf16 %v270
      %v272 = vmul.f32 %v271, 0.17677669
      %v273 = vpack.c.bf16 %v272, %v272
      %v274 = vld [vmem:[%s245] sm:$0xf]
      %vm275 = vcmask 261120
      %v277 = vsel %vm275, %v273, 0
      %v280 = vsel %vm275, %v274, 0
      %282 = vmatprep.subr.bf16.mxu0 0
      %283 = vmatpush1.bf16.xpose.msra.mxu0 0
      %284 = vmatprep.subr.bf16.mxu0 0
      %285 = vmatpush1.bf16.xpose.msra.mxu0 0
      %286 = vmatprep.subr.bf16.mxu0 0
      %287 = vmatpush1.bf16.xpose.msra.mxu0 0
      %288 = vmatprep.subr.bf16.mxu0 0
      %289 = vmatpush1.bf16.xpose.msra.mxu0 0
      %290 = vmatprep.subr.bf16.mxu0 0
      %291 = vmatpush1.bf16.xpose.msra.mxu0 0
      %292 = vmatprep.subr.bf16.mxu0 0
      %293 = vmatpush1.bf16.xpose.msra.mxu0 0
      %294 = vmatprep.subr.bf16.mxu0 0
      %295 = vmatpush1.bf16.xpose.msra.mxu0 0
      %296 = vmatprep.subr.bf16.mxu0 0
      %297 = vmatpush1.bf16.xpose.msra.mxu0 %v280
      %298 = vmatprep.subr.bf16.mxu0 0
      %299 = vmatpush2.bf16.xpose.msra.mxu0 0
      %300 = vmatprep.subr.bf16.mxu0 0
      %301 = vmatpush2.bf16.xpose.msra.mxu0 0
      %302 = vmatprep.subr.bf16.mxu0 0
      %303 = vmatpush2.bf16.xpose.msra.mxu0 0
      %304 = vmatprep.subr.bf16.mxu0 0
      %305 = vmatpush2.bf16.xpose.msra.mxu0 0
      %306 = vmatprep.subr.bf16.mxu0 0
      %307 = vmatpush2.bf16.xpose.msra.mxu0 0
      %308 = vmatprep.subr.bf16.mxu0 0
      %309 = vmatpush2.bf16.xpose.msra.mxu0 0
      %310 = vmatprep.subr.bf16.mxu0 0
      %311 = vmatpush2.bf16.xpose.msra.mxu0 0
      %312 = vmatprep.subr.bf16.mxu0 0
      %313 = vmatpush2.bf16.xpose.msra.mxu0 0
      %314 = vmatprep.mubr.bf16.mxu0 0
      %315 = vmatmul.mubr.bf16.gmra.mxu0 %v277
      %v316 = vpop.f32.mrf.mxu0
      %v317 = vadd.f32 0.0, %v316
      %v318 = vpop.f32.mrf.mxu0
      %v319 = vpop.f32.mrf.mxu0
      %v320 = vpop.f32.mrf.mxu0
      %321 = vdwg.mxu0
      %v322 = vld [vmem:[#allocation2] sm:$0xff]
      %vm323 = vcmask 64512
      %v324 = vsel %vm323, %v317, -inf
      %325 = vmax.xlane.f32.xlu0 %v324
      %v326 = vpop.xlane.xlu0 %325
      %v327 = vmax.f32 %v322, %v326
      %v328 = vsub.f32 %v322, %v327
      %v329 = vmul.f32 %v328, 1.442695
      %v330 = vpow.pop %v329
      %332 = vset.pattern.permute.xlu0 0
      %333 = vperm.xlu0 %332, %v327
      %v334 = vpop.permute.xlu0 %333
      %v336 = vsub.f32 %v317, %v334
      %v337 = vmul.f32 %v336, 1.442695
      %v338 = vpow.pop %v337
      %v339 = vld [vmem:[#allocation3] sm:$0xff]
      %v340 = vmul.f32 %v330, %v339
      %v341 = vsel %vm323, %v338, 0.0
      %342 = vadd.xlane.f32.xlu0 %v341
      %v343 = vpop.xlane.xlu0 %342
      %v344 = vadd.f32 %v340, %v343
      %vm345 = vcmask 7168
      %346 = vst.msk [vmem:[#allocation3] sm:$0xff] %vm345, %v344
      %v347 = vld [vmem:[#allocation4] sm:$0xff]
      %349 = vset.pattern.permute.xlu0 0
      %350 = vperm.xlu0 %349, %v330
      %v351 = vpop.permute.xlu0 %350
      %v353 = vmul.f32 %v351, %v347
      %v354 = vpack.c.bf16 %v338, %v338
      %v355 = vld [vmem:[%s252] sm:$0xf]
      %v357 = vsel %vm323, %v354, 0
      %vm359 = vcmask 1043456
      %v361 = vsel %vm359, %v355, 0
      %363 = vmatprep.subr.bf16.mxu0 0
      %364 = vmatpush1.bf16.msra.mxu0 0
      %365 = vmatprep.subr.bf16.mxu0 0
      %366 = vmatpush1.bf16.msra.mxu0 0
      %367 = vmatprep.subr.bf16.mxu0 0
      %368 = vmatpush1.bf16.msra.mxu0 0
      %369 = vmatprep.subr.bf16.mxu0 0
      %370 = vmatpush1.bf16.msra.mxu0 0
      %371 = vmatprep.subr.bf16.mxu0 0
      %372 = vmatpush1.bf16.msra.mxu0 0
      %373 = vmatprep.subr.bf16.mxu0 0
      %374 = vmatpush1.bf16.msra.mxu0 0
      %375 = vmatprep.subr.bf16.mxu0 0
      %376 = vmatpush1.bf16.msra.mxu0 0
      %377 = vmatprep.subr.bf16.mxu0 0
      %378 = vmatpush1.bf16.msra.mxu0 %v361
      %379 = vmatprep.subr.bf16.mxu0 0
      %380 = vmatpush2.bf16.msra.mxu0 0
      %381 = vmatprep.subr.bf16.mxu0 0
      %382 = vmatpush2.bf16.msra.mxu0 0
      %383 = vmatprep.subr.bf16.mxu0 0
      %384 = vmatpush2.bf16.msra.mxu0 0
      %385 = vmatprep.subr.bf16.mxu0 0
      %386 = vmatpush2.bf16.msra.mxu0 0
      %387 = vmatprep.subr.bf16.mxu0 0
      %388 = vmatpush2.bf16.msra.mxu0 0
      %389 = vmatprep.subr.bf16.mxu0 0
      %390 = vmatpush2.bf16.msra.mxu0 0
      %391 = vmatprep.subr.bf16.mxu0 0
      %392 = vmatpush2.bf16.msra.mxu0 0
      %393 = vmatprep.subr.bf16.mxu0 0
      %394 = vmatpush2.bf16.msra.mxu0 0
      %395 = vmatprep.mubr.bf16.mxu0 0
      %396 = vmatmul.mubr.bf16.gmra.mxu0 %v357
      %v397 = vpop.f32.mrf.mxu0
      %v398 = vadd.f32 0.0, %v397
      %v399 = vpop.f32.mrf.mxu0
      %v400 = vpop.f32.mrf.mxu0
      %v401 = vpop.f32.mrf.mxu0
      %402 = vdwg.mxu0
      %v403 = vadd.f32 %v353, %v398
      %404 = vst.msk [vmem:[#allocation4] sm:$0xff] %vm275, %v403
      %405 = vst.msk [vmem:[#allocation2] sm:$0xff] %vm345, %v327
      // Predicated region
      $region37: #{_lambda_.16} parent=31 // pred_check
        %p406 = pneg %p261
      $region38: #{_lambda_.16} parent=31 // pred_check_branch
        %408 = sbr.rel (%p406) target = $region40
      $region39: #{_lambda_.16} parent=31 // pred_region
        %v409 = vld [vmem:[#allocation4] sm:$0xff]
        %v410 = vld [vmem:[#allocation3] sm:$0xff]
        %v411 = vrcp.pop %v410
        %413 = vset.pattern.permute.xlu0 0
        %414 = vperm.xlu0 %413, %v411
        %v415 = vpop.permute.xlu0 %414
        %v417 = vmul.f32 %v409, %v415
        %v418 = vpack.c.bf16 %v417, %v417
        %vm419 = vcmask 257024
        %420 = vst.msk [vmem:[%s259] sm:$0xf] %vm419, %v418
      $region40: #{_lambda_.16} parent=31 // pred_fallthru
        _
      %p421 = scmp.lt.s32.totalorder %s19, 7
      %s422 = scalar_select %p421, %s19, 7
      %p423 = scmp.lt.s32.totalorder %s20, 0
      %s424 = scalar_select %p423, %s20, 0
      %s425 = sadd.s32 %s424, %s422
      %s426 = smul.addr %s425, 4
      %s427 = scalar_lea.vmem %s3, %s426
      // Predicated region
      $region41: #{_lambda_.16} parent=31 // pred_check
        %p428 = pneg %p137
      $region42: #{_lambda_.16} parent=31 // pred_check_branch
        %430 = sbr.rel (%p428) target = $region44
      $region43: #{_lambda_.16} parent=31 // pred_region
        _
      $region44: #{_lambda_.16} parent=31 // pred_fallthru
        _
    $region32: #{_lambda_.16} parent=5 // pred_fallthru
      _
    %p431 = scmp.le.s32.totalorder 2, %s9
    // Predicated region
    $region45: #{_lambda_.16} parent=5 // pred_check
      %p432 = pneg %p431
    $region46: #{_lambda_.16} parent=5 // pred_check_branch
      %434 = sbr.rel (%p432) target = $region48
    $region47: #{_lambda_.16} parent=5 // pred_region
      %s435 = ssub.s32 %s9, 2
      // Predicated region
      $region49: #{_lambda_.16} parent=47 // pred_check
        %p436 = pneg %p143
      $region50: #{_lambda_.16} parent=47 // pred_check_branch
        %438 = sbr.rel (%p436) target = $region52
      $region51: #{_lambda_.16} parent=47 // pred_region
        %p439 = scmp.lt.s32.totalorder %s22, 7
        %s440 = scalar_select %p439, %s22, 7
        %p441 = scmp.lt.s32.totalorder %s23, 0
        %s442 = scalar_select %p441, %s23, 0
        %s443 = sadd.s32 %s442, %s440
        %s444 = smul.addr %s443, 4
        %s445 = scalar_lea.vmem %s3, %s444
      $region52: #{_lambda_.16} parent=47 // pred_fallthru
        _
    $region48: #{_lambda_.16} parent=5 // pred_fallthru
      _
  $region6: #{_lambda_.16} parent=0 // loop_footer
    %s13 = sadd.s32 1, %s9
  $region7: #{_lambda_.16} parent=0 // loop_footer_branch
    %8 = sbr.rel target = $region3
  $region8: #{_lambda_.16} parent=0 // loop_exit
    _

// kernel: _lambda_.15
$region0: #{_lambda_.15}
  #allocation0 [shape = 'u32[]', space=smem, size = 0x4, offset = 0x4, fixed_abs, tag = 'smem constant byte address 0x4 - core index']
  #allocation1 [shape = 'u32[144,128]{1,0:T(1,128)}', space=vmem, size = 0x12000, scoped, tag = 'internal scratch']
  #allocation2 [shape = 'f32[16,384]{1,0:T(8,128)}', space=vmem, size = 0x6000, scoped, tag = 'scratch operand']
  %s0 = inlined_call_operand.vmem [shape: bf16[16,128], index: 0, kind: input, shape index: {}]
  %s1 = inlined_call_operand.vmem [shape: bf16[128,384], index: 1, kind: input, shape index: {}]
  %s2 = inlined_call_operand.vmem [shape: f32[1,384], index: 2, kind: input, shape index: {}]
  %s3 = inlined_call_operand.vmem [shape: f32[1,128], index: 3, kind: input, shape index: {}]
  %s4 = inlined_call_operand.vmem [shape: f32[1,128], index: 4, kind: input, shape index: {}]
  %s5 = inlined_call_operand.vmem [shape: bf16[16,384], index: 5, kind: output, shape index: {}]
  %s6 = sld [smem:[#allocation0]]
  $region38: #{_lambda_.15} parent=0
    _
  %s8 = ssub.s32 1, %s6
  %s9 = scalar_select 0, %s8, %s6
  // Predicated region
  $region2: #{_lambda_.15} parent=0 // pred_check
    _
  $region3: #{_lambda_.15} parent=0 // pred_check_branch
    %11 = sbr.rel (0) target = $region5
  $region4: #{_lambda_.15} parent=0 // pred_region
    _
  $region5: #{_lambda_.15} parent=0 // pred_fallthru
    _
  // Predicated region
  $region6: #{_lambda_.15} parent=0 // pred_check
    _
  $region7: #{_lambda_.15} parent=0 // pred_check_branch
    %13 = sbr.rel (0) target = $region9
  $region8: #{_lambda_.15} parent=0 // pred_region
    _
  $region9: #{_lambda_.15} parent=0 // pred_fallthru
    _
  // Predicated region
  $region10: #{_lambda_.15} parent=0 // pred_check
    _
  $region11: #{_lambda_.15} parent=0 // pred_check_branch
    %15 = sbr.rel (0) target = $region13
  $region12: #{_lambda_.15} parent=0 // pred_region
    _
  $region13: #{_lambda_.15} parent=0 // pred_fallthru
    _
  // Predicated region
  $region14: #{_lambda_.15} parent=0 // pred_check
    _
  $region15: #{_lambda_.15} parent=0 // pred_check_branch
    %17 = sbr.rel (0) target = $region17
  $region16: #{_lambda_.15} parent=0 // pred_region
    _
  $region17: #{_lambda_.15} parent=0 // pred_fallthru
    _
  // Predicated region
  $region18: #{_lambda_.15} parent=0 // pred_check
    _
  $region19: #{_lambda_.15} parent=0 // pred_check_branch
    %19 = sbr.rel (0) target = $region21
  $region20: #{_lambda_.15} parent=0 // pred_region
    _
  $region21: #{_lambda_.15} parent=0 // pred_fallthru
    _
  %p21 = scmp.eq.s32.totalorder 0, 0
  // Predicated region
  $region22: #{_lambda_.15} parent=0 // pred_check
    %p22 = pneg %p21
  $region23: #{_lambda_.15} parent=0 // pred_check_branch
    %24 = sbr.rel (%p22) target = $region25
  $region24: #{_lambda_.15} parent=0 // pred_region
    %25 = vst [vmem:[#allocation2] sm:$0xff] 0.0
    %26 = vst [vmem:[#allocation2 + $0x8] sm:$0xff] 0.0
    %27 = vst [vmem:[#allocation2 + $0x10] sm:$0xff] 0.0
    %28 = vst [vmem:[#allocation2 + $0x18] sm:$0xff] 0.0
    %29 = vst [vmem:[#allocation2 + $0x20] sm:$0xff] 0.0
    %30 = vst [vmem:[#allocation2 + $0x28] sm:$0xff] 0.0
  $region25: #{_lambda_.15} parent=0 // pred_fallthru
    _
  %v31 = vld [vmem:[%s0] sm:$0xf]
  %v32 = vld [vmem:[%s0 + $0x4] sm:$0xf]
  %v33 = vunpack.c.l.bf16 %v31
  %v34 = vunpack.c.l.bf16 %v32
  %35 = vadd.xlane.f32.xlu0 %v33
  %v36 = vpop.xlane.xlu0 %35
  %37 = vadd.xlane.f32.xlu0 %v34
  %v38 = vpop.xlane.xlu0 %37
  %v39 = vrcp.pop 128.0
  %v40 = vmul.f32 %v36, %v39
  %v41 = vmul.f32 %v38, %v39
  %v42 = vsub.f32 %v33, %v40
  %v43 = vsub.f32 %v34, %v41
  %v44 = vmul.f32 %v42, %v42
  %v45 = vmul.f32 %v43, %v43
  %46 = vadd.xlane.f32.xlu0 %v44
  %v47 = vpop.xlane.xlu0 %46
  %48 = vadd.xlane.f32.xlu0 %v45
  %v49 = vpop.xlane.xlu0 %48
  %v50 = vmul.f32 %v47, %v39
  %v51 = vmul.f32 %v49, %v39
  %v52 = vadd.f32 %v50, 1e-05
  %v53 = vadd.f32 %v51, 1e-05
  %v54 = vrsqrt.pop %v52
  %v55 = vrsqrt.pop %v53
  %v56 = vmul.f32 %v42, %v54
  %v57 = vmul.f32 %v43, %v55
  %v58 = vld [vmem:[%s3] sm:$0x1]
  %v60 = vlaneseq
  %v61 = vshrl.u32 %v60, 7
  %v62 = vsub.s32 0, %v61
  %v63 = vrot.slane %v58, %v62
  %v65 = vmul.f32 %v56, %v63
  %v66 = vmul.f32 %v57, %v63
  %v67 = vld [vmem:[%s4] sm:$0x1]
  %v69 = vlaneseq
  %v70 = vshrl.u32 %v69, 7
  %v71 = vsub.s32 0, %v70
  %v72 = vrot.slane %v67, %v71
  %v74 = vadd.f32 %v65, %v72
  %v75 = vadd.f32 %v66, %v72
  %v76 = vpack.c.bf16 %v75, %v74
  %v77 = vld [vmem:[%s1] sm:$0xff]
  %v78 = vld [vmem:[%s1 + $0x8] sm:$0xf]
  %v79 = vld [vmem:[%s1 + $0xc] sm:$0xff]
  %v80 = vld [vmem:[%s1 + $0x14] sm:$0xf]
  %v81 = vld [vmem:[%s1 + $0x18] sm:$0xff]
  %v82 = vld [vmem:[%s1 + $0x20] sm:$0xf]
  %v83 = vld [vmem:[%s1 + $0x24] sm:$0xff]
  %v84 = vld [vmem:[%s1 + $0x2c] sm:$0xf]
  %v85 = vld [vmem:[%s1 + $0x30] sm:$0xff]
  %v86 = vld [vmem:[%s1 + $0x38] sm:$0xf]
  %v87 = vld [vmem:[%s1 + $0x3c] sm:$0xff]
  %v88 = vld [vmem:[%s1 + $0x44] sm:$0xf]
  %v89 = vld [vmem:[%s1 + $0x48] sm:$0xff]
  %v90 = vld [vmem:[%s1 + $0x50] sm:$0xf]
  %v91 = vld [vmem:[%s1 + $0x54] sm:$0xff]
  %v92 = vld [vmem:[%s1 + $0x5c] sm:$0xf]
  %v93 = vld [vmem:[%s1 + $0x60] sm:$0xff]
  %v94 = vld [vmem:[%s1 + $0x68] sm:$0xf]
  %v95 = vld [vmem:[%s1 + $0x6c] sm:$0xff]
  %v96 = vld [vmem:[%s1 + $0x74] sm:$0xf]
  %v97 = vld [vmem:[%s1 + $0x78] sm:$0xff]
  %v98 = vld [vmem:[%s1 + $0x80] sm:$0xf]
  %v99 = vld [vmem:[%s1 + $0x84] sm:$0xff]
  %v100 = vld [vmem:[%s1 + $0x8c] sm:$0xf]
  %v101 = vld [vmem:[%s1 + $0x90] sm:$0xff]
  %v102 = vld [vmem:[%s1 + $0x98] sm:$0xf]
  %v103 = vld [vmem:[%s1 + $0x9c] sm:$0xff]
  %v104 = vld [vmem:[%s1 + $0xa4] sm:$0xf]
  %v105 = vld [vmem:[%s1 + $0xa8] sm:$0xff]
  %v106 = vld [vmem:[%s1 + $0xb0] sm:$0xf]
  %v107 = vld [vmem:[%s1 + $0xb4] sm:$0xff]
  %v108 = vld [vmem:[%s1 + $0xbc] sm:$0xf]
  %v109 = vld [vmem:[#allocation2] sm:$0xff]
  %v110 = vld [vmem:[#allocation2 + $0x8] sm:$0xff]
  %v111 = vld [vmem:[#allocation2 + $0x10] sm:$0xff]
  %v112 = vld [vmem:[#allocation2 + $0x18] sm:$0xff]
  %v113 = vld [vmem:[#allocation2 + $0x20] sm:$0xff]
  %v114 = vld [vmem:[#allocation2 + $0x28] sm:$0xff]
  %v147 = vunpack.c.l.b16 %v77
  %v148 = vunpack.c.h.b16 %v77
  %v149 = vunpack.c.l.b16 %v78
  %v150 = vunpack.c.l.b16 %v79
  %v151 = vunpack.c.h.b16 %v79
  %v152 = vunpack.c.l.b16 %v80
  %v153 = vunpack.c.l.b16 %v81
  %v154 = vunpack.c.h.b16 %v81
  %v155 = vunpack.c.l.b16 %v82
  %v156 = vunpack.c.l.b16 %v83
  %v157 = vunpack.c.h.b16 %v83
  %v158 = vunpack.c.l.b16 %v84
  %v159 = vunpack.c.l.b16 %v85
  %v160 = vunpack.c.h.b16 %v85
  %v161 = vunpack.c.l.b16 %v86
  %v162 = vunpack.c.l.b16 %v87
  %v163 = vunpack.c.h.b16 %v87
  %v164 = vunpack.c.l.b16 %v88
  %v165 = vunpack.c.l.b16 %v89
  %v166 = vunpack.c.h.b16 %v89
  %v167 = vunpack.c.l.b16 %v90
  %v168 = vunpack.c.l.b16 %v91
  %v169 = vunpack.c.h.b16 %v91
  %v170 = vunpack.c.l.b16 %v92
  %v171 = vunpack.c.l.b16 %v93
  %v172 = vunpack.c.h.b16 %v93
  %v173 = vunpack.c.l.b16 %v94
  %v174 = vunpack.c.l.b16 %v95
  %v175 = vunpack.c.h.b16 %v95
  %v176 = vunpack.c.l.b16 %v96
  %v177 = vunpack.c.l.b16 %v97
  %v178 = vunpack.c.h.b16 %v97
  %v179 = vunpack.c.l.b16 %v98
  %v180 = vunpack.c.l.b16 %v99
  %v181 = vunpack.c.h.b16 %v99
  %v182 = vunpack.c.l.b16 %v100
  %v183 = vunpack.c.l.b16 %v101
  %v184 = vunpack.c.h.b16 %v101
  %v185 = vunpack.c.l.b16 %v102
  %v186 = vunpack.c.l.b16 %v103
  %v187 = vunpack.c.h.b16 %v103
  %v188 = vunpack.c.l.b16 %v104
  %v189 = vunpack.c.l.b16 %v105
  %v190 = vunpack.c.h.b16 %v105
  %v191 = vunpack.c.l.b16 %v106
  %v192 = vunpack.c.l.b16 %v107
  %v193 = vunpack.c.h.b16 %v107
  %v194 = vunpack.c.l.b16 %v108
  %v195 = vpack.c.b16 %v150, %v147
  %v196 = vpack.c.b16 %v151, %v148
  %v197 = vpack.c.b16 %v152, %v149
  %v198 = vpack.c.b16 %v156, %v153
  %v199 = vpack.c.b16 %v157, %v154
  %v200 = vpack.c.b16 %v158, %v155
  %v201 = vpack.c.b16 %v162, %v159
  %v202 = vpack.c.b16 %v163, %v160
  %v203 = vpack.c.b16 %v164, %v161
  %v204 = vpack.c.b16 %v168, %v165
  %v205 = vpack.c.b16 %v169, %v166
  %v206 = vpack.c.b16 %v170, %v167
  %v207 = vpack.c.b16 %v174, %v171
  %v208 = vpack.c.b16 %v175, %v172
  %v209 = vpack.c.b16 %v176, %v173
  %v210 = vpack.c.b16 %v180, %v177
  %v211 = vpack.c.b16 %v181, %v178
  %v212 = vpack.c.b16 %v182, %v179
  %v213 = vpack.c.b16 %v186, %v183
  %v214 = vpack.c.b16 %v187, %v184
  %v215 = vpack.c.b16 %v188, %v185
  %v216 = vpack.c.b16 %v192, %v189
  %v217 = vpack.c.b16 %v193, %v190
  %v218 = vpack.c.b16 %v194, %v191
  %243 = vmatprep.subr.bf16.mxu0 %v217
  %244 = vmatpush1.bf16.msra.mxu0 %v216
  %245 = vmatprep.subr.bf16.mxu0 %v214
  %246 = vmatpush1.bf16.msra.mxu0 %v213
  %247 = vmatprep.subr.bf16.mxu0 %v211
  %248 = vmatpush1.bf16.msra.mxu0 %v210
  %249 = vmatprep.subr.bf16.mxu0 %v208
  %250 = vmatpush1.bf16.msra.mxu0 %v207
  %251 = vmatprep.subr.bf16.mxu0 %v205
  %252 = vmatpush1.bf16.msra.mxu0 %v204
  %253 = vmatprep.subr.bf16.mxu0 %v202
  %254 = vmatpush1.bf16.msra.mxu0 %v201
  %255 = vmatprep.subr.bf16.mxu0 %v199
  %256 = vmatpush1.bf16.msra.mxu0 %v198
  %257 = vmatprep.subr.bf16.mxu0 %v196
  %258 = vmatpush1.bf16.msra.mxu0 %v195
  %259 = vmatprep.subr.bf16.mxu0 0
  %260 = vmatpush2.bf16.msra.mxu0 0
  %261 = vmatprep.subr.bf16.mxu0 0
  %262 = vmatpush2.bf16.msra.mxu0 0
  %263 = vmatprep.subr.bf16.mxu0 0
  %264 = vmatpush2.bf16.msra.mxu0 0
  %265 = vmatprep.subr.bf16.mxu0 0
  %266 = vmatpush2.bf16.msra.mxu0 0
  %267 = vmatprep.subr.bf16.mxu0 0
  %268 = vmatpush2.bf16.msra.mxu0 0
  %269 = vmatprep.subr.bf16.mxu0 0
  %270 = vmatpush2.bf16.msra.mxu0 0
  %271 = vmatprep.subr.bf16.mxu0 0
  %272 = vmatpush2.bf16.msra.mxu0 0
  %273 = vmatprep.subr.bf16.mxu0 0
  %274 = vmatpush2.bf16.msra.mxu0 0
  %275 = vmatprep.mubr.bf16.mxu0 0
  %276 = vmatmul.mubr.bf16.gmra.mxu0 %v76
  %v277 = vpop.f32.mrf.mxu0
  %v278 = vadd.f32 0.0, %v277
  %v279 = vpop.f32.mrf.mxu0
  %v280 = vadd.f32 0.0, %v279
  %v281 = vpop.f32.mrf.mxu0
  %v282 = vadd.f32 0.0, %v281
  %v283 = vpop.f32.mrf.mxu0
  %v284 = vadd.f32 0.0, %v283
  %285 = vdwg.mxu0
  %286 = vmatprep.subr.bf16.mxu0 0
  %287 = vmatpush1.bf16.msra.mxu0 %v218
  %288 = vmatprep.subr.bf16.mxu0 0
  %289 = vmatpush1.bf16.msra.mxu0 %v215
  %290 = vmatprep.subr.bf16.mxu0 0
  %291 = vmatpush1.bf16.msra.mxu0 %v212
  %292 = vmatprep.subr.bf16.mxu0 0
  %293 = vmatpush1.bf16.msra.mxu0 %v209
  %294 = vmatprep.subr.bf16.mxu0 0
  %295 = vmatpush1.bf16.msra.mxu0 %v206
  %296 = vmatprep.subr.bf16.mxu0 0
  %297 = vmatpush1.bf16.msra.mxu0 %v203
  %298 = vmatprep.subr.bf16.mxu0 0
  %299 = vmatpush1.bf16.msra.mxu0 %v200
  %300 = vmatprep.subr.bf16.mxu0 0
  %301 = vmatpush1.bf16.msra.mxu0 %v197
  %302 = vmatprep.subr.bf16.mxu0 0
  %303 = vmatpush2.bf16.msra.mxu0 0
  %304 = vmatprep.subr.bf16.mxu0 0
  %305 = vmatpush2.bf16.msra.mxu0 0
  %306 = vmatprep.subr.bf16.mxu0 0
  %307 = vmatpush2.bf16.msra.mxu0 0
  %308 = vmatprep.subr.bf16.mxu0 0
  %309 = vmatpush2.bf16.msra.mxu0 0
  %310 = vmatprep.subr.bf16.mxu0 0
  %311 = vmatpush2.bf16.msra.mxu0 0
  %312 = vmatprep.subr.bf16.mxu0 0
  %313 = vmatpush2.bf16.msra.mxu0 0
  %314 = vmatprep.subr.bf16.mxu0 0
  %315 = vmatpush2.bf16.msra.mxu0 0
  %316 = vmatprep.subr.bf16.mxu0 0
  %317 = vmatpush2.bf16.msra.mxu0 0
  %318 = vmatprep.mubr.bf16.mxu0 0
  %319 = vmatmul.mubr.bf16.gmra.mxu0 %v76
  %v320 = vpop.f32.mrf.mxu0
  %v321 = vadd.f32 0.0, %v320
  %v322 = vpop.f32.mrf.mxu0
  %v323 = vpop.f32.mrf.mxu0
  %v324 = vadd.f32 0.0, %v323
  %v325 = vpop.f32.mrf.mxu0
  %326 = vdwg.mxu0
  %v327 = vadd.f32 %v109, %v278
  %v328 = vadd.f32 %v110, %v280
  %v329 = vadd.f32 %v111, %v321
  %v330 = vadd.f32 %v112, %v282
  %v331 = vadd.f32 %v113, %v284
  %v332 = vadd.f32 %v114, %v324
  %333 = vst [vmem:[#allocation2] sm:$0xff] %v327
  %334 = vst [vmem:[#allocation2 + $0x8] sm:$0xff] %v328
  %335 = vst [vmem:[#allocation2 + $0x10] sm:$0xff] %v329
  %336 = vst [vmem:[#allocation2 + $0x18] sm:$0xff] %v330
  %337 = vst [vmem:[#allocation2 + $0x20] sm:$0xff] %v331
  %338 = vst [vmem:[#allocation2 + $0x28] sm:$0xff] %v332
  // Predicated region
  $region26: #{_lambda_.15} parent=0 // pred_check
    %p339 = pneg %p21
  $region27: #{_lambda_.15} parent=0 // pred_check_branch
    %341 = sbr.rel (%p339) target = $region29
  $region28: #{_lambda_.15} parent=0 // pred_region
    %v342 = vld [vmem:[#allocation2] sm:$0xff]
    %v343 = vld [vmem:[#allocation2 + $0x8] sm:$0xff]
    %v344 = vld [vmem:[#allocation2 + $0x10] sm:$0xff]
    %v345 = vld [vmem:[#allocation2 + $0x18] sm:$0xff]
    %v346 = vld [vmem:[#allocation2 + $0x20] sm:$0xff]
    %v347 = vld [vmem:[#allocation2 + $0x28] sm:$0xff]
    %v348 = vld [vmem:[%s2] sm:$0x7]
    %v350 = vlaneseq
    %v351 = vshrl.u32 %v350, 7
    %v352 = vsub.s32 0, %v351
    %v353 = vrot.slane %v348, %v352
    %v354 = vlaneseq
    %v355 = vshrl.u32 %v354, 7
    %v356 = vsub.s32 1, %v355
    %v357 = vrot.slane %v348, %v356
    %v358 = vlaneseq
    %v359 = vshrl.u32 %v358, 7
    %v360 = vsub.s32 2, %v359
    %v361 = vrot.slane %v348, %v360
    %v365 = vadd.f32 %v342, %v353
    %v366 = vadd.f32 %v343, %v357
    %v367 = vadd.f32 %v344, %v361
    %v368 = vadd.f32 %v345, %v353
    %v369 = vadd.f32 %v346, %v357
    %v370 = vadd.f32 %v347, %v361
    %v371 = vpack.c.bf16 %v368, %v365
    %v372 = vpack.c.bf16 %v369, %v366
    %v373 = vpack.c.bf16 %v370, %v367
    %v377 = vunpack.c.l.b16 %v371
    %v378 = vunpack.c.l.b16 %v372
    %v379 = vunpack.c.l.b16 %v373
    %v380 = vunpack.c.h.b16 %v371
    %v381 = vunpack.c.h.b16 %v372
    %v382 = vunpack.c.h.b16 %v373
    %v383 = vpack.c.b16 %v378, %v377
    %v384 = vpack.c.b16 %v379, %v379
    %v385 = vpack.c.b16 %v381, %v380
    %v386 = vpack.c.b16 %v382, %v382
    %391 = vst [vmem:[%s5] sm:$0xff] %v383
    %392 = vst [vmem:[%s5 + $0x8] sm:$0xf] %v384
    %393 = vst [vmem:[%s5 + $0xc] sm:$0xff] %v385
    %394 = vst [vmem:[%s5 + $0x14] sm:$0xf] %v386
  $region29: #{_lambda_.15} parent=0 // pred_fallthru
    _
  // Predicated region
  $region30: #{_lambda_.15} parent=0 // pred_check
    _
  $region31: #{_lambda_.15} parent=0 // pred_check_branch
    %396 = sbr.rel (0) target = $region33
  $region32: #{_lambda_.15} parent=0 // pred_region
    _
  $region33: #{_lambda_.15} parent=0 // pred_fallthru
    _
  // Predicated region
  $region34: #{_lambda_.15} parent=0 // pred_check
    _
  $region35: #{_lambda_.15} parent=0 // pred_check_branch
    %398 = sbr.rel (0) target = $region37
  $region36: #{_lambda_.15} parent=0 // pred_region
    _
  $region37: #{_lambda_.15} parent=0 // pred_fallthru
    _

// kernel: _lambda_.17
$region0: #{_lambda_.17}
  #allocation0 [shape = 'u32[]', space=smem, size = 0x4, offset = 0x4, fixed_abs, tag = 'smem constant byte address 0x4 - core index']
  #allocation1 [shape = 'u32[144,128]{1,0:T(1,128)}', space=vmem, size = 0x12000, scoped, tag = 'internal scratch']
  #allocation2 [shape = 'f32[16,128]{1,0:T(8,128)}', space=vmem, size = 0x2000, scoped, tag = 'scratch operand']
  %s0 = inlined_call_operand.vmem [shape: bf16[16,128], index: 0, kind: input, shape index: {}]
  %s1 = inlined_call_operand.vmem [shape: bf16[128,128], index: 1, kind: input, shape index: {}]
  %s2 = inlined_call_operand.vmem [shape: f32[1,128], index: 2, kind: input, shape index: {}]
  %s3 = inlined_call_operand.vmem [shape: bf16[16,128], index: 3, kind: input, shape index: {}]
  %s4 = inlined_call_operand.vmem [shape: bf16[16,128], index: 4, kind: output, shape index: {}]
  %s5 = sld [smem:[#allocation0]]
  $region34: #{_lambda_.17} parent=0
    _
  %s7 = ssub.s32 1, %s5
  %s8 = scalar_select 0, %s7, %s5
  // Predicated region
  $region2: #{_lambda_.17} parent=0 // pred_check
    _
  $region3: #{_lambda_.17} parent=0 // pred_check_branch
    %10 = sbr.rel (0) target = $region5
  $region4: #{_lambda_.17} parent=0 // pred_region
    _
  $region5: #{_lambda_.17} parent=0 // pred_fallthru
    _
  // Predicated region
  $region6: #{_lambda_.17} parent=0 // pred_check
    _
  $region7: #{_lambda_.17} parent=0 // pred_check_branch
    %12 = sbr.rel (0) target = $region9
  $region8: #{_lambda_.17} parent=0 // pred_region
    _
  $region9: #{_lambda_.17} parent=0 // pred_fallthru
    _
  // Predicated region
  $region10: #{_lambda_.17} parent=0 // pred_check
    _
  $region11: #{_lambda_.17} parent=0 // pred_check_branch
    %14 = sbr.rel (0) target = $region13
  $region12: #{_lambda_.17} parent=0 // pred_region
    _
  $region13: #{_lambda_.17} parent=0 // pred_fallthru
    _
  // Predicated region
  $region14: #{_lambda_.17} parent=0 // pred_check
    _
  $region15: #{_lambda_.17} parent=0 // pred_check_branch
    %16 = sbr.rel (0) target = $region17
  $region16: #{_lambda_.17} parent=0 // pred_region
    _
  $region17: #{_lambda_.17} parent=0 // pred_fallthru
    _
  %p18 = scmp.eq.s32.totalorder 0, 0
  // Predicated region
  $region18: #{_lambda_.17} parent=0 // pred_check
    %p19 = pneg %p18
  $region19: #{_lambda_.17} parent=0 // pred_check_branch
    %21 = sbr.rel (%p19) target = $region21
  $region20: #{_lambda_.17} parent=0 // pred_region
    %22 = vst [vmem:[#allocation2] sm:$0xff] 0.0
    %23 = vst [vmem:[#allocation2 + $0x8] sm:$0xff] 0.0
  $region21: #{_lambda_.17} parent=0 // pred_fallthru
    _
  %v24 = vld [vmem:[%s0] sm:$0xf]
  %v25 = vld [vmem:[%s0 + $0x4] sm:$0xf]
  %v26 = vld [vmem:[%s1] sm:$0xf]
  %v27 = vld [vmem:[%s1 + $0x4] sm:$0xf]
  %v28 = vld [vmem:[%s1 + $0x8] sm:$0xf]
  %v29 = vld [vmem:[%s1 + $0xc] sm:$0xf]
  %v30 = vld [vmem:[%s1 + $0x10] sm:$0xf]
  %v31 = vld [vmem:[%s1 + $0x14] sm:$0xf]
  %v32 = vld [vmem:[%s1 + $0x18] sm:$0xf]
  %v33 = vld [vmem:[%s1 + $0x1c] sm:$0xf]
  %v34 = vld [vmem:[%s1 + $0x20] sm:$0xf]
  %v35 = vld [vmem:[%s1 + $0x24] sm:$0xf]
  %v36 = vld [vmem:[%s1 + $0x28] sm:$0xf]
  %v37 = vld [vmem:[%s1 + $0x2c] sm:$0xf]
  %v38 = vld [vmem:[%s1 + $0x30] sm:$0xf]
  %v39 = vld [vmem:[%s1 + $0x34] sm:$0xf]
  %v40 = vld [vmem:[%s1 + $0x38] sm:$0xf]
  %v41 = vld [vmem:[%s1 + $0x3c] sm:$0xf]
  %v42 = vld [vmem:[#allocation2] sm:$0xff]
  %v43 = vld [vmem:[#allocation2 + $0x8] sm:$0xff]
  %v46 = vunpack.c.l.b16 %v24
  %v47 = vunpack.c.l.b16 %v25
  %v48 = vpack.c.b16 %v47, %v46
  %v66 = vunpack.c.l.b16 %v26
  %v67 = vunpack.c.l.b16 %v27
  %v68 = vunpack.c.l.b16 %v28
  %v69 = vunpack.c.l.b16 %v29
  %v70 = vunpack.c.l.b16 %v30
  %v71 = vunpack.c.l.b16 %v31
  %v72 = vunpack.c.l.b16 %v32
  %v73 = vunpack.c.l.b16 %v33
  %v74 = vunpack.c.l.b16 %v34
  %v75 = vunpack.c.l.b16 %v35
  %v76 = vunpack.c.l.b16 %v36
  %v77 = vunpack.c.l.b16 %v37
  %v78 = vunpack.c.l.b16 %v38
  %v79 = vunpack.c.l.b16 %v39
  %v80 = vunpack.c.l.b16 %v40
  %v81 = vunpack.c.l.b16 %v41
  %v82 = vpack.c.b16 %v67, %v66
  %v83 = vpack.c.b16 %v69, %v68
  %v84 = vpack.c.b16 %v71, %v70
  %v85 = vpack.c.b16 %v73, %v72
  %v86 = vpack.c.b16 %v75, %v74
  %v87 = vpack.c.b16 %v77, %v76
  %v88 = vpack.c.b16 %v79, %v78
  %v89 = vpack.c.b16 %v81, %v80
  %98 = vmatprep.subr.bf16.mxu0 0
  %99 = vmatpush1.bf16.msra.mxu0 %v89
  %100 = vmatprep.subr.bf16.mxu0 0
  %101 = vmatpush1.bf16.msra.mxu0 %v88
  %102 = vmatprep.subr.bf16.mxu0 0
  %103 = vmatpush1.bf16.msra.mxu0 %v87
  %104 = vmatprep.subr.bf16.mxu0 0
  %105 = vmatpush1.bf16.msra.mxu0 %v86
  %106 = vmatprep.subr.bf16.mxu0 0
  %107 = vmatpush1.bf16.msra.mxu0 %v85
  %108 = vmatprep.subr.bf16.mxu0 0
  %109 = vmatpush1.bf16.msra.mxu0 %v84
  %110 = vmatprep.subr.bf16.mxu0 0
  %111 = vmatpush1.bf16.msra.mxu0 %v83
  %112 = vmatprep.subr.bf16.mxu0 0
  %113 = vmatpush1.bf16.msra.mxu0 %v82
  %114 = vmatprep.subr.bf16.mxu0 0
  %115 = vmatpush2.bf16.msra.mxu0 0
  %116 = vmatprep.subr.bf16.mxu0 0
  %117 = vmatpush2.bf16.msra.mxu0 0
  %118 = vmatprep.subr.bf16.mxu0 0
  %119 = vmatpush2.bf16.msra.mxu0 0
  %120 = vmatprep.subr.bf16.mxu0 0
  %121 = vmatpush2.bf16.msra.mxu0 0
  %122 = vmatprep.subr.bf16.mxu0 0
  %123 = vmatpush2.bf16.msra.mxu0 0
  %124 = vmatprep.subr.bf16.mxu0 0
  %125 = vmatpush2.bf16.msra.mxu0 0
  %126 = vmatprep.subr.bf16.mxu0 0
  %127 = vmatpush2.bf16.msra.mxu0 0
  %128 = vmatprep.subr.bf16.mxu0 0
  %129 = vmatpush2.bf16.msra.mxu0 0
  %130 = vmatprep.mubr.bf16.mxu0 0
  %131 = vmatmul.mubr.bf16.gmra.mxu0 %v48
  %v132 = vpop.f32.mrf.mxu0
  %v133 = vadd.f32 0.0, %v132
  %v134 = vpop.f32.mrf.mxu0
  %v135 = vpop.f32.mrf.mxu0
  %v136 = vadd.f32 0.0, %v135
  %v137 = vpop.f32.mrf.mxu0
  %138 = vdwg.mxu0
  %v139 = vadd.f32 %v42, %v133
  %v140 = vadd.f32 %v43, %v136
  %141 = vst [vmem:[#allocation2] sm:$0xff] %v139
  %142 = vst [vmem:[#allocation2 + $0x8] sm:$0xff] %v140
  // Predicated region
  $region22: #{_lambda_.17} parent=0 // pred_check
    %p143 = pneg %p18
  $region23: #{_lambda_.17} parent=0 // pred_check_branch
    %145 = sbr.rel (%p143) target = $region25
  $region24: #{_lambda_.17} parent=0 // pred_region
    %v146 = vld [vmem:[#allocation2] sm:$0xff]
    %v147 = vld [vmem:[#allocation2 + $0x8] sm:$0xff]
    %v148 = vld [vmem:[%s2] sm:$0x1]
    %v150 = vlaneseq
    %v151 = vshrl.u32 %v150, 7
    %v152 = vsub.s32 0, %v151
    %v153 = vrot.slane %v148, %v152
    %v155 = vadd.f32 %v146, %v153
    %v156 = vadd.f32 %v147, %v153
    %v157 = vld [vmem:[%s3] sm:$0xf]
    %v158 = vld [vmem:[%s3 + $0x4] sm:$0xf]
    %v159 = vunpack.c.l.bf16 %v157
    %v160 = vunpack.c.l.bf16 %v158
    %v161 = vadd.f32 %v155, %v159
    %v162 = vadd.f32 %v156, %v160
    %v163 = vpack.c.bf16 %v162, %v161
    %v165 = vunpack.c.l.b16 %v163
    %v166 = vunpack.c.h.b16 %v163
    %v167 = vpack.c.b16 %v165, %v165
    %v168 = vpack.c.b16 %v166, %v166
    %171 = vst [vmem:[%s4] sm:$0xf] %v167
    %172 = vst [vmem:[%s4 + $0x4] sm:$0xf] %v168
  $region25: #{_lambda_.17} parent=0 // pred_fallthru
    _
  // Predicated region
  $region26: #{_lambda_.17} parent=0 // pred_check
    _
  $region27: #{_lambda_.17} parent=0 // pred_check_branch
    %174 = sbr.rel (0) target = $region29
  $region28: #{_lambda_.17} parent=0 // pred_region
    _
  $region29: #{_lambda_.17} parent=0 // pred_fallthru
    _
  // Predicated region
  $region30: #{_lambda_.17} parent=0 // pred_check
    _
  $region31: #{_lambda_.17} parent=0 // pred_check_branch
    %176 = sbr.rel (0) target = $region33
  $region32: #{_lambda_.17} parent=0 // pred_region
    _
  $region33: #{_lambda_.17} parent=0 // pred_fallthru
    _

// kernel: _lambda_.18
$region0: #{_lambda_.18}
  #allocation0 [shape = 'u32[]', space=smem, size = 0x4, offset = 0x4, fixed_abs, tag = 'smem constant byte address 0x4 - core index']
  #allocation1 [shape = 'u32[144,128]{1,0:T(1,128)}', space=vmem, size = 0x12000, scoped, tag = 'internal scratch']
  #allocation2 [shape = 'f32[16,256]{1,0:T(8,128)}', space=vmem, size = 0x4000, scoped, tag = 'scratch operand']
  %s0 = inlined_call_operand.vmem [shape: bf16[16,128], index: 0, kind: input, shape index: {}]
  %s1 = inlined_call_operand.vmem [shape: bf16[128,256], index: 1, kind: input, shape index: {}]
  %s2 = inlined_call_operand.vmem [shape: f32[1,256], index: 2, kind: input, shape index: {}]
  %s3 = inlined_call_operand.vmem [shape: f32[1,128], index: 3, kind: input, shape index: {}]
  %s4 = inlined_call_operand.vmem [shape: f32[1,128], index: 4, kind: input, shape index: {}]
  %s5 = inlined_call_operand.vmem [shape: bf16[16,256], index: 5, kind: output, shape index: {}]
  %s6 = sld [smem:[#allocation0]]
  $region38: #{_lambda_.18} parent=0
    _
  %s8 = ssub.s32 1, %s6
  %s9 = scalar_select 0, %s8, %s6
  // Predicated region
  $region2: #{_lambda_.18} parent=0 // pred_check
    _
  $region3: #{_lambda_.18} parent=0 // pred_check_branch
    %11 = sbr.rel (0) target = $region5
  $region4: #{_lambda_.18} parent=0 // pred_region
    _
  $region5: #{_lambda_.18} parent=0 // pred_fallthru
    _
  // Predicated region
  $region6: #{_lambda_.18} parent=0 // pred_check
    _
  $region7: #{_lambda_.18} parent=0 // pred_check_branch
    %13 = sbr.rel (0) target = $region9
  $region8: #{_lambda_.18} parent=0 // pred_region
    _
  $region9: #{_lambda_.18} parent=0 // pred_fallthru
    _
  // Predicated region
  $region10: #{_lambda_.18} parent=0 // pred_check
    _
  $region11: #{_lambda_.18} parent=0 // pred_check_branch
    %15 = sbr.rel (0) target = $region13
  $region12: #{_lambda_.18} parent=0 // pred_region
    _
  $region13: #{_lambda_.18} parent=0 // pred_fallthru
    _
  // Predicated region
  $region14: #{_lambda_.18} parent=0 // pred_check
    _
  $region15: #{_lambda_.18} parent=0 // pred_check_branch
    %17 = sbr.rel (0) target = $region17
  $region16: #{_lambda_.18} parent=0 // pred_region
    _
  $region17: #{_lambda_.18} parent=0 // pred_fallthru
    _
  // Predicated region
  $region18: #{_lambda_.18} parent=0 // pred_check
    _
  $region19: #{_lambda_.18} parent=0 // pred_check_branch
    %19 = sbr.rel (0) target = $region21
  $region20: #{_lambda_.18} parent=0 // pred_region
    _
  $region21: #{_lambda_.18} parent=0 // pred_fallthru
    _
  %p21 = scmp.eq.s32.totalorder 0, 0
  // Predicated region
  $region22: #{_lambda_.18} parent=0 // pred_check
    %p22 = pneg %p21
  $region23: #{_lambda_.18} parent=0 // pred_check_branch
    %24 = sbr.rel (%p22) target = $region25
  $region24: #{_lambda_.18} parent=0 // pred_region
    %25 = vst [vmem:[#allocation2] sm:$0xff] 0.0
    %26 = vst [vmem:[#allocation2 + $0x8] sm:$0xff] 0.0
    %27 = vst [vmem:[#allocation2 + $0x10] sm:$0xff] 0.0
    %28 = vst [vmem:[#allocation2 + $0x18] sm:$0xff] 0.0
  $region25: #{_lambda_.18} parent=0 // pred_fallthru
    _
  %v29 = vld [vmem:[%s0] sm:$0xf]
  %v30 = vld [vmem:[%s0 + $0x4] sm:$0xf]
  %v31 = vunpack.c.l.bf16 %v29
  %v32 = vunpack.c.l.bf16 %v30
  %33 = vadd.xlane.f32.xlu0 %v31
  %v34 = vpop.xlane.xlu0 %33
  %35 = vadd.xlane.f32.xlu0 %v32
  %v36 = vpop.xlane.xlu0 %35
  %v37 = vrcp.pop 128.0
  %v38 = vmul.f32 %v34, %v37
  %v39 = vmul.f32 %v36, %v37
  %v40 = vsub.f32 %v31, %v38
  %v41 = vsub.f32 %v32, %v39
  %v42 = vmul.f32 %v40, %v40
  %v43 = vmul.f32 %v41, %v41
  %44 = vadd.xlane.f32.xlu0 %v42
  %v45 = vpop.xlane.xlu0 %44
  %46 = vadd.xlane.f32.xlu0 %v43
  %v47 = vpop.xlane.xlu0 %46
  %v48 = vmul.f32 %v45, %v37
  %v49 = vmul.f32 %v47, %v37
  %v50 = vadd.f32 %v48, 1e-05
  %v51 = vadd.f32 %v49, 1e-05
  %v52 = vrsqrt.pop %v50
  %v53 = vrsqrt.pop %v51
  %v54 = vmul.f32 %v40, %v52
  %v55 = vmul.f32 %v41, %v53
  %v56 = vld [vmem:[%s3] sm:$0x1]
  %v58 = vlaneseq
  %v59 = vshrl.u32 %v58, 7
  %v60 = vsub.s32 0, %v59
  %v61 = vrot.slane %v56, %v60
  %v63 = vmul.f32 %v54, %v61
  %v64 = vmul.f32 %v55, %v61
  %v65 = vld [vmem:[%s4] sm:$0x1]
  %v67 = vlaneseq
  %v68 = vshrl.u32 %v67, 7
  %v69 = vsub.s32 0, %v68
  %v70 = vrot.slane %v65, %v69
  %v72 = vadd.f32 %v63, %v70
  %v73 = vadd.f32 %v64, %v70
  %v74 = vpack.c.bf16 %v73, %v72
  %v75 = vld [vmem:[%s1] sm:$0xff]
  %v76 = vld [vmem:[%s1 + $0x8] sm:$0xff]
  %v77 = vld [vmem:[%s1 + $0x10] sm:$0xff]
  %v78 = vld [vmem:[%s1 + $0x18] sm:$0xff]
  %v79 = vld [vmem:[%s1 + $0x20] sm:$0xff]
  %v80 = vld [vmem:[%s1 + $0x28] sm:$0xff]
  %v81 = vld [vmem:[%s1 + $0x30] sm:$0xff]
  %v82 = vld [vmem:[%s1 + $0x38] sm:$0xff]
  %v83 = vld [vmem:[%s1 + $0x40] sm:$0xff]
  %v84 = vld [vmem:[%s1 + $0x48] sm:$0xff]
  %v85 = vld [vmem:[%s1 + $0x50] sm:$0xff]
  %v86 = vld [vmem:[%s1 + $0x58] sm:$0xff]
  %v87 = vld [vmem:[%s1 + $0x60] sm:$0xff]
  %v88 = vld [vmem:[%s1 + $0x68] sm:$0xff]
  %v89 = vld [vmem:[%s1 + $0x70] sm:$0xff]
  %v90 = vld [vmem:[%s1 + $0x78] sm:$0xff]
  %v91 = vld [vmem:[#allocation2] sm:$0xff]
  %v92 = vld [vmem:[#allocation2 + $0x8] sm:$0xff]
  %v93 = vld [vmem:[#allocation2 + $0x10] sm:$0xff]
  %v94 = vld [vmem:[#allocation2 + $0x18] sm:$0xff]
  %v111 = vunpack.c.l.b16 %v75
  %v112 = vunpack.c.h.b16 %v75
  %v113 = vunpack.c.l.b16 %v76
  %v114 = vunpack.c.h.b16 %v76
  %v115 = vunpack.c.l.b16 %v77
  %v116 = vunpack.c.h.b16 %v77
  %v117 = vunpack.c.l.b16 %v78
  %v118 = vunpack.c.h.b16 %v78
  %v119 = vunpack.c.l.b16 %v79
  %v120 = vunpack.c.h.b16 %v79
  %v121 = vunpack.c.l.b16 %v80
  %v122 = vunpack.c.h.b16 %v80
  %v123 = vunpack.c.l.b16 %v81
  %v124 = vunpack.c.h.b16 %v81
  %v125 = vunpack.c.l.b16 %v82
  %v126 = vunpack.c.h.b16 %v82
  %v127 = vunpack.c.l.b16 %v83
  %v128 = vunpack.c.h.b16 %v83
  %v129 = vunpack.c.l.b16 %v84
  %v130 = vunpack.c.h.b16 %v84
  %v131 = vunpack.c.l.b16 %v85
  %v132 = vunpack.c.h.b16 %v85
  %v133 = vunpack.c.l.b16 %v86
  %v134 = vunpack.c.h.b16 %v86
  %v135 = vunpack.c.l.b16 %v87
  %v136 = vunpack.c.h.b16 %v87
  %v137 = vunpack.c.l.b16 %v88
  %v138 = vunpack.c.h.b16 %v88
  %v139 = vunpack.c.l.b16 %v89
  %v140 = vunpack.c.h.b16 %v89
  %v141 = vunpack.c.l.b16 %v90
  %v142 = vunpack.c.h.b16 %v90
  %v143 = vpack.c.b16 %v113, %v111
  %v144 = vpack.c.b16 %v114, %v112
  %v145 = vpack.c.b16 %v117, %v115
  %v146 = vpack.c.b16 %v118, %v116
  %v147 = vpack.c.b16 %v121, %v119
  %v148 = vpack.c.b16 %v122, %v120
  %v149 = vpack.c.b16 %v125, %v123
  %v150 = vpack.c.b16 %v126, %v124
  %v151 = vpack.c.b16 %v129, %v127
  %v152 = vpack.c.b16 %v130, %v128
  %v153 = vpack.c.b16 %v133, %v131
  %v154 = vpack.c.b16 %v134, %v132
  %v155 = vpack.c.b16 %v137, %v135
  %v156 = vpack.c.b16 %v138, %v136
  %v157 = vpack.c.b16 %v141, %v139
  %v158 = vpack.c.b16 %v142, %v140
  %175 = vmatprep.subr.bf16.mxu0 %v158
  %176 = vmatpush1.bf16.msra.mxu0 %v157
  %177 = vmatprep.subr.bf16.mxu0 %v156
  %178 = vmatpush1.bf16.msra.mxu0 %v155
  %179 = vmatprep.subr.bf16.mxu0 %v154
  %180 = vmatpush1.bf16.msra.mxu0 %v153
  %181 = vmatprep.subr.bf16.mxu0 %v152
  %182 = vmatpush1.bf16.msra.mxu0 %v151
  %183 = vmatprep.subr.bf16.mxu0 %v150
  %184 = vmatpush1.bf16.msra.mxu0 %v149
  %185 = vmatprep.subr.bf16.mxu0 %v148
  %186 = vmatpush1.bf16.msra.mxu0 %v147
  %187 = vmatprep.subr.bf16.mxu0 %v146
  %188 = vmatpush1.bf16.msra.mxu0 %v145
  %189 = vmatprep.subr.bf16.mxu0 %v144
  %190 = vmatpush1.bf16.msra.mxu0 %v143
  %191 = vmatprep.subr.bf16.mxu0 0
  %192 = vmatpush2.bf16.msra.mxu0 0
  %193 = vmatprep.subr.bf16.mxu0 0
  %194 = vmatpush2.bf16.msra.mxu0 0
  %195 = vmatprep.subr.bf16.mxu0 0
  %196 = vmatpush2.bf16.msra.mxu0 0
  %197 = vmatprep.subr.bf16.mxu0 0
  %198 = vmatpush2.bf16.msra.mxu0 0
  %199 = vmatprep.subr.bf16.mxu0 0
  %200 = vmatpush2.bf16.msra.mxu0 0
  %201 = vmatprep.subr.bf16.mxu0 0
  %202 = vmatpush2.bf16.msra.mxu0 0
  %203 = vmatprep.subr.bf16.mxu0 0
  %204 = vmatpush2.bf16.msra.mxu0 0
  %205 = vmatprep.subr.bf16.mxu0 0
  %206 = vmatpush2.bf16.msra.mxu0 0
  %207 = vmatprep.mubr.bf16.mxu0 0
  %208 = vmatmul.mubr.bf16.gmra.mxu0 %v74
  %v209 = vpop.f32.mrf.mxu0
  %v210 = vadd.f32 0.0, %v209
  %v211 = vpop.f32.mrf.mxu0
  %v212 = vadd.f32 0.0, %v211
  %v213 = vpop.f32.mrf.mxu0
  %v214 = vadd.f32 0.0, %v213
  %v215 = vpop.f32.mrf.mxu0
  %v216 = vadd.f32 0.0, %v215
  %217 = vdwg.mxu0
  %v218 = vadd.f32 %v91, %v210
  %v219 = vadd.f32 %v92, %v212
  %v220 = vadd.f32 %v93, %v214
  %v221 = vadd.f32 %v94, %v216
  %222 = vst [vmem:[#allocation2] sm:$0xff] %v218
  %223 = vst [vmem:[#allocation2 + $0x8] sm:$0xff] %v219
  %224 = vst [vmem:[#allocation2 + $0x10] sm:$0xff] %v220
  %225 = vst [vmem:[#allocation2 + $0x18] sm:$0xff] %v221
  // Predicated region
  $region26: #{_lambda_.18} parent=0 // pred_check
    %p226 = pneg %p21
  $region27: #{_lambda_.18} parent=0 // pred_check_branch
    %228 = sbr.rel (%p226) target = $region29
  $region28: #{_lambda_.18} parent=0 // pred_region
    %v229 = vld [vmem:[#allocation2] sm:$0xff]
    %v230 = vld [vmem:[#allocation2 + $0x8] sm:$0xff]
    %v231 = vld [vmem:[#allocation2 + $0x10] sm:$0xff]
    %v232 = vld [vmem:[#allocation2 + $0x18] sm:$0xff]
    %v233 = vld [vmem:[%s2] sm:$0x3]
    %v235 = vlaneseq
    %v236 = vshrl.u32 %v235, 7
    %v237 = vsub.s32 0, %v236
    %v238 = vrot.slane %v233, %v237
    %v239 = vlaneseq
    %v240 = vshrl.u32 %v239, 7
    %v241 = vsub.s32 1, %v240
    %v242 = vrot.slane %v233, %v241
    %v245 = vadd.f32 %v229, %v238
    %v246 = vadd.f32 %v230, %v242
    %v247 = vadd.f32 %v231, %v238
    %v248 = vadd.f32 %v232, %v242
    %v249 = vmul.f32 %v245, 0.5
    %v250 = vmul.f32 %v246, 0.5
    %v251 = vmul.f32 %v247, 0.5
    %v252 = vmul.f32 %v248, 0.5
    %v253 = vmul.f32 %v245, 0.044715
    %v254 = vmul.f32 %v246, 0.044715
    %v255 = vmul.f32 %v247, 0.044715
    %v256 = vmul.f32 %v248, 0.044715
    %v257 = vmul.f32 %v253, %v245
    %v258 = vmul.f32 %v254, %v246
    %v259 = vmul.f32 %v255, %v247
    %v260 = vmul.f32 %v256, %v248
    %v261 = vmul.f32 %v257, %v245
    %v262 = vmul.f32 %v258, %v246
    %v263 = vmul.f32 %v259, %v247
    %v264 = vmul.f32 %v260, %v248
    %v265 = vadd.f32 %v245, %v261
    %v266 = vadd.f32 %v246, %v262
    %v267 = vadd.f32 %v247, %v263
    %v268 = vadd.f32 %v248, %v264
    %v269 = vmul.f32 %v265, 0.7978846
    %v270 = vmul.f32 %v266, 0.7978846
    %v271 = vmul.f32 %v267, 0.7978846
    %v272 = vmul.f32 %v268, 0.7978846
    %v273 = vtanh.pop %v269
    %v274 = vtanh.pop %v270
    %v275 = vtanh.pop %v271
    %v276 = vtanh.pop %v272
    %v277 = vadd.f32 %v273, 1.0
    %v278 = vadd.f32 %v274, 1.0
    %v279 = vadd.f32 %v275, 1.0
    %v280 = vadd.f32 %v276, 1.0
    %v281 = vmul.f32 %v249, %v277
    %v282 = vmul.f32 %v250, %v278
    %v283 = vmul.f32 %v251, %v279
    %v284 = vmul.f32 %v252, %v280
    %v285 = vpack.c.bf16 %v283, %v281
    %v286 = vpack.c.bf16 %v284, %v282
    %v289 = vunpack.c.l.b16 %v285
    %v290 = vunpack.c.l.b16 %v286
    %v291 = vunpack.c.h.b16 %v285
    %v292 = vunpack.c.h.b16 %v286
    %v293 = vpack.c.b16 %v290, %v289
    %v294 = vpack.c.b16 %v292, %v291
    %297 = vst [vmem:[%s5] sm:$0xff] %v293
    %298 = vst [vmem:[%s5 + $0x8] sm:$0xff] %v294
  $region29: #{_lambda_.18} parent=0 // pred_fallthru
    _
  // Predicated region
  $region30: #{_lambda_.18} parent=0 // pred_check
    _
  $region31: #{_lambda_.18} parent=0 // pred_check_branch
    %300 = sbr.rel (0) target = $region33
  $region32: #{_lambda_.18} parent=0 // pred_region
    _
  $region33: #{_lambda_.18} parent=0 // pred_fallthru
    _
  // Predicated region
  $region34: #{_lambda_.18} parent=0 // pred_check
    _
  $region35: #{_lambda_.18} parent=0 // pred_check_branch
    %302 = sbr.rel (0) target = $region37
  $region36: #{_lambda_.18} parent=0 // pred_region
    _
  $region37: #{_lambda_.18} parent=0 // pred_fallthru
    _

// kernel: _lambda_.19
$region0: #{_lambda_.19}
  #allocation0 [shape = 'u32[]', space=smem, size = 0x4, offset = 0x4, fixed_abs, tag = 'smem constant byte address 0x4 - core index']
  #allocation1 [shape = 'u32[144,128]{1,0:T(1,128)}', space=vmem, size = 0x12000, scoped, tag = 'internal scratch']
  #allocation2 [shape = 'f32[16,128]{1,0:T(8,128)}', space=vmem, size = 0x2000, scoped, tag = 'scratch operand']
  %s0 = inlined_call_operand.vmem [shape: bf16[16,256], index: 0, kind: input, shape index: {}]
  %s1 = inlined_call_operand.vmem [shape: bf16[256,128], index: 1, kind: input, shape index: {}]
  %s2 = inlined_call_operand.vmem [shape: f32[1,128], index: 2, kind: input, shape index: {}]
  %s3 = inlined_call_operand.vmem [shape: bf16[16,128], index: 3, kind: input, shape index: {}]
  %s4 = inlined_call_operand.vmem [shape: bf16[16,128], index: 4, kind: output, shape index: {}]
  %s5 = sld [smem:[#allocation0]]
  $region34: #{_lambda_.19} parent=0
    _
  %s7 = ssub.s32 1, %s5
  %s8 = scalar_select 0, %s7, %s5
  // Predicated region
  $region2: #{_lambda_.19} parent=0 // pred_check
    _
  $region3: #{_lambda_.19} parent=0 // pred_check_branch
    %10 = sbr.rel (0) target = $region5
  $region4: #{_lambda_.19} parent=0 // pred_region
    _
  $region5: #{_lambda_.19} parent=0 // pred_fallthru
    _
  // Predicated region
  $region6: #{_lambda_.19} parent=0 // pred_check
    _
  $region7: #{_lambda_.19} parent=0 // pred_check_branch
    %12 = sbr.rel (0) target = $region9
  $region8: #{_lambda_.19} parent=0 // pred_region
    _
  $region9: #{_lambda_.19} parent=0 // pred_fallthru
    _
  // Predicated region
  $region10: #{_lambda_.19} parent=0 // pred_check
    _
  $region11: #{_lambda_.19} parent=0 // pred_check_branch
    %14 = sbr.rel (0) target = $region13
  $region12: #{_lambda_.19} parent=0 // pred_region
    _
  $region13: #{_lambda_.19} parent=0 // pred_fallthru
    _
  // Predicated region
  $region14: #{_lambda_.19} parent=0 // pred_check
    _
  $region15: #{_lambda_.19} parent=0 // pred_check_branch
    %16 = sbr.rel (0) target = $region17
  $region16: #{_lambda_.19} parent=0 // pred_region
    _
  $region17: #{_lambda_.19} parent=0 // pred_fallthru
    _
  %p18 = scmp.eq.s32.totalorder 0, 0
  // Predicated region
  $region18: #{_lambda_.19} parent=0 // pred_check
    %p19 = pneg %p18
  $region19: #{_lambda_.19} parent=0 // pred_check_branch
    %21 = sbr.rel (%p19) target = $region21
  $region20: #{_lambda_.19} parent=0 // pred_region
    %22 = vst [vmem:[#allocation2] sm:$0xff] 0.0
    %23 = vst [vmem:[#allocation2 + $0x8] sm:$0xff] 0.0
  $region21: #{_lambda_.19} parent=0 // pred_fallthru
    _
  %v24 = vld [vmem:[%s0] sm:$0xff]
  %v25 = vld [vmem:[%s0 + $0x8] sm:$0xff]
  %v26 = vld [vmem:[%s1] sm:$0xf]
  %v27 = vld [vmem:[%s1 + $0x4] sm:$0xf]
  %v28 = vld [vmem:[%s1 + $0x8] sm:$0xf]
  %v29 = vld [vmem:[%s1 + $0xc] sm:$0xf]
  %v30 = vld [vmem:[%s1 + $0x10] sm:$0xf]
  %v31 = vld [vmem:[%s1 + $0x14] sm:$0xf]
  %v32 = vld [vmem:[%s1 + $0x18] sm:$0xf]
  %v33 = vld [vmem:[%s1 + $0x1c] sm:$0xf]
  %v34 = vld [vmem:[%s1 + $0x20] sm:$0xf]
  %v35 = vld [vmem:[%s1 + $0x24] sm:$0xf]
  %v36 = vld [vmem:[%s1 + $0x28] sm:$0xf]
  %v37 = vld [vmem:[%s1 + $0x2c] sm:$0xf]
  %v38 = vld [vmem:[%s1 + $0x30] sm:$0xf]
  %v39 = vld [vmem:[%s1 + $0x34] sm:$0xf]
  %v40 = vld [vmem:[%s1 + $0x38] sm:$0xf]
  %v41 = vld [vmem:[%s1 + $0x3c] sm:$0xf]
  %v42 = vld [vmem:[%s1 + $0x40] sm:$0xf]
  %v43 = vld [vmem:[%s1 + $0x44] sm:$0xf]
  %v44 = vld [vmem:[%s1 + $0x48] sm:$0xf]
  %v45 = vld [vmem:[%s1 + $0x4c] sm:$0xf]
  %v46 = vld [vmem:[%s1 + $0x50] sm:$0xf]
  %v47 = vld [vmem:[%s1 + $0x54] sm:$0xf]
  %v48 = vld [vmem:[%s1 + $0x58] sm:$0xf]
  %v49 = vld [vmem:[%s1 + $0x5c] sm:$0xf]
  %v50 = vld [vmem:[%s1 + $0x60] sm:$0xf]
  %v51 = vld [vmem:[%s1 + $0x64] sm:$0xf]
  %v52 = vld [vmem:[%s1 + $0x68] sm:$0xf]
  %v53 = vld [vmem:[%s1 + $0x6c] sm:$0xf]
  %v54 = vld [vmem:[%s1 + $0x70] sm:$0xf]
  %v55 = vld [vmem:[%s1 + $0x74] sm:$0xf]
  %v56 = vld [vmem:[%s1 + $0x78] sm:$0xf]
  %v57 = vld [vmem:[%s1 + $0x7c] sm:$0xf]
  %v58 = vld [vmem:[#allocation2] sm:$0xff]
  %v59 = vld [vmem:[#allocation2 + $0x8] sm:$0xff]
  %v62 = vunpack.c.l.b16 %v24
  %v63 = vunpack.c.h.b16 %v24
  %v64 = vunpack.c.l.b16 %v25
  %v65 = vunpack.c.h.b16 %v25
  %v66 = vpack.c.b16 %v64, %v62
  %v67 = vpack.c.b16 %v65, %v63
  %v102 = vunpack.c.l.b16 %v26
  %v103 = vunpack.c.l.b16 %v27
  %v104 = vunpack.c.l.b16 %v28
  %v105 = vunpack.c.l.b16 %v29
  %v106 = vunpack.c.l.b16 %v30
  %v107 = vunpack.c.l.b16 %v31
  %v108 = vunpack.c.l.b16 %v32
  %v109 = vunpack.c.l.b16 %v33
  %v110 = vunpack.c.l.b16 %v34
  %v111 = vunpack.c.l.b16 %v35
  %v112 = vunpack.c.l.b16 %v36
  %v113 = vunpack.c.l.b16 %v37
  %v114 = vunpack.c.l.b16 %v38
  %v115 = vunpack.c.l.b16 %v39
  %v116 = vunpack.c.l.b16 %v40
  %v117 = vunpack.c.l.b16 %v41
  %v118 = vunpack.c.l.b16 %v42
  %v119 = vunpack.c.l.b16 %v43
  %v120 = vunpack.c.l.b16 %v44
  %v121 = vunpack.c.l.b16 %v45
  %v122 = vunpack.c.l.b16 %v46
  %v123 = vunpack.c.l.b16 %v47
  %v124 = vunpack.c.l.b16 %v48
  %v125 = vunpack.c.l.b16 %v49
  %v126 = vunpack.c.l.b16 %v50
  %v127 = vunpack.c.l.b16 %v51
  %v128 = vunpack.c.l.b16 %v52
  %v129 = vunpack.c.l.b16 %v53
  %v130 = vunpack.c.l.b16 %v54
  %v131 = vunpack.c.l.b16 %v55
  %v132 = vunpack.c.l.b16 %v56
  %v133 = vunpack.c.l.b16 %v57
  %v134 = vpack.c.b16 %v103, %v102
  %v135 = vpack.c.b16 %v105, %v104
  %v136 = vpack.c.b16 %v107, %v106
  %v137 = vpack.c.b16 %v109, %v108
  %v138 = vpack.c.b16 %v111, %v110
  %v139 = vpack.c.b16 %v113, %v112
  %v140 = vpack.c.b16 %v115, %v114
  %v141 = vpack.c.b16 %v117, %v116
  %v142 = vpack.c.b16 %v119, %v118
  %v143 = vpack.c.b16 %v121, %v120
  %v144 = vpack.c.b16 %v123, %v122
  %v145 = vpack.c.b16 %v125, %v124
  %v146 = vpack.c.b16 %v127, %v126
  %v147 = vpack.c.b16 %v129, %v128
  %v148 = vpack.c.b16 %v131, %v130
  %v149 = vpack.c.b16 %v133, %v132
  %166 = vmatprep.subr.bf16.mxu0 0
  %167 = vmatpush1.bf16.msra.mxu0 %v141
  %168 = vmatprep.subr.bf16.mxu0 0
  %169 = vmatpush1.bf16.msra.mxu0 %v140
  %170 = vmatprep.subr.bf16.mxu0 0
  %171 = vmatpush1.bf16.msra.mxu0 %v139
  %172 = vmatprep.subr.bf16.mxu0 0
  %173 = vmatpush1.bf16.msra.mxu0 %v138
  %174 = vmatprep.subr.bf16.mxu0 0
  %175 = vmatpush1.bf16.msra.mxu0 %v137
  %176 = vmatprep.subr.bf16.mxu0 0
  %177 = vmatpush1.bf16.msra.mxu0 %v136
  %178 = vmatprep.subr.bf16.mxu0 0
  %179 = vmatpush1.bf16.msra.mxu0 %v135
  %180 = vmatprep.subr.bf16.mxu0 0
  %181 = vmatpush1.bf16.msra.mxu0 %v134
  %182 = vmatprep.subr.bf16.mxu0 0
  %183 = vmatpush2.bf16.msra.mxu0 %v149
  %184 = vmatprep.subr.bf16.mxu0 0
  %185 = vmatpush2.bf16.msra.mxu0 %v148
  %186 = vmatprep.subr.bf16.mxu0 0
  %187 = vmatpush2.bf16.msra.mxu0 %v147
  %188 = vmatprep.subr.bf16.mxu0 0
  %189 = vmatpush2.bf16.msra.mxu0 %v146
  %190 = vmatprep.subr.bf16.mxu0 0
  %191 = vmatpush2.bf16.msra.mxu0 %v145
  %192 = vmatprep.subr.bf16.mxu0 0
  %193 = vmatpush2.bf16.msra.mxu0 %v144
  %194 = vmatprep.subr.bf16.mxu0 0
  %195 = vmatpush2.bf16.msra.mxu0 %v143
  %196 = vmatprep.subr.bf16.mxu0 0
  %197 = vmatpush2.bf16.msra.mxu0 %v142
  %198 = vmatprep.mubr.bf16.mxu0 %v67
  %199 = vmatmul.mubr.bf16.gmra.mxu0 %v66
  %v200 = vpop.f32.mrf.mxu0
  %v201 = vadd.f32 0.0, %v200
  %v202 = vpop.f32.mrf.mxu0
  %v203 = vpop.f32.mrf.mxu0
  %v204 = vadd.f32 0.0, %v203
  %v205 = vpop.f32.mrf.mxu0
  %206 = vdwg.mxu0
  %v207 = vadd.f32 %v58, %v201
  %v208 = vadd.f32 %v59, %v204
  %209 = vst [vmem:[#allocation2] sm:$0xff] %v207
  %210 = vst [vmem:[#allocation2 + $0x8] sm:$0xff] %v208
  // Predicated region
  $region22: #{_lambda_.19} parent=0 // pred_check
    %p211 = pneg %p18
  $region23: #{_lambda_.19} parent=0 // pred_check_branch
    %213 = sbr.rel (%p211) target = $region25
  $region24: #{_lambda_.19} parent=0 // pred_region
    %v214 = vld [vmem:[#allocation2] sm:$0xff]
    %v215 = vld [vmem:[#allocation2 + $0x8] sm:$0xff]
    %v216 = vld [vmem:[%s2] sm:$0x1]
    %v218 = vlaneseq
    %v219 = vshrl.u32 %v218, 7
    %v220 = vsub.s32 0, %v219
    %v221 = vrot.slane %v216, %v220
    %v223 = vadd.f32 %v214, %v221
    %v224 = vadd.f32 %v215, %v221
    %v225 = vld [vmem:[%s3] sm:$0xf]
    %v226 = vld [vmem:[%s3 + $0x4] sm:$0xf]
    %v227 = vunpack.c.l.bf16 %v225
    %v228 = vunpack.c.l.bf16 %v226
    %v229 = vadd.f32 %v223, %v227
    %v230 = vadd.f32 %v224, %v228
    %v231 = vpack.c.bf16 %v230, %v229
    %v233 = vunpack.c.l.b16 %v231
    %v234 = vunpack.c.h.b16 %v231
    %v235 = vpack.c.b16 %v233, %v233
    %v236 = vpack.c.b16 %v234, %v234
    %239 = vst [vmem:[%s4] sm:$0xf] %v235
    %240 = vst [vmem:[%s4 + $0x4] sm:$0xf] %v236
  $region25: #{_lambda_.19} parent=0 // pred_fallthru
    _
  // Predicated region
  $region26: #{_lambda_.19} parent=0 // pred_check
    _
  $region27: #{_lambda_.19} parent=0 // pred_check_branch
    %242 = sbr.rel (0) target = $region29
  $region28: #{_lambda_.19} parent=0 // pred_region
    _
  $region29: #{_lambda_.19} parent=0 // pred_fallthru
    _
  // Predicated region
  $region30: #{_lambda_.19} parent=0 // pred_check
    _
  $region31: #{_lambda_.19} parent=0 // pred_check_branch
    %244 = sbr.rel (0) target = $region33
  $region32: #{_lambda_.19} parent=0 // pred_region
    _
  $region33: #{_lambda_.19} parent=0 // pred_fallthru
    _

// kernel: _lambda_.25
$region0: #{_lambda_.25}
  #allocation0 [shape = 'u32[]', space=smem, size = 0x4, offset = 0x4, fixed_abs, tag = 'smem constant byte address 0x4 - core index']
  #allocation1 [shape = 'u32[144,128]{1,0:T(1,128)}', space=vmem, size = 0x12000, scoped, tag = 'internal scratch']
  %s0 = inlined_call_operand.vmem [shape: bf16[16,128], index: 0, kind: input, shape index: {}]
  %s1 = inlined_call_operand.vmem [shape: f32[1,128], index: 1, kind: input, shape index: {}]
  %s2 = inlined_call_operand.vmem [shape: f32[1,128], index: 2, kind: input, shape index: {}]
  %s3 = inlined_call_operand.hbm [shape: f32[16,128], index: 3, kind: output, shape index: {}]
  %s4 = sld [smem:[#allocation0]]
  $region22: #{_lambda_.25} parent=0
    _
  %s6 = ssub.s32 1, %s4
  %s7 = scalar_select 0, %s6, %s4
  $region1: #{_lambda_.25} parent=0
    #allocation2 [shape = 'u8[8192]{0}', space=vmem, size = 0x2000, scoped, tag = 'output window, operand 0, single buffered']
    #allocation3 [shape = 's32[1]{0}', space=sflag, size = 0x4, scoped, tag = 'scoped memory for _lambda_.25']
    %8 = vsyncpa [#allocation3], 0
    // Predicated region
    $region2: #{_lambda_.25} parent=1 // pred_check
      _
    $region3: #{_lambda_.25} parent=1 // pred_check_branch
      %10 = sbr.rel (0) target = $region5
    $region4: #{_lambda_.25} parent=1 // pred_region
      _
    $region5: #{_lambda_.25} parent=1 // pred_fallthru
      _
    // Predicated region
    $region6: #{_lambda_.25} parent=1 // pred_check
      _
    $region7: #{_lambda_.25} parent=1 // pred_check_branch
      %12 = sbr.rel (0) target = $region9
    $region8: #{_lambda_.25} parent=1 // pred_region
      _
    $region9: #{_lambda_.25} parent=1 // pred_fallthru
      _
    // Predicated region
    $region10: #{_lambda_.25} parent=1 // pred_check
      _
    $region11: #{_lambda_.25} parent=1 // pred_check_branch
      %14 = sbr.rel (0) target = $region13
    $region12: #{_lambda_.25} parent=1 // pred_region
      _
    $region13: #{_lambda_.25} parent=1 // pred_fallthru
      _
    %v15 = vld [vmem:[%s0] sm:$0xf]
    %v16 = vld [vmem:[%s0 + $0x4] sm:$0xf]
    %v17 = vunpack.c.l.bf16 %v15
    %v18 = vunpack.c.l.bf16 %v16
    %19 = vadd.xlane.f32.xlu0 %v17
    %v20 = vpop.xlane.xlu0 %19
    %21 = vadd.xlane.f32.xlu0 %v18
    %v22 = vpop.xlane.xlu0 %21
    %v23 = vrcp.pop 128.0
    %v24 = vmul.f32 %v20, %v23
    %v25 = vmul.f32 %v22, %v23
    %v26 = vsub.f32 %v17, %v24
    %v27 = vsub.f32 %v18, %v25
    %v28 = vmul.f32 %v26, %v26
    %v29 = vmul.f32 %v27, %v27
    %30 = vadd.xlane.f32.xlu0 %v28
    %v31 = vpop.xlane.xlu0 %30
    %32 = vadd.xlane.f32.xlu0 %v29
    %v33 = vpop.xlane.xlu0 %32
    %v34 = vmul.f32 %v31, %v23
    %v35 = vmul.f32 %v33, %v23
    %v36 = vadd.f32 %v34, 1e-05
    %v37 = vadd.f32 %v35, 1e-05
    %v38 = vrsqrt.pop %v36
    %v39 = vrsqrt.pop %v37
    %v40 = vmul.f32 %v26, %v38
    %v41 = vmul.f32 %v27, %v39
    %v42 = vld [vmem:[%s1] sm:$0x1]
    %v44 = vlaneseq
    %v45 = vshrl.u32 %v44, 7
    %v46 = vsub.s32 0, %v45
    %v47 = vrot.slane %v42, %v46
    %v49 = vmul.f32 %v40, %v47
    %v50 = vmul.f32 %v41, %v47
    %v51 = vld [vmem:[%s2] sm:$0x1]
    %v53 = vlaneseq
    %v54 = vshrl.u32 %v53, 7
    %v55 = vsub.s32 0, %v54
    %v56 = vrot.slane %v51, %v55
    %v58 = vadd.f32 %v49, %v56
    %v59 = vadd.f32 %v50, %v56
    %60 = vst [vmem:[#allocation2] sm:$0xff] %v58
    %61 = vst [vmem:[#allocation2 + $0x8] sm:$0xff] %v59
    // Predicated region
    $region14: #{_lambda_.25} parent=1 // pred_check
      _
    $region15: #{_lambda_.25} parent=1 // pred_check_branch
      %63 = sbr.rel (0) target = $region17
    $region16: #{_lambda_.25} parent=1 // pred_region
      %s65 = ssub.s32 256, 256
      %66 = vsyncadd [#allocation3], %s65
      %s67 = sshll.u32 [#allocation2], 4
      %s68 = int_to_ptr.vmem [resolvable:$true] %s67
      %73 = dma.vmem_to_hbm [thread:$0]  %s68, 256, %s3, [#allocation3], 128, 128, 8
    $region17: #{_lambda_.25} parent=1 // pred_fallthru
      _
    // Predicated region
    $region18: #{_lambda_.25} parent=1 // pred_check
      _
    $region19: #{_lambda_.25} parent=1 // pred_check_branch
      %75 = sbr.rel (0) target = $region21
    $region20: #{_lambda_.25} parent=1 // pred_region
      %76 = dma.done [#allocation3], 256
    $region21: #{_lambda_.25} parent=1 // pred_fallthru
      _
    %77 = vsyncpa [#allocation3], 1

</llo_original>
